<compile_context>
chip_gen: v5e
topology: v5e:2x2
jax: 0.10.0
libtpu: 0.0.40
codegen_flags: <defaults>
</compile_context>

<pallas_src>
import functools

import jax
import jax.numpy as jnp
from jax.experimental import pallas as pl
from jax.experimental.pallas import tpu as pltpu

LEAK = 0.1
BN_EPS = 1e-5
LANE = 128


def _round_up(x, m):
    return ((x + m - 1) // m) * m


def _leaky(v):
    return jnp.where(v >= 0, v, LEAK * v)


# ---------------- fused Pallas kernel ----------------

def _down_block_kernel(x00_ref, w00_ref, w01_ref, sc0_ref, sh0_ref, sc1_ref, sh1_ref,
                       oy_ref, op_ref, x1_sc, ypad_sc, rmax_sc, *, img_h, img_w):
    """Fused DownBlock_X2 forward for one image.

    x00_ref : (1, S1, K0p)   bf16  tap-packed, reflect-gathered im2col for conv_00
    w00_ref : (K0p, Cp)      bf16  conv_00 weights, K-packed (kh, kw, cin) rows
    w01_ref : (9, Cp, Cp)    bf16  conv_01 weights, one (Cp, Cp) matrix per tap
    sc*/sh* : (1, Cp)        f32   folded BatchNorm scale / shift (conv bias folded in)
    oy_ref  : (1, H*(W+2), Cp) f32 y = x1 + act(bn(conv_01(x1)))  (2 garbage cols per row)
    op_ref  : (1, Ho, Wo, Cp)  f32 maxpool(y)
    x1_sc   : (S1, Cp)       bf16  reflect-padded x1 slab, flat (H+2)*(W+2) + slack rows
    ypad_sc : (H+2, W+2, Cp) f32   -inf padded y for pooling
    rmax_sc : (Ho, W+2, Cp)  f32   row-reduced pooling intermediate
    """
    wp2 = img_w + 2
    slab_rows = x1_sc.shape[0]
    ho, wo = op_ref.shape[1], op_ref.shape[2]

    # ---- conv_00 + BN + LeakyReLU: one K-packed MXU dot per row chunk, producing the
    #      reflect-padded x1 slab directly (register accumulation, single VMEM store).
    TM0 = 64
    for r0 in range(0, slab_rows, TM0):
        mblk = min(TM0, slab_rows - r0)
        acc = jnp.dot(x00_ref[0, pl.ds(r0, mblk), :], w00_ref[...],
                      preferred_element_type=jnp.float32)
        acc = _leaky(acc * sc0_ref[...] + sh0_ref[...])
        x1_sc[pl.ds(r0, mblk), :] = acc.astype(x1_sc.dtype)

    # ---- conv_01 + BN + LeakyReLU + residual: 9 shifted-tap dots per row chunk against the
    #      resident slab; accumulate in registers, write y once.
    # TODO(synk): on v6e/v7x, if MXU-bound, merge the 3 kw taps per kh into one K=3*Cp dot.
    TH = 8
    for r0 in range(0, img_h, TH):
        th = min(TH, img_h - r0)
        base = r0 * wp2
        mblk = th * wp2
        acc = jnp.dot(x1_sc[pl.ds(base, mblk), :], w01_ref[0],
                      preferred_element_type=jnp.float32)
        for k in range(1, 9):
            kh, kw = divmod(k, 3)
            acc = acc + jnp.dot(x1_sc[pl.ds(base + kh * wp2 + kw, mblk), :], w01_ref[k],
                                preferred_element_type=jnp.float32)
        yv = _leaky(acc * sc1_ref[...] + sh1_ref[...])
        # residual = center-tap view (kh=1, kw=1) of the same resident x1 slab
        yv = yv + x1_sc[pl.ds(base + wp2 + 1, mblk), :].astype(jnp.float32)
        oy_ref[0, pl.ds(base, mblk), :] = yv

    # ---- MaxPool2d(kernel=3, stride=2, padding=1), fused (no HBM round trip of y).
    # TODO(synk): halo-only -inf fill + 8-aligned interior offset would trim a few masked stores.
    ypad_sc[...] = jnp.full(ypad_sc.shape, -jnp.inf, ypad_sc.dtype)
    for r in range(img_h):
        row = oy_ref[0, pl.ds(r * wp2, img_w), :]           # valid W cols of y row r
        ypad_sc[r + 1:r + 2, 1:img_w + 1, :] = row[None]
    rmax = ypad_sc[pl.ds(0, ho, 2), :, :]                    # separable max: rows then cols
    for kh in (1, 2):
        rmax = jnp.maximum(rmax, ypad_sc[pl.ds(kh, ho, 2), :, :])
    rmax_sc[...] = rmax
    out = rmax_sc[:, pl.ds(0, wo, 2), :]
    for kw in (1, 2):
        out = jnp.maximum(out, rmax_sc[:, pl.ds(kw, wo, 2), :])
    op_ref[0] = out.astype(op_ref.dtype)


# ---------------- module forward (wrapper) ----------------

def down_block_x2(x_nchw, p):
    x = jnp.transpose(x_nchw, (0, 2, 3, 1)).astype(jnp.float32)   # NCHW -> NHWC
    n, h, w, cin = x.shape
    cout = p['w00'].shape[0]
    cp = _round_up(cout, LANE)
    k0 = 9 * cin
    k0p = _round_up(k0, LANE)
    wp2 = w + 2
    m1 = h * wp2
    s1 = _round_up((h + 2) * wp2 + 2, 8)       # flat slab rows (+2 slack for shifted tap views)
    ho = (h - 1) // 2 + 1
    wo = (w - 1) // 2 + 1

    def fold_bn(bias, gamma, beta, mean, var):
        scale = gamma / jnp.sqrt(var + BN_EPS)
        shift = beta + (bias - mean) * scale
        scale = jnp.pad(scale, (0, cp - cout)).reshape(1, cp)
        shift = jnp.pad(shift, (0, cp - cout)).reshape(1, cp)
        return scale.astype(jnp.float32), shift.astype(jnp.float32)

    sc0, sh0 = fold_bn(p['b00'], p['g00'], p['beta00'], p['m00'], p['v00'])
    sc1, sh1 = fold_bn(p['b01'], p['g01'], p['beta01'], p['m01'], p['v01'])

    # conv_00 weights: (Cout, Cin, 3, 3) -> (9*Cin, Cp), rows ordered (kh, kw, cin).
    w00 = jnp.transpose(p['w00'], (2, 3, 1, 0)).reshape(k0, cout)
    w00 = jnp.pad(w00, ((0, k0p - k0), (0, cp - cout))).astype(jnp.bfloat16)

    # conv_01 weights: (Cout, Cout, 3, 3) -> (9, Cp, Cp), one matrix per tap.
    w01 = jnp.transpose(p['w01'], (2, 3, 1, 0)).reshape(9, cout, cout)
    w01 = jnp.pad(w01, ((0, 0), (0, cp - cout), (0, cp - cout))).astype(jnp.bfloat16)

    # Tap-packed im2col for conv_00 (9*Cin along lanes).  Reflect-pad the conv input AND the
    # output index, so the kernel's single dot yields the reflect-padded x1 slab conv_01 needs.
    xp = jnp.pad(x, ((0, 0), (1, 1), (1, 1), (0, 0)), mode='reflect')
    pats = jnp.concatenate([xp[:, kh:kh + h, kw:kw + w, :]
                            for kh in range(3) for kw in range(3)], axis=-1)   # (n, h, w, 9cin)
    pats = jnp.pad(pats, ((0, 0), (1, 1), (1, 1), (0, 0)), mode='reflect')     # (n, h+2, w+2, 9cin)
    pats = pats.reshape(n, (h + 2) * wp2, k0)
    pats = jnp.pad(pats, ((0, 0), (0, s1 - (h + 2) * wp2), (0, k0p - k0)))
    x00 = pats.astype(jnp.bfloat16)
    # TODO(synk): for large Cin this 9x-packed im2col trades HBM for MXU depth; switch conv_00 to
    # the shifted-tap path (like conv_01) once 9*Cin >> 128.

    kernel = functools.partial(_down_block_kernel, img_h=h, img_w=w)
    y_flat, pooled_p = pl.pallas_call(
        kernel,
        out_shape=(jax.ShapeDtypeStruct((n, m1, cp), jnp.float32),
                   jax.ShapeDtypeStruct((n, ho, wo, cp), jnp.float32)),
        grid=(n,),
        in_specs=[
            pl.BlockSpec((1, s1, k0p), lambda i: (i, 0, 0)),
            pl.BlockSpec((k0p, cp), lambda i: (0, 0)),
            pl.BlockSpec((9, cp, cp), lambda i: (0, 0, 0)),
            pl.BlockSpec((1, cp), lambda i: (0, 0)),
            pl.BlockSpec((1, cp), lambda i: (0, 0)),
            pl.BlockSpec((1, cp), lambda i: (0, 0)),
            pl.BlockSpec((1, cp), lambda i: (0, 0)),
        ],
        out_specs=(
            pl.BlockSpec((1, m1, cp), lambda i: (i, 0, 0)),
            pl.BlockSpec((1, ho, wo, cp), lambda i: (i, 0, 0, 0)),
        ),
        scratch_shapes=[
            pltpu.VMEM((s1, cp), jnp.bfloat16),            # reflect-padded x1 slab
            pltpu.VMEM((h + 2, wp2, cp), jnp.float32),     # -inf padded pooling input
            pltpu.VMEM((ho, wp2, cp), jnp.float32),        # row-reduced pooling intermediate
        ],
        compiler_params=pltpu.CompilerParams(
            dimension_semantics=("parallel",),
            vmem_limit_bytes=64 * 1024 * 1024),
    )(x00, w00, w01, sc0, sh0, sc1, sh1)

    # Final layout fixes fuse into the NHWC->NCHW transpose XLA does anyway.
    y = jnp.transpose(y_flat.reshape(n, h, wp2, cp)[:, :, :w, :cout], (0, 3, 1, 2))
    pooled = jnp.transpose(pooled_p[..., :cout], (0, 3, 1, 2))
    return pooled, y


# ---------------- params ----------------

def init_params(key, in_channels, out_channels):
    ks = jax.random.split(key, 12)

    def conv_w(k, co, ci):
        return 0.1 * jax.random.normal(k, (co, ci, 3, 3), jnp.float32)

    def vec(k, c, scale=0.1, base=0.0):
        return base + scale * jax.random.normal(k, (c,), jnp.float32)

    return dict(
        w00=conv_w(ks[0], out_channels, in_channels),
        b00=vec(ks[1], out_channels),
        g00=vec(ks[2], out_channels, base=1.0),
        beta00=vec(ks[3], out_channels),
        m00=vec(ks[4], out_channels),
        v00=jax.random.uniform(ks[5], (out_channels,), jnp.float32, 0.5, 1.5),
        w01=conv_w(ks[6], out_channels, out_channels),
        b01=vec(ks[7], out_channels),
        g01=vec(ks[8], out_channels, base=1.0),
        beta01=vec(ks[9], out_channels),
        m01=vec(ks[10], out_channels),
        v01=jax.random.uniform(ks[11], (out_channels,), jnp.float32, 0.5, 1.5),
    )


# ---------------- pure-JAX reference (for verification) ----------------

def reference_forward(x_nchw, p):
    x = jnp.transpose(x_nchw, (0, 2, 3, 1)).astype(jnp.float32)
    N, H, W, _ = x.shape

    def conv_bn_act(t, wgt, b, g, beta, m, v):
        tp = jnp.pad(t, ((0, 0), (1, 1), (1, 1), (0, 0)), mode='reflect')
        out = jnp.zeros((N, H, W, wgt.shape[0]), jnp.float32) + b
        for kh in range(3):
            for kw in range(3):
                out = out + jnp.einsum('nhwc,oc->nhwo',
                                       tp[:, kh:kh + H, kw:kw + W, :], wgt[:, :, kh, kw])
        out = (out - m) * (g / jnp.sqrt(v + BN_EPS)) + beta
        return jnp.where(out >= 0, out, LEAK * out)

    x1 = conv_bn_act(x, p['w00'], p['b00'], p['g00'], p['beta00'], p['m00'], p['v00'])
    y = x1 + conv_bn_act(x1, p['w01'], p['b01'], p['g01'], p['beta01'], p['m01'], p['v01'])

    Ho, Wo = (H - 1) // 2 + 1, (W - 1) // 2 + 1
    yp = jnp.pad(y, ((0, 0), (1, 1), (1, 1), (0, 0)), constant_values=-jnp.inf)
    wins = jnp.stack([yp[:, kh:kh + 2 * Ho:2, kw:kw + 2 * Wo:2, :]
                      for kh in range(3) for kw in range(3)], axis=0)
    pooled = jnp.max(wins, axis=0)
    return jnp.transpose(pooled, (0, 3, 1, 2)), jnp.transpose(y, (0, 3, 1, 2))


if __name__ == "__main__":
    key = jax.random.PRNGKey(0)
    k_x, k_p = jax.random.split(key)
    N, Cin, H, W, Cout = 2, 4, 16, 16, 16

    x = jax.random.normal(k_x, (N, Cin, H, W), jnp.float32)
    params = init_params(k_p, Cin, Cout)

    pooled, y = jax.jit(down_block_x2)(x, params)
    pooled = jax.block_until_ready(pooled)
    y = jax.block_until_ready(y)

    assert pooled.shape == (N, Cout, (H - 1) // 2 + 1, (W - 1) // 2 + 1)
    assert y.shape == (N, Cout, H, W)

    ref_pooled, ref_y = reference_forward(x, params)
    err_p = float(jnp.max(jnp.abs(pooled - ref_pooled)))
    err_y = float(jnp.max(jnp.abs(y - ref_y)))
    # bf16 MXU inputs + bf16 x1 slab vs f32 reference -> small quantization error
    assert err_p < 1e-1 and err_y < 1e-1, (err_p, err_y)

    print("KERNEL_OK")
</pallas_src>

<mosaic_0001>
module attributes {stable_mosaic.version = 11 : i64} {
  func.func @_down_block_kernel(%arg0: i32, %arg1: memref<1x328x128xbf16, #tpu.memory_space<vmem>>, %arg2: memref<128x128xbf16, #tpu.memory_space<vmem>>, %arg3: memref<9x128x128xbf16, #tpu.memory_space<vmem>>, %arg4: memref<1x128xf32, #tpu.memory_space<vmem>>, %arg5: memref<1x128xf32, #tpu.memory_space<vmem>>, %arg6: memref<1x128xf32, #tpu.memory_space<vmem>>, %arg7: memref<1x128xf32, #tpu.memory_space<vmem>>, %arg8: memref<1x288x128xf32, #tpu.memory_space<vmem>>, %arg9: memref<1x8x8x128xf32, #tpu.memory_space<vmem>>, %arg10: memref<328x128xbf16, #tpu.memory_space<vmem>>, %arg11: memref<18x18x128xf32, #tpu.memory_space<vmem>>, %arg12: memref<8x18x128xf32, #tpu.memory_space<vmem>>) attributes {dimension_semantics = [#tpu.dimension_semantics<parallel>], iteration_bounds = array<i64: 2>, scalar_prefetch = 0 : i64, scratch_operands = 3 : i64, tpu.core_type = #tpu.core_type<tc>, window_params = [{transform_indices = @transform_0, window_bounds = array<i64: 1, 328, 128>}, {pipeline_mode = #tpu.pipeline_mode<synchronous>, transform_indices = @transform_1, window_bounds = array<i64: 128, 128>}, {pipeline_mode = #tpu.pipeline_mode<synchronous>, transform_indices = @transform_2, window_bounds = array<i64: 9, 128, 128>}, {pipeline_mode = #tpu.pipeline_mode<synchronous>, transform_indices = @transform_3, window_bounds = array<i64: 1, 128>}, {pipeline_mode = #tpu.pipeline_mode<synchronous>, transform_indices = @transform_4, window_bounds = array<i64: 1, 128>}, {pipeline_mode = #tpu.pipeline_mode<synchronous>, transform_indices = @transform_5, window_bounds = array<i64: 1, 128>}, {pipeline_mode = #tpu.pipeline_mode<synchronous>, transform_indices = @transform_6, window_bounds = array<i64: 1, 128>}, {transform_indices = @transform_7, window_bounds = array<i64: 1, 288, 128>}, {transform_indices = @transform_8, window_bounds = array<i64: 1, 8, 8, 128>}]} {
    %c0 = arith.constant 0 : index
    %c0_0 = arith.constant 0 : index
    %c0_1 = arith.constant 0 : index
    %0 = vector.load %arg1[%c0, %c0_0, %c0_1] : memref<1x328x128xbf16, #tpu.memory_space<vmem>>, vector<1x64x128xbf16>
    %1 = vector.shape_cast %0 : vector<1x64x128xbf16> to vector<64x128xbf16>
    %c0_2 = arith.constant 0 : index
    %c0_3 = arith.constant 0 : index
    %2 = vector.load %arg2[%c0_2, %c0_3] : memref<128x128xbf16, #tpu.memory_space<vmem>>, vector<128x128xbf16>
    %cst = arith.constant dense<0.000000e+00> : vector<64x128xf32>
    %3 = tpu.matmul %1, %2, %cst {dimension_numbers = #tpu.dot_dimension_numbers<[1], [0], [0], [1], [0, 0, 1, 1], [], []>} : vector<64x128xbf16>, vector<128x128xbf16>, vector<64x128xf32> -> vector<64x128xf32>
    %c0_4 = arith.constant 0 : index
    %c0_5 = arith.constant 0 : index
    %4 = vector.load %arg4[%c0_4, %c0_5] : memref<1x128xf32, #tpu.memory_space<vmem>>, vector<1x128xf32>
    %5 = vector.broadcast %4 : vector<1x128xf32> to vector<64x128xf32>
    %6 = arith.mulf %3, %5 : vector<64x128xf32>
    %c0_6 = arith.constant 0 : index
    %c0_7 = arith.constant 0 : index
    %7 = vector.load %arg5[%c0_6, %c0_7] : memref<1x128xf32, #tpu.memory_space<vmem>>, vector<1x128xf32>
    %8 = vector.broadcast %7 : vector<1x128xf32> to vector<64x128xf32>
    %9 = arith.addf %6, %8 : vector<64x128xf32>
    %cst_8 = arith.constant 0.000000e+00 : f32
    %10 = vector.broadcast %cst_8 : f32 to vector<64x128xf32>
    %11 = arith.cmpf oge, %9, %10 : vector<64x128xf32>
    %cst_9 = arith.constant 1.000000e-01 : f32
    %12 = vector.broadcast %cst_9 : f32 to vector<64x128xf32>
    %13 = arith.mulf %12, %9 : vector<64x128xf32>
    %14 = arith.select %11, %9, %13 : vector<64x128xi1>, vector<64x128xf32>
    %15 = arith.truncf %14 : vector<64x128xf32> to vector<64x128xbf16>
    %c0_10 = arith.constant 0 : index
    %c0_11 = arith.constant 0 : index
    %16 = vector.load %arg10[%c0_10, %c0_11] : memref<328x128xbf16, #tpu.memory_space<vmem>>, vector<64x128xbf16>
    tpu.vector_store %arg10[%c0_10, %c0_11], %15 {strides = array<i32>} : memref<328x128xbf16, #tpu.memory_space<vmem>>, vector<64x128xbf16>,
    %c0_12 = arith.constant 0 : index
    %c64 = arith.constant 64 : index
    %c0_13 = arith.constant 0 : index
    %17 = vector.load %arg1[%c0_12, %c64, %c0_13] : memref<1x328x128xbf16, #tpu.memory_space<vmem>>, vector<1x64x128xbf16>
    %18 = vector.shape_cast %17 : vector<1x64x128xbf16> to vector<64x128xbf16>
    %c0_14 = arith.constant 0 : index
    %c0_15 = arith.constant 0 : index
    %19 = vector.load %arg2[%c0_14, %c0_15] : memref<128x128xbf16, #tpu.memory_space<vmem>>, vector<128x128xbf16>
    %cst_16 = arith.constant dense<0.000000e+00> : vector<64x128xf32>
    %20 = tpu.matmul %18, %19, %cst_16 {dimension_numbers = #tpu.dot_dimension_numbers<[1], [0], [0], [1], [0, 0, 1, 1], [], []>} : vector<64x128xbf16>, vector<128x128xbf16>, vector<64x128xf32> -> vector<64x128xf32>
    %c0_17 = arith.constant 0 : index
    %c0_18 = arith.constant 0 : index
    %21 = vector.load %arg4[%c0_17, %c0_18] : memref<1x128xf32, #tpu.memory_space<vmem>>, vector<1x128xf32>
    %22 = vector.broadcast %21 : vector<1x128xf32> to vector<64x128xf32>
    %23 = arith.mulf %20, %22 : vector<64x128xf32>
    %c0_19 = arith.constant 0 : index
    %c0_20 = arith.constant 0 : index
    %24 = vector.load %arg5[%c0_19, %c0_20] : memref<1x128xf32, #tpu.memory_space<vmem>>, vector<1x128xf32>
    %25 = vector.broadcast %24 : vector<1x128xf32> to vector<64x128xf32>
    %26 = arith.addf %23, %25 : vector<64x128xf32>
    %cst_21 = arith.constant 0.000000e+00 : f32
    %27 = vector.broadcast %cst_21 : f32 to vector<64x128xf32>
    %28 = arith.cmpf oge, %26, %27 : vector<64x128xf32>
    %cst_22 = arith.constant 1.000000e-01 : f32
    %29 = vector.broadcast %cst_22 : f32 to vector<64x128xf32>
    %30 = arith.mulf %29, %26 : vector<64x128xf32>
    %31 = arith.select %28, %26, %30 : vector<64x128xi1>, vector<64x128xf32>
    %32 = arith.truncf %31 : vector<64x128xf32> to vector<64x128xbf16>
    %c64_23 = arith.constant 64 : index
    %c0_24 = arith.constant 0 : index
    %33 = vector.load %arg10[%c64_23, %c0_24] : memref<328x128xbf16, #tpu.memory_space<vmem>>, vector<64x128xbf16>
    tpu.vector_store %arg10[%c64_23, %c0_24], %32 {strides = array<i32>} : memref<328x128xbf16, #tpu.memory_space<vmem>>, vector<64x128xbf16>,
    %c0_25 = arith.constant 0 : index
    %c128 = arith.constant 128 : index
    %c0_26 = arith.constant 0 : index
    %34 = vector.load %arg1[%c0_25, %c128, %c0_26] : memref<1x328x128xbf16, #tpu.memory_space<vmem>>, vector<1x64x128xbf16>
    %35 = vector.shape_cast %34 : vector<1x64x128xbf16> to vector<64x128xbf16>
    %c0_27 = arith.constant 0 : index
    %c0_28 = arith.constant 0 : index
    %36 = vector.load %arg2[%c0_27, %c0_28] : memref<128x128xbf16, #tpu.memory_space<vmem>>, vector<128x128xbf16>
    %cst_29 = arith.constant dense<0.000000e+00> : vector<64x128xf32>
    %37 = tpu.matmul %35, %36, %cst_29 {dimension_numbers = #tpu.dot_dimension_numbers<[1], [0], [0], [1], [0, 0, 1, 1], [], []>} : vector<64x128xbf16>, vector<128x128xbf16>, vector<64x128xf32> -> vector<64x128xf32>
    %c0_30 = arith.constant 0 : index
    %c0_31 = arith.constant 0 : index
    %38 = vector.load %arg4[%c0_30, %c0_31] : memref<1x128xf32, #tpu.memory_space<vmem>>, vector<1x128xf32>
    %39 = vector.broadcast %38 : vector<1x128xf32> to vector<64x128xf32>
    %40 = arith.mulf %37, %39 : vector<64x128xf32>
    %c0_32 = arith.constant 0 : index
    %c0_33 = arith.constant 0 : index
    %41 = vector.load %arg5[%c0_32, %c0_33] : memref<1x128xf32, #tpu.memory_space<vmem>>, vector<1x128xf32>
    %42 = vector.broadcast %41 : vector<1x128xf32> to vector<64x128xf32>
    %43 = arith.addf %40, %42 : vector<64x128xf32>
    %cst_34 = arith.constant 0.000000e+00 : f32
    %44 = vector.broadcast %cst_34 : f32 to vector<64x128xf32>
    %45 = arith.cmpf oge, %43, %44 : vector<64x128xf32>
    %cst_35 = arith.constant 1.000000e-01 : f32
    %46 = vector.broadcast %cst_35 : f32 to vector<64x128xf32>
    %47 = arith.mulf %46, %43 : vector<64x128xf32>
    %48 = arith.select %45, %43, %47 : vector<64x128xi1>, vector<64x128xf32>
    %49 = arith.truncf %48 : vector<64x128xf32> to vector<64x128xbf16>
    %c128_36 = arith.constant 128 : index
    %c0_37 = arith.constant 0 : index
    %50 = vector.load %arg10[%c128_36, %c0_37] : memref<328x128xbf16, #tpu.memory_space<vmem>>, vector<64x128xbf16>
    tpu.vector_store %arg10[%c128_36, %c0_37], %49 {strides = array<i32>} : memref<328x128xbf16, #tpu.memory_space<vmem>>, vector<64x128xbf16>,
    %c0_38 = arith.constant 0 : index
    %c192 = arith.constant 192 : index
    %c0_39 = arith.constant 0 : index
    %51 = vector.load %arg1[%c0_38, %c192, %c0_39] : memref<1x328x128xbf16, #tpu.memory_space<vmem>>, vector<1x64x128xbf16>
    %52 = vector.shape_cast %51 : vector<1x64x128xbf16> to vector<64x128xbf16>
    %c0_40 = arith.constant 0 : index
    %c0_41 = arith.constant 0 : index
    %53 = vector.load %arg2[%c0_40, %c0_41] : memref<128x128xbf16, #tpu.memory_space<vmem>>, vector<128x128xbf16>
    %cst_42 = arith.constant dense<0.000000e+00> : vector<64x128xf32>
    %54 = tpu.matmul %52, %53, %cst_42 {dimension_numbers = #tpu.dot_dimension_numbers<[1], [0], [0], [1], [0, 0, 1, 1], [], []>} : vector<64x128xbf16>, vector<128x128xbf16>, vector<64x128xf32> -> vector<64x128xf32>
    %c0_43 = arith.constant 0 : index
    %c0_44 = arith.constant 0 : index
    %55 = vector.load %arg4[%c0_43, %c0_44] : memref<1x128xf32, #tpu.memory_space<vmem>>, vector<1x128xf32>
    %56 = vector.broadcast %55 : vector<1x128xf32> to vector<64x128xf32>
    %57 = arith.mulf %54, %56 : vector<64x128xf32>
    %c0_45 = arith.constant 0 : index
    %c0_46 = arith.constant 0 : index
    %58 = vector.load %arg5[%c0_45, %c0_46] : memref<1x128xf32, #tpu.memory_space<vmem>>, vector<1x128xf32>
    %59 = vector.broadcast %58 : vector<1x128xf32> to vector<64x128xf32>
    %60 = arith.addf %57, %59 : vector<64x128xf32>
    %cst_47 = arith.constant 0.000000e+00 : f32
    %61 = vector.broadcast %cst_47 : f32 to vector<64x128xf32>
    %62 = arith.cmpf oge, %60, %61 : vector<64x128xf32>
    %cst_48 = arith.constant 1.000000e-01 : f32
    %63 = vector.broadcast %cst_48 : f32 to vector<64x128xf32>
    %64 = arith.mulf %63, %60 : vector<64x128xf32>
    %65 = arith.select %62, %60, %64 : vector<64x128xi1>, vector<64x128xf32>
    %66 = arith.truncf %65 : vector<64x128xf32> to vector<64x128xbf16>
    %c192_49 = arith.constant 192 : index
    %c0_50 = arith.constant 0 : index
    %67 = vector.load %arg10[%c192_49, %c0_50] : memref<328x128xbf16, #tpu.memory_space<vmem>>, vector<64x128xbf16>
    tpu.vector_store %arg10[%c192_49, %c0_50], %66 {strides = array<i32>} : memref<328x128xbf16, #tpu.memory_space<vmem>>, vector<64x128xbf16>,
    %c0_51 = arith.constant 0 : index
    %c256 = arith.constant 256 : index
    %c0_52 = arith.constant 0 : index
    %68 = vector.load %arg1[%c0_51, %c256, %c0_52] : memref<1x328x128xbf16, #tpu.memory_space<vmem>>, vector<1x64x128xbf16>
    %69 = vector.shape_cast %68 : vector<1x64x128xbf16> to vector<64x128xbf16>
    %c0_53 = arith.constant 0 : index
    %c0_54 = arith.constant 0 : index
    %70 = vector.load %arg2[%c0_53, %c0_54] : memref<128x128xbf16, #tpu.memory_space<vmem>>, vector<128x128xbf16>
    %cst_55 = arith.constant dense<0.000000e+00> : vector<64x128xf32>
    %71 = tpu.matmul %69, %70, %cst_55 {dimension_numbers = #tpu.dot_dimension_numbers<[1], [0], [0], [1], [0, 0, 1, 1], [], []>} : vector<64x128xbf16>, vector<128x128xbf16>, vector<64x128xf32> -> vector<64x128xf32>
    %c0_56 = arith.constant 0 : index
    %c0_57 = arith.constant 0 : index
    %72 = vector.load %arg4[%c0_56, %c0_57] : memref<1x128xf32, #tpu.memory_space<vmem>>, vector<1x128xf32>
    %73 = vector.broadcast %72 : vector<1x128xf32> to vector<64x128xf32>
    %74 = arith.mulf %71, %73 : vector<64x128xf32>
    %c0_58 = arith.constant 0 : index
    %c0_59 = arith.constant 0 : index
    %75 = vector.load %arg5[%c0_58, %c0_59] : memref<1x128xf32, #tpu.memory_space<vmem>>, vector<1x128xf32>
    %76 = vector.broadcast %75 : vector<1x128xf32> to vector<64x128xf32>
    %77 = arith.addf %74, %76 : vector<64x128xf32>
    %cst_60 = arith.constant 0.000000e+00 : f32
    %78 = vector.broadcast %cst_60 : f32 to vector<64x128xf32>
    %79 = arith.cmpf oge, %77, %78 : vector<64x128xf32>
    %cst_61 = arith.constant 1.000000e-01 : f32
    %80 = vector.broadcast %cst_61 : f32 to vector<64x128xf32>
    %81 = arith.mulf %80, %77 : vector<64x128xf32>
    %82 = arith.select %79, %77, %81 : vector<64x128xi1>, vector<64x128xf32>
    %83 = arith.truncf %82 : vector<64x128xf32> to vector<64x128xbf16>
    %c256_62 = arith.constant 256 : index
    %c0_63 = arith.constant 0 : index
    %84 = vector.load %arg10[%c256_62, %c0_63] : memref<328x128xbf16, #tpu.memory_space<vmem>>, vector<64x128xbf16>
    tpu.vector_store %arg10[%c256_62, %c0_63], %83 {strides = array<i32>} : memref<328x128xbf16, #tpu.memory_space<vmem>>, vector<64x128xbf16>,
    %c0_64 = arith.constant 0 : index
    %c320 = arith.constant 320 : index
    %c0_65 = arith.constant 0 : index
    %85 = vector.load %arg1[%c0_64, %c320, %c0_65] : memref<1x328x128xbf16, #tpu.memory_space<vmem>>, vector<1x8x128xbf16>
    %86 = vector.shape_cast %85 : vector<1x8x128xbf16> to vector<8x128xbf16>
    %c0_66 = arith.constant 0 : index
    %c0_67 = arith.constant 0 : index
    %87 = vector.load %arg2[%c0_66, %c0_67] : memref<128x128xbf16, #tpu.memory_space<vmem>>, vector<128x128xbf16>
    %cst_68 = arith.constant dense<0.000000e+00> : vector<8x128xf32>
    %88 = tpu.matmul %86, %87, %cst_68 {dimension_numbers = #tpu.dot_dimension_numbers<[1], [0], [0], [1], [0, 0, 1, 1], [], []>} : vector<8x128xbf16>, vector<128x128xbf16>, vector<8x128xf32> -> vector<8x128xf32>
    %c0_69 = arith.constant 0 : index
    %c0_70 = arith.constant 0 : index
    %89 = vector.load %arg4[%c0_69, %c0_70] : memref<1x128xf32, #tpu.memory_space<vmem>>, vector<1x128xf32>
    %90 = vector.broadcast %89 : vector<1x128xf32> to vector<8x128xf32>
    %91 = arith.mulf %88, %90 : vector<8x128xf32>
    %c0_71 = arith.constant 0 : index
    %c0_72 = arith.constant 0 : index
    %92 = vector.load %arg5[%c0_71, %c0_72] : memref<1x128xf32, #tpu.memory_space<vmem>>, vector<1x128xf32>
    %93 = vector.broadcast %92 : vector<1x128xf32> to vector<8x128xf32>
    %94 = arith.addf %91, %93 : vector<8x128xf32>
    %cst_73 = arith.constant 0.000000e+00 : f32
    %95 = vector.broadcast %cst_73 : f32 to vector<8x128xf32>
    %96 = arith.cmpf oge, %94, %95 : vector<8x128xf32>
    %cst_74 = arith.constant 1.000000e-01 : f32
    %97 = vector.broadcast %cst_74 : f32 to vector<8x128xf32>
    %98 = arith.mulf %97, %94 : vector<8x128xf32>
    %99 = arith.select %96, %94, %98 : vector<8x128xi1>, vector<8x128xf32>
    %100 = arith.truncf %99 : vector<8x128xf32> to vector<8x128xbf16>
    %c320_75 = arith.constant 320 : index
    %c0_76 = arith.constant 0 : index
    %101 = vector.load %arg10[%c320_75, %c0_76] : memref<328x128xbf16, #tpu.memory_space<vmem>>, vector<8x128xbf16>
    tpu.vector_store %arg10[%c320_75, %c0_76], %100 {strides = array<i32>} : memref<328x128xbf16, #tpu.memory_space<vmem>>, vector<8x128xbf16>,
    %c0_77 = arith.constant 0 : index
    %c0_78 = arith.constant 0 : index
    %102 = vector.load %arg10[%c0_77, %c0_78] : memref<328x128xbf16, #tpu.memory_space<vmem>>, vector<144x128xbf16>
    %c0_79 = arith.constant 0 : index
    %c0_80 = arith.constant 0 : index
    %c0_81 = arith.constant 0 : index
    %103 = vector.load %arg3[%c0_79, %c0_80, %c0_81] : memref<9x128x128xbf16, #tpu.memory_space<vmem>>, vector<1x128x128xbf16>
    %104 = vector.shape_cast %103 : vector<1x128x128xbf16> to vector<128x128xbf16>
    %cst_82 = arith.constant dense<0.000000e+00> : vector<144x128xf32>
    %105 = tpu.matmul %102, %104, %cst_82 {dimension_numbers = #tpu.dot_dimension_numbers<[1], [0], [0], [1], [0, 0, 1, 1], [], []>} : vector<144x128xbf16>, vector<128x128xbf16>, vector<144x128xf32> -> vector<144x128xf32>
    %c1 = arith.constant 1 : index
    %c0_83 = arith.constant 0 : index
    %106 = vector.load %arg10[%c1, %c0_83] : memref<328x128xbf16, #tpu.memory_space<vmem>>, vector<144x128xbf16>
    %c1_84 = arith.constant 1 : index
    %c0_85 = arith.constant 0 : index
    %c0_86 = arith.constant 0 : index
    %107 = vector.load %arg3[%c1_84, %c0_85, %c0_86] : memref<9x128x128xbf16, #tpu.memory_space<vmem>>, vector<1x128x128xbf16>
    %108 = vector.shape_cast %107 : vector<1x128x128xbf16> to vector<128x128xbf16>
    %cst_87 = arith.constant dense<0.000000e+00> : vector<144x128xf32>
    %109 = tpu.matmul %106, %108, %cst_87 {dimension_numbers = #tpu.dot_dimension_numbers<[1], [0], [0], [1], [0, 0, 1, 1], [], []>} : vector<144x128xbf16>, vector<128x128xbf16>, vector<144x128xf32> -> vector<144x128xf32>
    %110 = arith.addf %105, %109 : vector<144x128xf32>
    %c2 = arith.constant 2 : index
    %c0_88 = arith.constant 0 : index
    %111 = vector.load %arg10[%c2, %c0_88] : memref<328x128xbf16, #tpu.memory_space<vmem>>, vector<144x128xbf16>
    %c2_89 = arith.constant 2 : index
    %c0_90 = arith.constant 0 : index
    %c0_91 = arith.constant 0 : index
    %112 = vector.load %arg3[%c2_89, %c0_90, %c0_91] : memref<9x128x128xbf16, #tpu.memory_space<vmem>>, vector<1x128x128xbf16>
    %113 = vector.shape_cast %112 : vector<1x128x128xbf16> to vector<128x128xbf16>
    %cst_92 = arith.constant dense<0.000000e+00> : vector<144x128xf32>
    %114 = tpu.matmul %111, %113, %cst_92 {dimension_numbers = #tpu.dot_dimension_numbers<[1], [0], [0], [1], [0, 0, 1, 1], [], []>} : vector<144x128xbf16>, vector<128x128xbf16>, vector<144x128xf32> -> vector<144x128xf32>
    %115 = arith.addf %110, %114 : vector<144x128xf32>
    %c18 = arith.constant 18 : index
    %c0_93 = arith.constant 0 : index
    %116 = vector.load %arg10[%c18, %c0_93] : memref<328x128xbf16, #tpu.memory_space<vmem>>, vector<144x128xbf16>
    %c3 = arith.constant 3 : index
    %c0_94 = arith.constant 0 : index
    %c0_95 = arith.constant 0 : index
    %117 = vector.load %arg3[%c3, %c0_94, %c0_95] : memref<9x128x128xbf16, #tpu.memory_space<vmem>>, vector<1x128x128xbf16>
    %118 = vector.shape_cast %117 : vector<1x128x128xbf16> to vector<128x128xbf16>
    %cst_96 = arith.constant dense<0.000000e+00> : vector<144x128xf32>
    %119 = tpu.matmul %116, %118, %cst_96 {dimension_numbers = #tpu.dot_dimension_numbers<[1], [0], [0], [1], [0, 0, 1, 1], [], []>} : vector<144x128xbf16>, vector<128x128xbf16>, vector<144x128xf32> -> vector<144x128xf32>
    %120 = arith.addf %115, %119 : vector<144x128xf32>
    %c19 = arith.constant 19 : index
    %c0_97 = arith.constant 0 : index
    %121 = vector.load %arg10[%c19, %c0_97] : memref<328x128xbf16, #tpu.memory_space<vmem>>, vector<144x128xbf16>
    %c4 = arith.constant 4 : index
    %c0_98 = arith.constant 0 : index
    %c0_99 = arith.constant 0 : index
    %122 = vector.load %arg3[%c4, %c0_98, %c0_99] : memref<9x128x128xbf16, #tpu.memory_space<vmem>>, vector<1x128x128xbf16>
    %123 = vector.shape_cast %122 : vector<1x128x128xbf16> to vector<128x128xbf16>
    %cst_100 = arith.constant dense<0.000000e+00> : vector<144x128xf32>
    %124 = tpu.matmul %121, %123, %cst_100 {dimension_numbers = #tpu.dot_dimension_numbers<[1], [0], [0], [1], [0, 0, 1, 1], [], []>} : vector<144x128xbf16>, vector<128x128xbf16>, vector<144x128xf32> -> vector<144x128xf32>
    %125 = arith.addf %120, %124 : vector<144x128xf32>
    %c20 = arith.constant 20 : index
    %c0_101 = arith.constant 0 : index
    %126 = vector.load %arg10[%c20, %c0_101] : memref<328x128xbf16, #tpu.memory_space<vmem>>, vector<144x128xbf16>
    %c5 = arith.constant 5 : index
    %c0_102 = arith.constant 0 : index
    %c0_103 = arith.constant 0 : index
    %127 = vector.load %arg3[%c5, %c0_102, %c0_103] : memref<9x128x128xbf16, #tpu.memory_space<vmem>>, vector<1x128x128xbf16>
    %128 = vector.shape_cast %127 : vector<1x128x128xbf16> to vector<128x128xbf16>
    %cst_104 = arith.constant dense<0.000000e+00> : vector<144x128xf32>
    %129 = tpu.matmul %126, %128, %cst_104 {dimension_numbers = #tpu.dot_dimension_numbers<[1], [0], [0], [1], [0, 0, 1, 1], [], []>} : vector<144x128xbf16>, vector<128x128xbf16>, vector<144x128xf32> -> vector<144x128xf32>
    %130 = arith.addf %125, %129 : vector<144x128xf32>
    %c36 = arith.constant 36 : index
    %c0_105 = arith.constant 0 : index
    %131 = vector.load %arg10[%c36, %c0_105] : memref<328x128xbf16, #tpu.memory_space<vmem>>, vector<144x128xbf16>
    %c6 = arith.constant 6 : index
    %c0_106 = arith.constant 0 : index
    %c0_107 = arith.constant 0 : index
    %132 = vector.load %arg3[%c6, %c0_106, %c0_107] : memref<9x128x128xbf16, #tpu.memory_space<vmem>>, vector<1x128x128xbf16>
    %133 = vector.shape_cast %132 : vector<1x128x128xbf16> to vector<128x128xbf16>
    %cst_108 = arith.constant dense<0.000000e+00> : vector<144x128xf32>
    %134 = tpu.matmul %131, %133, %cst_108 {dimension_numbers = #tpu.dot_dimension_numbers<[1], [0], [0], [1], [0, 0, 1, 1], [], []>} : vector<144x128xbf16>, vector<128x128xbf16>, vector<144x128xf32> -> vector<144x128xf32>
    %135 = arith.addf %130, %134 : vector<144x128xf32>
    %c37 = arith.constant 37 : index
    %c0_109 = arith.constant 0 : index
    %136 = vector.load %arg10[%c37, %c0_109] : memref<328x128xbf16, #tpu.memory_space<vmem>>, vector<144x128xbf16>
    %c7 = arith.constant 7 : index
    %c0_110 = arith.constant 0 : index
    %c0_111 = arith.constant 0 : index
    %137 = vector.load %arg3[%c7, %c0_110, %c0_111] : memref<9x128x128xbf16, #tpu.memory_space<vmem>>, vector<1x128x128xbf16>
    %138 = vector.shape_cast %137 : vector<1x128x128xbf16> to vector<128x128xbf16>
    %cst_112 = arith.constant dense<0.000000e+00> : vector<144x128xf32>
    %139 = tpu.matmul %136, %138, %cst_112 {dimension_numbers = #tpu.dot_dimension_numbers<[1], [0], [0], [1], [0, 0, 1, 1], [], []>} : vector<144x128xbf16>, vector<128x128xbf16>, vector<144x128xf32> -> vector<144x128xf32>
    %140 = arith.addf %135, %139 : vector<144x128xf32>
    %c38 = arith.constant 38 : index
    %c0_113 = arith.constant 0 : index
    %141 = vector.load %arg10[%c38, %c0_113] : memref<328x128xbf16, #tpu.memory_space<vmem>>, vector<144x128xbf16>
    %c8 = arith.constant 8 : index
    %c0_114 = arith.constant 0 : index
    %c0_115 = arith.constant 0 : index
    %142 = vector.load %arg3[%c8, %c0_114, %c0_115] : memref<9x128x128xbf16, #tpu.memory_space<vmem>>, vector<1x128x128xbf16>
    %143 = vector.shape_cast %142 : vector<1x128x128xbf16> to vector<128x128xbf16>
    %cst_116 = arith.constant dense<0.000000e+00> : vector<144x128xf32>
    %144 = tpu.matmul %141, %143, %cst_116 {dimension_numbers = #tpu.dot_dimension_numbers<[1], [0], [0], [1], [0, 0, 1, 1], [], []>} : vector<144x128xbf16>, vector<128x128xbf16>, vector<144x128xf32> -> vector<144x128xf32>
    %145 = arith.addf %140, %144 : vector<144x128xf32>
    %c0_117 = arith.constant 0 : index
    %c0_118 = arith.constant 0 : index
    %146 = vector.load %arg6[%c0_117, %c0_118] : memref<1x128xf32, #tpu.memory_space<vmem>>, vector<1x128xf32>
    %147 = vector.broadcast %146 : vector<1x128xf32> to vector<144x128xf32>
    %148 = arith.mulf %145, %147 : vector<144x128xf32>
    %c0_119 = arith.constant 0 : index
    %c0_120 = arith.constant 0 : index
    %149 = vector.load %arg7[%c0_119, %c0_120] : memref<1x128xf32, #tpu.memory_space<vmem>>, vector<1x128xf32>
    %150 = vector.broadcast %149 : vector<1x128xf32> to vector<144x128xf32>
    %151 = arith.addf %148, %150 : vector<144x128xf32>
    %cst_121 = arith.constant 0.000000e+00 : f32
    %152 = vector.broadcast %cst_121 : f32 to vector<144x128xf32>
    %153 = arith.cmpf oge, %151, %152 : vector<144x128xf32>
    %cst_122 = arith.constant 1.000000e-01 : f32
    %154 = vector.broadcast %cst_122 : f32 to vector<144x128xf32>
    %155 = arith.mulf %154, %151 : vector<144x128xf32>
    %156 = arith.select %153, %151, %155 : vector<144x128xi1>, vector<144x128xf32>
    %c19_123 = arith.constant 19 : index
    %c0_124 = arith.constant 0 : index
    %157 = vector.load %arg10[%c19_123, %c0_124] : memref<328x128xbf16, #tpu.memory_space<vmem>>, vector<144x128xbf16>
    %158 = arith.extf %157 : vector<144x128xbf16> to vector<144x128xf32>
    %159 = arith.addf %156, %158 : vector<144x128xf32>
    %c0_125 = arith.constant 0 : index
    %c0_126 = arith.constant 0 : index
    %c0_127 = arith.constant 0 : index
    %160 = vector.load %arg8[%c0_125, %c0_126, %c0_127] : memref<1x288x128xf32, #tpu.memory_space<vmem>>, vector<1x144x128xf32>
    %161 = vector.shape_cast %160 : vector<1x144x128xf32> to vector<144x128xf32>
    %162 = vector.shape_cast %159 : vector<144x128xf32> to vector<1x144x128xf32>
    tpu.vector_store %arg8[%c0_125, %c0_126, %c0_127], %162 {strides = array<i32>} : memref<1x288x128xf32, #tpu.memory_space<vmem>>, vector<1x144x128xf32>,
    %c144 = arith.constant 144 : index
    %c0_128 = arith.constant 0 : index
    %163 = vector.load %arg10[%c144, %c0_128] : memref<328x128xbf16, #tpu.memory_space<vmem>>, vector<144x128xbf16>
    %c0_129 = arith.constant 0 : index
    %c0_130 = arith.constant 0 : index
    %c0_131 = arith.constant 0 : index
    %164 = vector.load %arg3[%c0_129, %c0_130, %c0_131] : memref<9x128x128xbf16, #tpu.memory_space<vmem>>, vector<1x128x128xbf16>
    %165 = vector.shape_cast %164 : vector<1x128x128xbf16> to vector<128x128xbf16>
    %cst_132 = arith.constant dense<0.000000e+00> : vector<144x128xf32>
    %166 = tpu.matmul %163, %165, %cst_132 {dimension_numbers = #tpu.dot_dimension_numbers<[1], [0], [0], [1], [0, 0, 1, 1], [], []>} : vector<144x128xbf16>, vector<128x128xbf16>, vector<144x128xf32> -> vector<144x128xf32>
    %c145 = arith.constant 145 : index
    %c0_133 = arith.constant 0 : index
    %167 = vector.load %arg10[%c145, %c0_133] : memref<328x128xbf16, #tpu.memory_space<vmem>>, vector<144x128xbf16>
    %c1_134 = arith.constant 1 : index
    %c0_135 = arith.constant 0 : index
    %c0_136 = arith.constant 0 : index
    %168 = vector.load %arg3[%c1_134, %c0_135, %c0_136] : memref<9x128x128xbf16, #tpu.memory_space<vmem>>, vector<1x128x128xbf16>
    %169 = vector.shape_cast %168 : vector<1x128x128xbf16> to vector<128x128xbf16>
    %cst_137 = arith.constant dense<0.000000e+00> : vector<144x128xf32>
    %170 = tpu.matmul %167, %169, %cst_137 {dimension_numbers = #tpu.dot_dimension_numbers<[1], [0], [0], [1], [0, 0, 1, 1], [], []>} : vector<144x128xbf16>, vector<128x128xbf16>, vector<144x128xf32> -> vector<144x128xf32>
    %171 = arith.addf %166, %170 : vector<144x128xf32>
    %c146 = arith.constant 146 : index
    %c0_138 = arith.constant 0 : index
    %172 = vector.load %arg10[%c146, %c0_138] : memref<328x128xbf16, #tpu.memory_space<vmem>>, vector<144x128xbf16>
    %c2_139 = arith.constant 2 : index
    %c0_140 = arith.constant 0 : index
    %c0_141 = arith.constant 0 : index
    %173 = vector.load %arg3[%c2_139, %c0_140, %c0_141] : memref<9x128x128xbf16, #tpu.memory_space<vmem>>, vector<1x128x128xbf16>
    %174 = vector.shape_cast %173 : vector<1x128x128xbf16> to vector<128x128xbf16>
    %cst_142 = arith.constant dense<0.000000e+00> : vector<144x128xf32>
    %175 = tpu.matmul %172, %174, %cst_142 {dimension_numbers = #tpu.dot_dimension_numbers<[1], [0], [0], [1], [0, 0, 1, 1], [], []>} : vector<144x128xbf16>, vector<128x128xbf16>, vector<144x128xf32> -> vector<144x128xf32>
    %176 = arith.addf %171, %175 : vector<144x128xf32>
    %c162 = arith.constant 162 : index
    %c0_143 = arith.constant 0 : index
    %177 = vector.load %arg10[%c162, %c0_143] : memref<328x128xbf16, #tpu.memory_space<vmem>>, vector<144x128xbf16>
    %c3_144 = arith.constant 3 : index
    %c0_145 = arith.constant 0 : index
    %c0_146 = arith.constant 0 : index
    %178 = vector.load %arg3[%c3_144, %c0_145, %c0_146] : memref<9x128x128xbf16, #tpu.memory_space<vmem>>, vector<1x128x128xbf16>
    %179 = vector.shape_cast %178 : vector<1x128x128xbf16> to vector<128x128xbf16>
    %cst_147 = arith.constant dense<0.000000e+00> : vector<144x128xf32>
    %180 = tpu.matmul %177, %179, %cst_147 {dimension_numbers = #tpu.dot_dimension_numbers<[1], [0], [0], [1], [0, 0, 1, 1], [], []>} : vector<144x128xbf16>, vector<128x128xbf16>, vector<144x128xf32> -> vector<144x128xf32>
    %181 = arith.addf %176, %180 : vector<144x128xf32>
    %c163 = arith.constant 163 : index
    %c0_148 = arith.constant 0 : index
    %182 = vector.load %arg10[%c163, %c0_148] : memref<328x128xbf16, #tpu.memory_space<vmem>>, vector<144x128xbf16>
    %c4_149 = arith.constant 4 : index
    %c0_150 = arith.constant 0 : index
    %c0_151 = arith.constant 0 : index
    %183 = vector.load %arg3[%c4_149, %c0_150, %c0_151] : memref<9x128x128xbf16, #tpu.memory_space<vmem>>, vector<1x128x128xbf16>
    %184 = vector.shape_cast %183 : vector<1x128x128xbf16> to vector<128x128xbf16>
    %cst_152 = arith.constant dense<0.000000e+00> : vector<144x128xf32>
    %185 = tpu.matmul %182, %184, %cst_152 {dimension_numbers = #tpu.dot_dimension_numbers<[1], [0], [0], [1], [0, 0, 1, 1], [], []>} : vector<144x128xbf16>, vector<128x128xbf16>, vector<144x128xf32> -> vector<144x128xf32>
    %186 = arith.addf %181, %185 : vector<144x128xf32>
    %c164 = arith.constant 164 : index
    %c0_153 = arith.constant 0 : index
    %187 = vector.load %arg10[%c164, %c0_153] : memref<328x128xbf16, #tpu.memory_space<vmem>>, vector<144x128xbf16>
    %c5_154 = arith.constant 5 : index
    %c0_155 = arith.constant 0 : index
    %c0_156 = arith.constant 0 : index
    %188 = vector.load %arg3[%c5_154, %c0_155, %c0_156] : memref<9x128x128xbf16, #tpu.memory_space<vmem>>, vector<1x128x128xbf16>
    %189 = vector.shape_cast %188 : vector<1x128x128xbf16> to vector<128x128xbf16>
    %cst_157 = arith.constant dense<0.000000e+00> : vector<144x128xf32>
    %190 = tpu.matmul %187, %189, %cst_157 {dimension_numbers = #tpu.dot_dimension_numbers<[1], [0], [0], [1], [0, 0, 1, 1], [], []>} : vector<144x128xbf16>, vector<128x128xbf16>, vector<144x128xf32> -> vector<144x128xf32>
    %191 = arith.addf %186, %190 : vector<144x128xf32>
    %c180 = arith.constant 180 : index
    %c0_158 = arith.constant 0 : index
    %192 = vector.load %arg10[%c180, %c0_158] : memref<328x128xbf16, #tpu.memory_space<vmem>>, vector<144x128xbf16>
    %c6_159 = arith.constant 6 : index
    %c0_160 = arith.constant 0 : index
    %c0_161 = arith.constant 0 : index
    %193 = vector.load %arg3[%c6_159, %c0_160, %c0_161] : memref<9x128x128xbf16, #tpu.memory_space<vmem>>, vector<1x128x128xbf16>
    %194 = vector.shape_cast %193 : vector<1x128x128xbf16> to vector<128x128xbf16>
    %cst_162 = arith.constant dense<0.000000e+00> : vector<144x128xf32>
    %195 = tpu.matmul %192, %194, %cst_162 {dimension_numbers = #tpu.dot_dimension_numbers<[1], [0], [0], [1], [0, 0, 1, 1], [], []>} : vector<144x128xbf16>, vector<128x128xbf16>, vector<144x128xf32> -> vector<144x128xf32>
    %196 = arith.addf %191, %195 : vector<144x128xf32>
    %c181 = arith.constant 181 : index
    %c0_163 = arith.constant 0 : index
    %197 = vector.load %arg10[%c181, %c0_163] : memref<328x128xbf16, #tpu.memory_space<vmem>>, vector<144x128xbf16>
    %c7_164 = arith.constant 7 : index
    %c0_165 = arith.constant 0 : index
    %c0_166 = arith.constant 0 : index
    %198 = vector.load %arg3[%c7_164, %c0_165, %c0_166] : memref<9x128x128xbf16, #tpu.memory_space<vmem>>, vector<1x128x128xbf16>
    %199 = vector.shape_cast %198 : vector<1x128x128xbf16> to vector<128x128xbf16>
    %cst_167 = arith.constant dense<0.000000e+00> : vector<144x128xf32>
    %200 = tpu.matmul %197, %199, %cst_167 {dimension_numbers = #tpu.dot_dimension_numbers<[1], [0], [0], [1], [0, 0, 1, 1], [], []>} : vector<144x128xbf16>, vector<128x128xbf16>, vector<144x128xf32> -> vector<144x128xf32>
    %201 = arith.addf %196, %200 : vector<144x128xf32>
    %c182 = arith.constant 182 : index
    %c0_168 = arith.constant 0 : index
    %202 = vector.load %arg10[%c182, %c0_168] : memref<328x128xbf16, #tpu.memory_space<vmem>>, vector<144x128xbf16>
    %c8_169 = arith.constant 8 : index
    %c0_170 = arith.constant 0 : index
    %c0_171 = arith.constant 0 : index
    %203 = vector.load %arg3[%c8_169, %c0_170, %c0_171] : memref<9x128x128xbf16, #tpu.memory_space<vmem>>, vector<1x128x128xbf16>
    %204 = vector.shape_cast %203 : vector<1x128x128xbf16> to vector<128x128xbf16>
    %cst_172 = arith.constant dense<0.000000e+00> : vector<144x128xf32>
    %205 = tpu.matmul %202, %204, %cst_172 {dimension_numbers = #tpu.dot_dimension_numbers<[1], [0], [0], [1], [0, 0, 1, 1], [], []>} : vector<144x128xbf16>, vector<128x128xbf16>, vector<144x128xf32> -> vector<144x128xf32>
    %206 = arith.addf %201, %205 : vector<144x128xf32>
    %c0_173 = arith.constant 0 : index
    %c0_174 = arith.constant 0 : index
    %207 = vector.load %arg6[%c0_173, %c0_174] : memref<1x128xf32, #tpu.memory_space<vmem>>, vector<1x128xf32>
    %208 = vector.broadcast %207 : vector<1x128xf32> to vector<144x128xf32>
    %209 = arith.mulf %206, %208 : vector<144x128xf32>
    %c0_175 = arith.constant 0 : index
    %c0_176 = arith.constant 0 : index
    %210 = vector.load %arg7[%c0_175, %c0_176] : memref<1x128xf32, #tpu.memory_space<vmem>>, vector<1x128xf32>
    %211 = vector.broadcast %210 : vector<1x128xf32> to vector<144x128xf32>
    %212 = arith.addf %209, %211 : vector<144x128xf32>
    %cst_177 = arith.constant 0.000000e+00 : f32
    %213 = vector.broadcast %cst_177 : f32 to vector<144x128xf32>
    %214 = arith.cmpf oge, %212, %213 : vector<144x128xf32>
    %cst_178 = arith.constant 1.000000e-01 : f32
    %215 = vector.broadcast %cst_178 : f32 to vector<144x128xf32>
    %216 = arith.mulf %215, %212 : vector<144x128xf32>
    %217 = arith.select %214, %212, %216 : vector<144x128xi1>, vector<144x128xf32>
    %c163_179 = arith.constant 163 : index
    %c0_180 = arith.constant 0 : index
    %218 = vector.load %arg10[%c163_179, %c0_180] : memref<328x128xbf16, #tpu.memory_space<vmem>>, vector<144x128xbf16>
    %219 = arith.extf %218 : vector<144x128xbf16> to vector<144x128xf32>
    %220 = arith.addf %217, %219 : vector<144x128xf32>
    %c0_181 = arith.constant 0 : index
    %c144_182 = arith.constant 144 : index
    %c0_183 = arith.constant 0 : index
    %221 = vector.load %arg8[%c0_181, %c144_182, %c0_183] : memref<1x288x128xf32, #tpu.memory_space<vmem>>, vector<1x144x128xf32>
    %222 = vector.shape_cast %221 : vector<1x144x128xf32> to vector<144x128xf32>
    %223 = vector.shape_cast %220 : vector<144x128xf32> to vector<1x144x128xf32>
    tpu.vector_store %arg8[%c0_181, %c144_182, %c0_183], %223 {strides = array<i32>} : memref<1x288x128xf32, #tpu.memory_space<vmem>>, vector<1x144x128xf32>,
    %cst_184 = arith.constant 0xFF800000 : f32
    %224 = vector.broadcast %cst_184 : f32 to vector<18x18x128xf32>
    %c0_185 = arith.constant 0 : index
    %c0_186 = arith.constant 0 : index
    %c0_187 = arith.constant 0 : index
    %225 = vector.load %arg11[%c0_185, %c0_186, %c0_187] : memref<18x18x128xf32, #tpu.memory_space<vmem>>, vector<18x18x128xf32>
    tpu.vector_store %arg11[%c0_185, %c0_186, %c0_187], %224 {strides = array<i32>} : memref<18x18x128xf32, #tpu.memory_space<vmem>>, vector<18x18x128xf32>,
    %c0_188 = arith.constant 0 : index
    %c0_189 = arith.constant 0 : index
    %c0_190 = arith.constant 0 : index
    %226 = vector.load %arg8[%c0_188, %c0_189, %c0_190] : memref<1x288x128xf32, #tpu.memory_space<vmem>>, vector<1x16x128xf32>
    %227 = vector.shape_cast %226 : vector<1x16x128xf32> to vector<16x128xf32>
    %228 = vector.shape_cast %227 : vector<16x128xf32> to vector<1x16x128xf32>
    %c1_191 = arith.constant 1 : index
    %c1_192 = arith.constant 1 : index
    %c0_193 = arith.constant 0 : index
    %229 = vector.load %arg11[%c1_191, %c1_192, %c0_193] : memref<18x18x128xf32, #tpu.memory_space<vmem>>, vector<1x16x128xf32>
    tpu.vector_store %arg11[%c1_191, %c1_192, %c0_193], %228 {strides = array<i32>} : memref<18x18x128xf32, #tpu.memory_space<vmem>>, vector<1x16x128xf32>,
    %c0_194 = arith.constant 0 : index
    %c18_195 = arith.constant 18 : index
    %c0_196 = arith.constant 0 : index
    %230 = vector.load %arg8[%c0_194, %c18_195, %c0_196] : memref<1x288x128xf32, #tpu.memory_space<vmem>>, vector<1x16x128xf32>
    %231 = vector.shape_cast %230 : vector<1x16x128xf32> to vector<16x128xf32>
    %232 = vector.shape_cast %231 : vector<16x128xf32> to vector<1x16x128xf32>
    %c2_197 = arith.constant 2 : index
    %c1_198 = arith.constant 1 : index
    %c0_199 = arith.constant 0 : index
    %233 = vector.load %arg11[%c2_197, %c1_198, %c0_199] : memref<18x18x128xf32, #tpu.memory_space<vmem>>, vector<1x16x128xf32>
    tpu.vector_store %arg11[%c2_197, %c1_198, %c0_199], %232 {strides = array<i32>} : memref<18x18x128xf32, #tpu.memory_space<vmem>>, vector<1x16x128xf32>,
    %c0_200 = arith.constant 0 : index
    %c36_201 = arith.constant 36 : index
    %c0_202 = arith.constant 0 : index
    %234 = vector.load %arg8[%c0_200, %c36_201, %c0_202] : memref<1x288x128xf32, #tpu.memory_space<vmem>>, vector<1x16x128xf32>
    %235 = vector.shape_cast %234 : vector<1x16x128xf32> to vector<16x128xf32>
    %236 = vector.shape_cast %235 : vector<16x128xf32> to vector<1x16x128xf32>
    %c3_203 = arith.constant 3 : index
    %c1_204 = arith.constant 1 : index
    %c0_205 = arith.constant 0 : index
    %237 = vector.load %arg11[%c3_203, %c1_204, %c0_205] : memref<18x18x128xf32, #tpu.memory_space<vmem>>, vector<1x16x128xf32>
    tpu.vector_store %arg11[%c3_203, %c1_204, %c0_205], %236 {strides = array<i32>} : memref<18x18x128xf32, #tpu.memory_space<vmem>>, vector<1x16x128xf32>,
    %c0_206 = arith.constant 0 : index
    %c54 = arith.constant 54 : index
    %c0_207 = arith.constant 0 : index
    %238 = vector.load %arg8[%c0_206, %c54, %c0_207] : memref<1x288x128xf32, #tpu.memory_space<vmem>>, vector<1x16x128xf32>
    %239 = vector.shape_cast %238 : vector<1x16x128xf32> to vector<16x128xf32>
    %240 = vector.shape_cast %239 : vector<16x128xf32> to vector<1x16x128xf32>
    %c4_208 = arith.constant 4 : index
    %c1_209 = arith.constant 1 : index
    %c0_210 = arith.constant 0 : index
    %241 = vector.load %arg11[%c4_208, %c1_209, %c0_210] : memref<18x18x128xf32, #tpu.memory_space<vmem>>, vector<1x16x128xf32>
    tpu.vector_store %arg11[%c4_208, %c1_209, %c0_210], %240 {strides = array<i32>} : memref<18x18x128xf32, #tpu.memory_space<vmem>>, vector<1x16x128xf32>,
    %c0_211 = arith.constant 0 : index
    %c72 = arith.constant 72 : index
    %c0_212 = arith.constant 0 : index
    %242 = vector.load %arg8[%c0_211, %c72, %c0_212] : memref<1x288x128xf32, #tpu.memory_space<vmem>>, vector<1x16x128xf32>
    %243 = vector.shape_cast %242 : vector<1x16x128xf32> to vector<16x128xf32>
    %244 = vector.shape_cast %243 : vector<16x128xf32> to vector<1x16x128xf32>
    %c5_213 = arith.constant 5 : index
    %c1_214 = arith.constant 1 : index
    %c0_215 = arith.constant 0 : index
    %245 = vector.load %arg11[%c5_213, %c1_214, %c0_215] : memref<18x18x128xf32, #tpu.memory_space<vmem>>, vector<1x16x128xf32>
    tpu.vector_store %arg11[%c5_213, %c1_214, %c0_215], %244 {strides = array<i32>} : memref<18x18x128xf32, #tpu.memory_space<vmem>>, vector<1x16x128xf32>,
    %c0_216 = arith.constant 0 : index
    %c90 = arith.constant 90 : index
    %c0_217 = arith.constant 0 : index
    %246 = vector.load %arg8[%c0_216, %c90, %c0_217] : memref<1x288x128xf32, #tpu.memory_space<vmem>>, vector<1x16x128xf32>
    %247 = vector.shape_cast %246 : vector<1x16x128xf32> to vector<16x128xf32>
    %248 = vector.shape_cast %247 : vector<16x128xf32> to vector<1x16x128xf32>
    %c6_218 = arith.constant 6 : index
    %c1_219 = arith.constant 1 : index
    %c0_220 = arith.constant 0 : index
    %249 = vector.load %arg11[%c6_218, %c1_219, %c0_220] : memref<18x18x128xf32, #tpu.memory_space<vmem>>, vector<1x16x128xf32>
    tpu.vector_store %arg11[%c6_218, %c1_219, %c0_220], %248 {strides = array<i32>} : memref<18x18x128xf32, #tpu.memory_space<vmem>>, vector<1x16x128xf32>,
    %c0_221 = arith.constant 0 : index
    %c108 = arith.constant 108 : index
    %c0_222 = arith.constant 0 : index
    %250 = vector.load %arg8[%c0_221, %c108, %c0_222] : memref<1x288x128xf32, #tpu.memory_space<vmem>>, vector<1x16x128xf32>
    %251 = vector.shape_cast %250 : vector<1x16x128xf32> to vector<16x128xf32>
    %252 = vector.shape_cast %251 : vector<16x128xf32> to vector<1x16x128xf32>
    %c7_223 = arith.constant 7 : index
    %c1_224 = arith.constant 1 : index
    %c0_225 = arith.constant 0 : index
    %253 = vector.load %arg11[%c7_223, %c1_224, %c0_225] : memref<18x18x128xf32, #tpu.memory_space<vmem>>, vector<1x16x128xf32>
    tpu.vector_store %arg11[%c7_223, %c1_224, %c0_225], %252 {strides = array<i32>} : memref<18x18x128xf32, #tpu.memory_space<vmem>>, vector<1x16x128xf32>,
    %c0_226 = arith.constant 0 : index
    %c126 = arith.constant 126 : index
    %c0_227 = arith.constant 0 : index
    %254 = vector.load %arg8[%c0_226, %c126, %c0_227] : memref<1x288x128xf32, #tpu.memory_space<vmem>>, vector<1x16x128xf32>
    %255 = vector.shape_cast %254 : vector<1x16x128xf32> to vector<16x128xf32>
    %256 = vector.shape_cast %255 : vector<16x128xf32> to vector<1x16x128xf32>
    %c8_228 = arith.constant 8 : index
    %c1_229 = arith.constant 1 : index
    %c0_230 = arith.constant 0 : index
    %257 = vector.load %arg11[%c8_228, %c1_229, %c0_230] : memref<18x18x128xf32, #tpu.memory_space<vmem>>, vector<1x16x128xf32>
    tpu.vector_store %arg11[%c8_228, %c1_229, %c0_230], %256 {strides = array<i32>} : memref<18x18x128xf32, #tpu.memory_space<vmem>>, vector<1x16x128xf32>,
    %c0_231 = arith.constant 0 : index
    %c144_232 = arith.constant 144 : index
    %c0_233 = arith.constant 0 : index
    %258 = vector.load %arg8[%c0_231, %c144_232, %c0_233] : memref<1x288x128xf32, #tpu.memory_space<vmem>>, vector<1x16x128xf32>
    %259 = vector.shape_cast %258 : vector<1x16x128xf32> to vector<16x128xf32>
    %260 = vector.shape_cast %259 : vector<16x128xf32> to vector<1x16x128xf32>
    %c9 = arith.constant 9 : index
    %c1_234 = arith.constant 1 : index
    %c0_235 = arith.constant 0 : index
    %261 = vector.load %arg11[%c9, %c1_234, %c0_235] : memref<18x18x128xf32, #tpu.memory_space<vmem>>, vector<1x16x128xf32>
    tpu.vector_store %arg11[%c9, %c1_234, %c0_235], %260 {strides = array<i32>} : memref<18x18x128xf32, #tpu.memory_space<vmem>>, vector<1x16x128xf32>,
    %c0_236 = arith.constant 0 : index
    %c162_237 = arith.constant 162 : index
    %c0_238 = arith.constant 0 : index
    %262 = vector.load %arg8[%c0_236, %c162_237, %c0_238] : memref<1x288x128xf32, #tpu.memory_space<vmem>>, vector<1x16x128xf32>
    %263 = vector.shape_cast %262 : vector<1x16x128xf32> to vector<16x128xf32>
    %264 = vector.shape_cast %263 : vector<16x128xf32> to vector<1x16x128xf32>
    %c10 = arith.constant 10 : index
    %c1_239 = arith.constant 1 : index
    %c0_240 = arith.constant 0 : index
    %265 = vector.load %arg11[%c10, %c1_239, %c0_240] : memref<18x18x128xf32, #tpu.memory_space<vmem>>, vector<1x16x128xf32>
    tpu.vector_store %arg11[%c10, %c1_239, %c0_240], %264 {strides = array<i32>} : memref<18x18x128xf32, #tpu.memory_space<vmem>>, vector<1x16x128xf32>,
    %c0_241 = arith.constant 0 : index
    %c180_242 = arith.constant 180 : index
    %c0_243 = arith.constant 0 : index
    %266 = vector.load %arg8[%c0_241, %c180_242, %c0_243] : memref<1x288x128xf32, #tpu.memory_space<vmem>>, vector<1x16x128xf32>
    %267 = vector.shape_cast %266 : vector<1x16x128xf32> to vector<16x128xf32>
    %268 = vector.shape_cast %267 : vector<16x128xf32> to vector<1x16x128xf32>
    %c11 = arith.constant 11 : index
    %c1_244 = arith.constant 1 : index
    %c0_245 = arith.constant 0 : index
    %269 = vector.load %arg11[%c11, %c1_244, %c0_245] : memref<18x18x128xf32, #tpu.memory_space<vmem>>, vector<1x16x128xf32>
    tpu.vector_store %arg11[%c11, %c1_244, %c0_245], %268 {strides = array<i32>} : memref<18x18x128xf32, #tpu.memory_space<vmem>>, vector<1x16x128xf32>,
    %c0_246 = arith.constant 0 : index
    %c198 = arith.constant 198 : index
    %c0_247 = arith.constant 0 : index
    %270 = vector.load %arg8[%c0_246, %c198, %c0_247] : memref<1x288x128xf32, #tpu.memory_space<vmem>>, vector<1x16x128xf32>
    %271 = vector.shape_cast %270 : vector<1x16x128xf32> to vector<16x128xf32>
    %272 = vector.shape_cast %271 : vector<16x128xf32> to vector<1x16x128xf32>
    %c12 = arith.constant 12 : index
    %c1_248 = arith.constant 1 : index
    %c0_249 = arith.constant 0 : index
    %273 = vector.load %arg11[%c12, %c1_248, %c0_249] : memref<18x18x128xf32, #tpu.memory_space<vmem>>, vector<1x16x128xf32>
    tpu.vector_store %arg11[%c12, %c1_248, %c0_249], %272 {strides = array<i32>} : memref<18x18x128xf32, #tpu.memory_space<vmem>>, vector<1x16x128xf32>,
    %c0_250 = arith.constant 0 : index
    %c216 = arith.constant 216 : index
    %c0_251 = arith.constant 0 : index
    %274 = vector.load %arg8[%c0_250, %c216, %c0_251] : memref<1x288x128xf32, #tpu.memory_space<vmem>>, vector<1x16x128xf32>
    %275 = vector.shape_cast %274 : vector<1x16x128xf32> to vector<16x128xf32>
    %276 = vector.shape_cast %275 : vector<16x128xf32> to vector<1x16x128xf32>
    %c13 = arith.constant 13 : index
    %c1_252 = arith.constant 1 : index
    %c0_253 = arith.constant 0 : index
    %277 = vector.load %arg11[%c13, %c1_252, %c0_253] : memref<18x18x128xf32, #tpu.memory_space<vmem>>, vector<1x16x128xf32>
    tpu.vector_store %arg11[%c13, %c1_252, %c0_253], %276 {strides = array<i32>} : memref<18x18x128xf32, #tpu.memory_space<vmem>>, vector<1x16x128xf32>,
    %c0_254 = arith.constant 0 : index
    %c234 = arith.constant 234 : index
    %c0_255 = arith.constant 0 : index
    %278 = vector.load %arg8[%c0_254, %c234, %c0_255] : memref<1x288x128xf32, #tpu.memory_space<vmem>>, vector<1x16x128xf32>
    %279 = vector.shape_cast %278 : vector<1x16x128xf32> to vector<16x128xf32>
    %280 = vector.shape_cast %279 : vector<16x128xf32> to vector<1x16x128xf32>
    %c14 = arith.constant 14 : index
    %c1_256 = arith.constant 1 : index
    %c0_257 = arith.constant 0 : index
    %281 = vector.load %arg11[%c14, %c1_256, %c0_257] : memref<18x18x128xf32, #tpu.memory_space<vmem>>, vector<1x16x128xf32>
    tpu.vector_store %arg11[%c14, %c1_256, %c0_257], %280 {strides = array<i32>} : memref<18x18x128xf32, #tpu.memory_space<vmem>>, vector<1x16x128xf32>,
    %c0_258 = arith.constant 0 : index
    %c252 = arith.constant 252 : index
    %c0_259 = arith.constant 0 : index
    %282 = vector.load %arg8[%c0_258, %c252, %c0_259] : memref<1x288x128xf32, #tpu.memory_space<vmem>>, vector<1x16x128xf32>
    %283 = vector.shape_cast %282 : vector<1x16x128xf32> to vector<16x128xf32>
    %284 = vector.shape_cast %283 : vector<16x128xf32> to vector<1x16x128xf32>
    %c15 = arith.constant 15 : index
    %c1_260 = arith.constant 1 : index
    %c0_261 = arith.constant 0 : index
    %285 = vector.load %arg11[%c15, %c1_260, %c0_261] : memref<18x18x128xf32, #tpu.memory_space<vmem>>, vector<1x16x128xf32>
    tpu.vector_store %arg11[%c15, %c1_260, %c0_261], %284 {strides = array<i32>} : memref<18x18x128xf32, #tpu.memory_space<vmem>>, vector<1x16x128xf32>,
    %c0_262 = arith.constant 0 : index
    %c270 = arith.constant 270 : index
    %c0_263 = arith.constant 0 : index
    %286 = vector.load %arg8[%c0_262, %c270, %c0_263] : memref<1x288x128xf32, #tpu.memory_space<vmem>>, vector<1x16x128xf32>
    %287 = vector.shape_cast %286 : vector<1x16x128xf32> to vector<16x128xf32>
    %288 = vector.shape_cast %287 : vector<16x128xf32> to vector<1x16x128xf32>
    %c16 = arith.constant 16 : index
    %c1_264 = arith.constant 1 : index
    %c0_265 = arith.constant 0 : index
    %289 = vector.load %arg11[%c16, %c1_264, %c0_265] : memref<18x18x128xf32, #tpu.memory_space<vmem>>, vector<1x16x128xf32>
    tpu.vector_store %arg11[%c16, %c1_264, %c0_265], %288 {strides = array<i32>} : memref<18x18x128xf32, #tpu.memory_space<vmem>>, vector<1x16x128xf32>,
    %c0_266 = arith.constant 0 : index
    %c0_267 = arith.constant 0 : index
    %c0_268 = arith.constant 0 : index
    %290 = tpu.strided_load %arg11[%c0_266, %c0_267, %c0_268] {strides = array<i32: 2, 1, 1>} : memref<18x18x128xf32, #tpu.memory_space<vmem>>, vector<8x18x128xf32>
    %c1_269 = arith.constant 1 : index
    %c0_270 = arith.constant 0 : index
    %c0_271 = arith.constant 0 : index
    %291 = tpu.strided_load %arg11[%c1_269, %c0_270, %c0_271] {strides = array<i32: 2, 1, 1>} : memref<18x18x128xf32, #tpu.memory_space<vmem>>, vector<8x18x128xf32>
    %292 = arith.maximumf %290, %291 : vector<8x18x128xf32>
    %c2_272 = arith.constant 2 : index
    %c0_273 = arith.constant 0 : index
    %c0_274 = arith.constant 0 : index
    %293 = tpu.strided_load %arg11[%c2_272, %c0_273, %c0_274] {strides = array<i32: 2, 1, 1>} : memref<18x18x128xf32, #tpu.memory_space<vmem>>, vector<8x18x128xf32>
    %294 = arith.maximumf %292, %293 : vector<8x18x128xf32>
    %c0_275 = arith.constant 0 : index
    %c0_276 = arith.constant 0 : index
    %c0_277 = arith.constant 0 : index
    %295 = vector.load %arg12[%c0_275, %c0_276, %c0_277] : memref<8x18x128xf32, #tpu.memory_space<vmem>>, vector<8x18x128xf32>
    tpu.vector_store %arg12[%c0_275, %c0_276, %c0_277], %294 {strides = array<i32>} : memref<8x18x128xf32, #tpu.memory_space<vmem>>, vector<8x18x128xf32>,
    %c0_278 = arith.constant 0 : index
    %c0_279 = arith.constant 0 : index
    %c0_280 = arith.constant 0 : index
    %296 = tpu.strided_load %arg12[%c0_278, %c0_279, %c0_280] {strides = array<i32: 1, 2, 1>} : memref<8x18x128xf32, #tpu.memory_space<vmem>>, vector<8x8x128xf32>
    %c0_281 = arith.constant 0 : index
    %c1_282 = arith.constant 1 : index
    %c0_283 = arith.constant 0 : index
    %297 = tpu.strided_load %arg12[%c0_281, %c1_282, %c0_283] {strides = array<i32: 1, 2, 1>} : memref<8x18x128xf32, #tpu.memory_space<vmem>>, vector<8x8x128xf32>
    %298 = arith.maximumf %296, %297 : vector<8x8x128xf32>
    %c0_284 = arith.constant 0 : index
    %c2_285 = arith.constant 2 : index
    %c0_286 = arith.constant 0 : index
    %299 = tpu.strided_load %arg12[%c0_284, %c2_285, %c0_286] {strides = array<i32: 1, 2, 1>} : memref<8x18x128xf32, #tpu.memory_space<vmem>>, vector<8x8x128xf32>
    %300 = arith.maximumf %298, %299 : vector<8x8x128xf32>
    %c0_287 = arith.constant 0 : index
    %c0_288 = arith.constant 0 : index
    %c0_289 = arith.constant 0 : index
    %c0_290 = arith.constant 0 : index
    %301 = vector.load %arg9[%c0_287, %c0_288, %c0_289, %c0_290] : memref<1x8x8x128xf32, #tpu.memory_space<vmem>>, vector<1x8x8x128xf32>
    %302 = vector.shape_cast %301 : vector<1x8x8x128xf32> to vector<8x8x128xf32>
    %303 = vector.shape_cast %300 : vector<8x8x128xf32> to vector<1x8x8x128xf32>
    tpu.vector_store %arg9[%c0_287, %c0_288, %c0_289, %c0_290], %303 {strides = array<i32>} : memref<1x8x8x128xf32, #tpu.memory_space<vmem>>, vector<1x8x8x128xf32>,
    return
  }
  func.func @transform_0(%arg0: i32) -> (i32, i32, i32) {
    %c0_i32 = arith.constant 0 : i32
    %c0_i32_0 = arith.constant 0 : i32
    %c0_i32_1 = arith.constant 0 : i32
    return %arg0, %c0_i32, %c0_i32_0 : i32, i32, i32
  }
  func.func @transform_1(%arg0: i32) -> (i32, i32) {
    %c0_i32 = arith.constant 0 : i32
    %c0_i32_0 = arith.constant 0 : i32
    %c0_i32_1 = arith.constant 0 : i32
    return %c0_i32, %c0_i32_0 : i32, i32
  }
  func.func @transform_2(%arg0: i32) -> (i32, i32, i32) {
    %c0_i32 = arith.constant 0 : i32
    %c0_i32_0 = arith.constant 0 : i32
    %c0_i32_1 = arith.constant 0 : i32
    %c0_i32_2 = arith.constant 0 : i32
    return %c0_i32, %c0_i32_0, %c0_i32_1 : i32, i32, i32
  }
  func.func @transform_3(%arg0: i32) -> (i32, i32) {
    %c0_i32 = arith.constant 0 : i32
    %c0_i32_0 = arith.constant 0 : i32
    %c0_i32_1 = arith.constant 0 : i32
    return %c0_i32, %c0_i32_0 : i32, i32
  }
  func.func @transform_4(%arg0: i32) -> (i32, i32) {
    %c0_i32 = arith.constant 0 : i32
    %c0_i32_0 = arith.constant 0 : i32
    %c0_i32_1 = arith.constant 0 : i32
    return %c0_i32, %c0_i32_0 : i32, i32
  }
  func.func @transform_5(%arg0: i32) -> (i32, i32) {
    %c0_i32 = arith.constant 0 : i32
    %c0_i32_0 = arith.constant 0 : i32
    %c0_i32_1 = arith.constant 0 : i32
    return %c0_i32, %c0_i32_0 : i32, i32
  }
  func.func @transform_6(%arg0: i32) -> (i32, i32) {
    %c0_i32 = arith.constant 0 : i32
    %c0_i32_0 = arith.constant 0 : i32
    %c0_i32_1 = arith.constant 0 : i32
    return %c0_i32, %c0_i32_0 : i32, i32
  }
  func.func @transform_7(%arg0: i32) -> (i32, i32, i32) {
    %c0_i32 = arith.constant 0 : i32
    %c0_i32_0 = arith.constant 0 : i32
    %c0_i32_1 = arith.constant 0 : i32
    return %arg0, %c0_i32, %c0_i32_0 : i32, i32, i32
  }
  func.func @transform_8(%arg0: i32) -> (i32, i32, i32, i32) {
    %c0_i32 = arith.constant 0 : i32
    %c0_i32_0 = arith.constant 0 : i32
    %c0_i32_1 = arith.constant 0 : i32
    %c0_i32_2 = arith.constant 0 : i32
    return %arg0, %c0_i32, %c0_i32_0, %c0_i32_1 : i32, i32, i32, i32
  }
}

</mosaic_0001>

<llo_original>
// kernel: down_block_x2.1
$region0: #{down_block_x2.1}
  #allocation0 [shape = 'u32[]', space=smem, size = 0x4, offset = 0x4, fixed_abs, tag = 'smem constant byte address 0x4 - core index']
  #allocation1 [shape = 'u32[72,128]{1,0:T(1,128)}', space=vmem, size = 0x9000, scoped, tag = 'internal scratch']
  #allocation2 [shape = 'bf16[328,128]{1,0:T(8,128)(2,1)}', space=vmem, size = 0x14800, scoped, tag = 'scratch operand']
  #allocation3 [shape = 'f32[18,18,128]{2,1,0:T(8,128)}', space=vmem, size = 0x36000, scoped, tag = 'scratch operand']
  #allocation4 [shape = 'f32[8,18,128]{2,1,0:T(8,128)}', space=vmem, size = 0x18000, scoped, tag = 'scratch operand']
  %s0 = inlined_call_operand.vmem [shape: bf16[2,328,128], index: 0, kind: input, shape index: {}]
  %s1 = inlined_call_operand.vmem [shape: bf16[128,128], index: 1, kind: input, shape index: {}]
  %s2 = inlined_call_operand.vmem [shape: bf16[9,128,128], index: 2, kind: input, shape index: {}]
  %s3 = inlined_call_operand.vmem [shape: f32[1,128], index: 3, kind: input, shape index: {}]
  %s4 = inlined_call_operand.vmem [shape: f32[1,128], index: 4, kind: input, shape index: {}]
  %s5 = inlined_call_operand.vmem [shape: f32[1,128], index: 5, kind: input, shape index: {}]
  %s6 = inlined_call_operand.vmem [shape: f32[1,128], index: 6, kind: input, shape index: {}]
  %s7 = inlined_call_operand.vmem [shape: f32[2,288,128], index: 7, kind: output, shape index: {0}]
  %s8 = inlined_call_operand.vmem [shape: f32[2,8,8,128], index: 8, kind: output, shape index: {1}]
  %9 = xla_tuple %s7, %s8
  %s10 = sld [smem:[#allocation0]]
  $region69: #{down_block_x2.1} parent=0
    _
  %s12 = ssub.s32 1, %s10
  %s13 = scalar_select 0, %s12, %s10
  loop: start=0, step=1, limit=4
  $region2: #{down_block_x2.1} parent=0 // loop_pre_header
    _
  $region3: #{down_block_x2.1} parent=0 // loop_header
    %s15 = sphi 0, %s19
    %p16 = scmp.ge.s32.totalorder %s15, 4
    %s25 = sphi 0, %s27
    %s28 = sphi 0, %s25
    %s29 = sphi 0, %s28
    %s45 = sphi 0, %s29
    %s49 = sphi 0, %s49
    %s51 = sphi 0, %s49
    %s52 = sphi 0, %s51
    %s66 = sphi 0, %s52
    %s70 = sphi 0, %s70
    %s72 = sphi 0, %s70
    %s73 = sphi 0, %s72
    %s87 = sphi 0, %s73
    %s91 = sphi 0, %s91
    %s93 = sphi 0, %s91
    %s94 = sphi 0, %s93
    %s108 = sphi 0, %s94
    %s112 = sphi 0, %s112
    %s114 = sphi 0, %s112
    %s115 = sphi 0, %s114
    %s129 = sphi 0, %s115
    %s133 = sphi 0, %s133
    %s135 = sphi 0, %s133
    %s136 = sphi 0, %s135
    %s150 = sphi 0, %s136
    %s154 = sphi 0, %s154
    %s156 = sphi 0, %s154
    %s157 = sphi 0, %s156
    %s171 = sphi 0, %s157
    %s177 = sphi 0, %s179
    %s180 = sphi 0, %s177
    %s181 = sphi 0, %s180
    %s197 = sphi 0, %s181
    %s203 = sphi 0, %s205
    %s206 = sphi 0, %s203
    %s207 = sphi 0, %s206
    %s223 = sphi 0, %s207
  $region4: #{down_block_x2.1} parent=0 // loop_header_branch
    %18 = sbr.rel (%p16) target = $region8
  $region5: #{down_block_x2.1} parent=0 // loop_body
    %s20 = ssub.s32 %s15, 1
    %s21 = ssub.s32 %s15, 2
    %s22 = sadd.s32 %s15, 1
    %s23 = ssub.s32 %s15, %s22
    %p24 = scmp.eq.s32.totalorder %s23, 0
    %s26 = sadd.s32 %s25, 1
    %s27 = scalar_select %p24, %s25, %s26
    %p30 = pneg %p24
    %p31 = scmp.eq.s32.totalorder %s15, 1
    %p32 = por %p30, %p31
    %p33 = scmp.ne.s32.totalorder %s25, %s28
    %p34 = scmp.eq.s32.totalorder %s15, 0
    %p35 = por %p33, %p34
    %p36 = scmp.ne.s32.totalorder %s25, %s28
    %p37 = scmp.eq.s32.totalorder %s20, 1
    %p38 = por %p36, %p37
    %p39 = scmp.ne.s32.totalorder %s28, %s29
    %p40 = scmp.eq.s32.totalorder %s20, 0
    %p41 = por %p39, %p40
    %p42 = scmp.ne.s32.totalorder %s28, %s29
    %p43 = scmp.eq.s32.totalorder %s21, 1
    %p44 = por %p42, %p43
    %p46 = scmp.ne.s32.totalorder %s29, %s45
    %p47 = scmp.eq.s32.totalorder %s21, 0
    %p48 = por %p46, %p47
    %s50 = sadd.s32 %s49, 1
    %p53 = scmp.eq.s32.totalorder %s15, 1
    %p54 = scmp.ne.s32.totalorder %s49, %s51
    %p55 = scmp.eq.s32.totalorder %s15, 0
    %p56 = por %p54, %p55
    %p57 = scmp.ne.s32.totalorder %s49, %s51
    %p58 = scmp.eq.s32.totalorder %s20, 1
    %p59 = por %p57, %p58
    %p60 = scmp.ne.s32.totalorder %s51, %s52
    %p61 = scmp.eq.s32.totalorder %s20, 0
    %p62 = por %p60, %p61
    %p63 = scmp.ne.s32.totalorder %s51, %s52
    %p64 = scmp.eq.s32.totalorder %s21, 1
    %p65 = por %p63, %p64
    %p67 = scmp.ne.s32.totalorder %s52, %s66
    %p68 = scmp.eq.s32.totalorder %s21, 0
    %p69 = por %p67, %p68
    %s71 = sadd.s32 %s70, 1
    %p74 = scmp.eq.s32.totalorder %s15, 1
    %p75 = scmp.ne.s32.totalorder %s70, %s72
    %p76 = scmp.eq.s32.totalorder %s15, 0
    %p77 = por %p75, %p76
    %p78 = scmp.ne.s32.totalorder %s70, %s72
    %p79 = scmp.eq.s32.totalorder %s20, 1
    %p80 = por %p78, %p79
    %p81 = scmp.ne.s32.totalorder %s72, %s73
    %p82 = scmp.eq.s32.totalorder %s20, 0
    %p83 = por %p81, %p82
    %p84 = scmp.ne.s32.totalorder %s72, %s73
    %p85 = scmp.eq.s32.totalorder %s21, 1
    %p86 = por %p84, %p85
    %p88 = scmp.ne.s32.totalorder %s73, %s87
    %p89 = scmp.eq.s32.totalorder %s21, 0
    %p90 = por %p88, %p89
    %s92 = sadd.s32 %s91, 1
    %p95 = scmp.eq.s32.totalorder %s15, 1
    %p96 = scmp.ne.s32.totalorder %s91, %s93
    %p97 = scmp.eq.s32.totalorder %s15, 0
    %p98 = por %p96, %p97
    %p99 = scmp.ne.s32.totalorder %s91, %s93
    %p100 = scmp.eq.s32.totalorder %s20, 1
    %p101 = por %p99, %p100
    %p102 = scmp.ne.s32.totalorder %s93, %s94
    %p103 = scmp.eq.s32.totalorder %s20, 0
    %p104 = por %p102, %p103
    %p105 = scmp.ne.s32.totalorder %s93, %s94
    %p106 = scmp.eq.s32.totalorder %s21, 1
    %p107 = por %p105, %p106
    %p109 = scmp.ne.s32.totalorder %s94, %s108
    %p110 = scmp.eq.s32.totalorder %s21, 0
    %p111 = por %p109, %p110
    %s113 = sadd.s32 %s112, 1
    %p116 = scmp.eq.s32.totalorder %s15, 1
    %p117 = scmp.ne.s32.totalorder %s112, %s114
    %p118 = scmp.eq.s32.totalorder %s15, 0
    %p119 = por %p117, %p118
    %p120 = scmp.ne.s32.totalorder %s112, %s114
    %p121 = scmp.eq.s32.totalorder %s20, 1
    %p122 = por %p120, %p121
    %p123 = scmp.ne.s32.totalorder %s114, %s115
    %p124 = scmp.eq.s32.totalorder %s20, 0
    %p125 = por %p123, %p124
    %p126 = scmp.ne.s32.totalorder %s114, %s115
    %p127 = scmp.eq.s32.totalorder %s21, 1
    %p128 = por %p126, %p127
    %p130 = scmp.ne.s32.totalorder %s115, %s129
    %p131 = scmp.eq.s32.totalorder %s21, 0
    %p132 = por %p130, %p131
    %s134 = sadd.s32 %s133, 1
    %p137 = scmp.eq.s32.totalorder %s15, 1
    %p138 = scmp.ne.s32.totalorder %s133, %s135
    %p139 = scmp.eq.s32.totalorder %s15, 0
    %p140 = por %p138, %p139
    %p141 = scmp.ne.s32.totalorder %s133, %s135
    %p142 = scmp.eq.s32.totalorder %s20, 1
    %p143 = por %p141, %p142
    %p144 = scmp.ne.s32.totalorder %s135, %s136
    %p145 = scmp.eq.s32.totalorder %s20, 0
    %p146 = por %p144, %p145
    %p147 = scmp.ne.s32.totalorder %s135, %s136
    %p148 = scmp.eq.s32.totalorder %s21, 1
    %p149 = por %p147, %p148
    %p151 = scmp.ne.s32.totalorder %s136, %s150
    %p152 = scmp.eq.s32.totalorder %s21, 0
    %p153 = por %p151, %p152
    %s155 = sadd.s32 %s154, 1
    %p158 = scmp.eq.s32.totalorder %s15, 1
    %p159 = scmp.ne.s32.totalorder %s154, %s156
    %p160 = scmp.eq.s32.totalorder %s15, 0
    %p161 = por %p159, %p160
    %p162 = scmp.ne.s32.totalorder %s154, %s156
    %p163 = scmp.eq.s32.totalorder %s20, 1
    %p164 = por %p162, %p163
    %p165 = scmp.ne.s32.totalorder %s156, %s157
    %p166 = scmp.eq.s32.totalorder %s20, 0
    %p167 = por %p165, %p166
    %p168 = scmp.ne.s32.totalorder %s156, %s157
    %p169 = scmp.eq.s32.totalorder %s21, 1
    %p170 = por %p168, %p169
    %p172 = scmp.ne.s32.totalorder %s157, %s171
    %p173 = scmp.eq.s32.totalorder %s21, 0
    %p174 = por %p172, %p173
    %s175 = ssub.s32 %s15, %s22
    %p176 = scmp.eq.s32.totalorder %s175, 0
    %s178 = sadd.s32 %s177, 1
    %s179 = scalar_select %p176, %s177, %s178
    %p182 = pneg %p176
    %p183 = scmp.eq.s32.totalorder %s15, 1
    %p184 = por %p182, %p183
    %p185 = scmp.ne.s32.totalorder %s177, %s180
    %p186 = scmp.eq.s32.totalorder %s15, 0
    %p187 = por %p185, %p186
    %p188 = scmp.ne.s32.totalorder %s177, %s180
    %p189 = scmp.eq.s32.totalorder %s20, 1
    %p190 = por %p188, %p189
    %p191 = scmp.ne.s32.totalorder %s180, %s181
    %p192 = scmp.eq.s32.totalorder %s20, 0
    %p193 = por %p191, %p192
    %p194 = scmp.ne.s32.totalorder %s180, %s181
    %p195 = scmp.eq.s32.totalorder %s21, 1
    %p196 = por %p194, %p195
    %p198 = scmp.ne.s32.totalorder %s181, %s197
    %p199 = scmp.eq.s32.totalorder %s21, 0
    %p200 = por %p198, %p199
    %s201 = ssub.s32 %s15, %s22
    %p202 = scmp.eq.s32.totalorder %s201, 0
    %s204 = sadd.s32 %s203, 1
    %s205 = scalar_select %p202, %s203, %s204
    %p208 = pneg %p202
    %p209 = scmp.eq.s32.totalorder %s15, 1
    %p210 = por %p208, %p209
    %p211 = scmp.ne.s32.totalorder %s203, %s206
    %p212 = scmp.eq.s32.totalorder %s15, 0
    %p213 = por %p211, %p212
    %p214 = scmp.ne.s32.totalorder %s203, %s206
    %p215 = scmp.eq.s32.totalorder %s20, 1
    %p216 = por %p214, %p215
    %p217 = scmp.ne.s32.totalorder %s206, %s207
    %p218 = scmp.eq.s32.totalorder %s20, 0
    %p219 = por %p217, %p218
    %p220 = scmp.ne.s32.totalorder %s206, %s207
    %p221 = scmp.eq.s32.totalorder %s21, 1
    %p222 = por %p220, %p221
    %p224 = scmp.ne.s32.totalorder %s207, %s223
    %p225 = scmp.eq.s32.totalorder %s21, 0
    %p226 = por %p224, %p225
    %p227 = scmp.le.s32.totalorder 1, %s15
    %p228 = scmp.lt.s32.totalorder %s15, 3
    %p229 = pnand %p227, %p228
    %p230 = pneg %p229
    // Predicated region
    $region9: #{down_block_x2.1} parent=5 // pred_check
      _
    $region10: #{down_block_x2.1} parent=5 // pred_check_branch
      %232 = sbr.rel (%p229) target = $region12
    $region11: #{down_block_x2.1} parent=5 // pred_region
      %s233 = ssub.s32 %s15, 1
      // Predicated region
      $region13: #{down_block_x2.1} parent=11 // pred_check
        %p234 = pneg %p62
      $region14: #{down_block_x2.1} parent=11 // pred_check_branch
        %236 = sbr.rel (%p234) target = $region16
      $region15: #{down_block_x2.1} parent=11 // pred_region
        _
      $region16: #{down_block_x2.1} parent=11 // pred_fallthru
        _
      // Predicated region
      $region17: #{down_block_x2.1} parent=11 // pred_check
        %p237 = pneg %p83
      $region18: #{down_block_x2.1} parent=11 // pred_check_branch
        %239 = sbr.rel (%p237) target = $region20
      $region19: #{down_block_x2.1} parent=11 // pred_region
        _
      $region20: #{down_block_x2.1} parent=11 // pred_fallthru
        _
      // Predicated region
      $region21: #{down_block_x2.1} parent=11 // pred_check
        %p240 = pneg %p104
      $region22: #{down_block_x2.1} parent=11 // pred_check_branch
        %242 = sbr.rel (%p240) target = $region24
      $region23: #{down_block_x2.1} parent=11 // pred_region
        _
      $region24: #{down_block_x2.1} parent=11 // pred_fallthru
        _
      // Predicated region
      $region25: #{down_block_x2.1} parent=11 // pred_check
        %p243 = pneg %p125
      $region26: #{down_block_x2.1} parent=11 // pred_check_branch
        %245 = sbr.rel (%p243) target = $region28
      $region27: #{down_block_x2.1} parent=11 // pred_region
        _
      $region28: #{down_block_x2.1} parent=11 // pred_fallthru
        _
      // Predicated region
      $region29: #{down_block_x2.1} parent=11 // pred_check
        %p246 = pneg %p146
      $region30: #{down_block_x2.1} parent=11 // pred_check_branch
        %248 = sbr.rel (%p246) target = $region32
      $region31: #{down_block_x2.1} parent=11 // pred_region
        _
      $region32: #{down_block_x2.1} parent=11 // pred_fallthru
        _
      // Predicated region
      $region33: #{down_block_x2.1} parent=11 // pred_check
        %p249 = pneg %p167
      $region34: #{down_block_x2.1} parent=11 // pred_check_branch
        %251 = sbr.rel (%p249) target = $region36
      $region35: #{down_block_x2.1} parent=11 // pred_region
        _
      $region36: #{down_block_x2.1} parent=11 // pred_fallthru
        _
    $region12: #{down_block_x2.1} parent=5 // pred_fallthru
      _
    %p252 = scmp.lt.s32.totalorder %s15, 2
    // Predicated region
    $region37: #{down_block_x2.1} parent=5 // pred_check
      %p253 = pneg %p252
    $region38: #{down_block_x2.1} parent=5 // pred_check_branch
      %255 = sbr.rel (%p253) target = $region40
    $region39: #{down_block_x2.1} parent=5 // pred_region
      // Predicated region
      $region41: #{down_block_x2.1} parent=39 // pred_check
        %p256 = pneg %p35
      $region42: #{down_block_x2.1} parent=39 // pred_check_branch
        %258 = sbr.rel (%p256) target = $region44
      $region43: #{down_block_x2.1} parent=39 // pred_region
        %p259 = scmp.lt.s32.totalorder %s15, 1
        %s260 = scalar_select %p259, %s15, 1
        %s261 = smul.addr %s260, 41
        %s262 = smul.addr %s261, 4
        %s263 = scalar_lea.vmem %s0, %s262
      $region44: #{down_block_x2.1} parent=39 // pred_fallthru
        _
    $region40: #{down_block_x2.1} parent=5 // pred_fallthru
      _
    %p264 = scmp.le.s32.totalorder 1, %s15
    %p265 = scmp.lt.s32.totalorder %s15, 3
    %p266 = pnand %p264, %p265
    %p267 = pneg %p266
    // Predicated region
    $region45: #{down_block_x2.1} parent=5 // pred_check
      _
    $region46: #{down_block_x2.1} parent=5 // pred_check_branch
      %269 = sbr.rel (%p266) target = $region48
    $region47: #{down_block_x2.1} parent=5 // pred_region
      %s270 = ssub.s32 %s15, 1
      %p271 = scmp.lt.s32.totalorder %s20, 1
      %s272 = scalar_select %p271, %s20, 1
      %s273 = smul.addr %s272, 41
      %s274 = smul.addr %s273, 4
      %s275 = scalar_lea.vmem %s0, %s274
      %p276 = pneg %p41
      %p277 = pneg %p38
      %p278 = pneg %p62
      %p279 = pneg %p59
      %p280 = pneg %p83
      %p281 = pneg %p80
      %p282 = pneg %p104
      %p283 = pneg %p101
      %p284 = pneg %p125
      %p285 = pneg %p122
      %p286 = pneg %p146
      %p287 = pneg %p143
      %p288 = pneg %p167
      %p289 = pneg %p164
      %p290 = pneg %p193
      %p291 = pneg %p190
      %p292 = scmp.lt.s32.totalorder %s20, 1
      %s293 = scalar_select %p292, %s20, 1
      %s294 = smul.addr %s293, 36
      %s295 = smul.addr %s294, 8
      %s296 = scalar_lea.vmem %s7, %s295
      %p297 = pneg %p219
      %p298 = pneg %p216
      %p299 = scmp.lt.s32.totalorder %s20, 1
      %s300 = scalar_select %p299, %s20, 1
      %s301 = smul.addr %s300, 8
      %s302 = smul.addr %s301, 8
      %s303 = scalar_lea.vmem %s8, %s302
      %p304 = scmp.lt.s32.totalorder %s20, 1
      %s305 = scalar_select %p304, %s20, 1
      %s306 = smul.addr %s305, 41
      %s307 = smul.addr %s306, 4
      %s308 = scalar_lea.vmem %s0, %s307
      %p309 = scmp.lt.s32.totalorder %s20, 1
      %s310 = scalar_select %p309, %s20, 1
      %s311 = smul.addr %s310, 36
      %s312 = smul.addr %s311, 8
      %s313 = scalar_lea.vmem %s7, %s312
      %p314 = scmp.lt.s32.totalorder %s20, 1
      %s315 = scalar_select %p314, %s20, 1
      %s316 = smul.addr %s315, 8
      %s317 = smul.addr %s316, 8
      %s318 = scalar_lea.vmem %s8, %s317
      %v319 = vld [vmem:[%s308] sm:$0xf]
      %v320 = vld [vmem:[%s308 + $0x4] sm:$0xf]
      %v321 = vld [vmem:[%s308 + $0x8] sm:$0xf]
      %v322 = vld [vmem:[%s308 + $0xc] sm:$0xf]
      %v323 = vld [vmem:[%s308 + $0x10] sm:$0xf]
      %v324 = vld [vmem:[%s308 + $0x14] sm:$0xf]
      %v325 = vld [vmem:[%s308 + $0x18] sm:$0xf]
      %v326 = vld [vmem:[%s308 + $0x1c] sm:$0xf]
      %v327 = vld [vmem:[%s1] sm:$0xf]
      %v328 = vld [vmem:[%s1 + $0x4] sm:$0xf]
      %v329 = vld [vmem:[%s1 + $0x8] sm:$0xf]
      %v330 = vld [vmem:[%s1 + $0xc] sm:$0xf]
      %v331 = vld [vmem:[%s1 + $0x10] sm:$0xf]
      %v332 = vld [vmem:[%s1 + $0x14] sm:$0xf]
      %v333 = vld [vmem:[%s1 + $0x18] sm:$0xf]
      %v334 = vld [vmem:[%s1 + $0x1c] sm:$0xf]
      %v335 = vld [vmem:[%s1 + $0x20] sm:$0xf]
      %v336 = vld [vmem:[%s1 + $0x24] sm:$0xf]
      %v337 = vld [vmem:[%s1 + $0x28] sm:$0xf]
      %v338 = vld [vmem:[%s1 + $0x2c] sm:$0xf]
      %v339 = vld [vmem:[%s1 + $0x30] sm:$0xf]
      %v340 = vld [vmem:[%s1 + $0x34] sm:$0xf]
      %v341 = vld [vmem:[%s1 + $0x38] sm:$0xf]
      %v342 = vld [vmem:[%s1 + $0x3c] sm:$0xf]
      %v351 = vunpack.c.l.b16 %v319
      %v352 = vunpack.c.l.b16 %v320
      %v353 = vunpack.c.l.b16 %v321
      %v354 = vunpack.c.l.b16 %v322
      %v355 = vunpack.c.l.b16 %v323
      %v356 = vunpack.c.l.b16 %v324
      %v357 = vunpack.c.l.b16 %v325
      %v358 = vunpack.c.l.b16 %v326
      %v359 = vpack.c.b16 %v352, %v351
      %v360 = vpack.c.b16 %v354, %v353
      %v361 = vpack.c.b16 %v356, %v355
      %v362 = vpack.c.b16 %v358, %v357
      %v383 = vunpack.c.l.b16 %v327
      %v384 = vunpack.c.l.b16 %v328
      %v385 = vunpack.c.l.b16 %v329
      %v386 = vunpack.c.l.b16 %v330
      %v387 = vunpack.c.l.b16 %v331
      %v388 = vunpack.c.l.b16 %v332
      %v389 = vunpack.c.l.b16 %v333
      %v390 = vunpack.c.l.b16 %v334
      %v391 = vunpack.c.l.b16 %v335
      %v392 = vunpack.c.l.b16 %v336
      %v393 = vunpack.c.l.b16 %v337
      %v394 = vunpack.c.l.b16 %v338
      %v395 = vunpack.c.l.b16 %v339
      %v396 = vunpack.c.l.b16 %v340
      %v397 = vunpack.c.l.b16 %v341
      %v398 = vunpack.c.l.b16 %v342
      %v399 = vpack.c.b16 %v384, %v383
      %v400 = vpack.c.b16 %v386, %v385
      %v401 = vpack.c.b16 %v388, %v387
      %v402 = vpack.c.b16 %v390, %v389
      %v403 = vpack.c.b16 %v392, %v391
      %v404 = vpack.c.b16 %v394, %v393
      %v405 = vpack.c.b16 %v396, %v395
      %v406 = vpack.c.b16 %v398, %v397
      %415 = vmatpush.bf16.msra.mxu0 %v406
      %416 = vmatpush.bf16.msra.mxu0 %v405
      %417 = vmatpush.bf16.msra.mxu0 %v404
      %418 = vmatpush.bf16.msra.mxu0 %v403
      %419 = vmatpush.bf16.msra.mxu0 %v402
      %420 = vmatpush.bf16.msra.mxu0 %v401
      %421 = vmatpush.bf16.msra.mxu0 %v400
      %422 = vmatpush.bf16.msra.mxu0 %v399
      %423 = vmatmul.bf16.gmra.mxu0 %v359
      %v424 = vpop.f32.mrf.mxu0
      %v425 = vadd.f32 0.0, %v424
      %v426 = vpop.f32.mrf.mxu0
      %v427 = vadd.f32 0.0, %v426
      %428 = vmatmul.bf16.gmra.mxu0 %v360
      %v429 = vpop.f32.mrf.mxu0
      %v430 = vadd.f32 0.0, %v429
      %v431 = vpop.f32.mrf.mxu0
      %v432 = vadd.f32 0.0, %v431
      %433 = vmatmul.bf16.gmra.mxu0 %v361
      %v434 = vpop.f32.mrf.mxu0
      %v435 = vadd.f32 0.0, %v434
      %v436 = vpop.f32.mrf.mxu0
      %v437 = vadd.f32 0.0, %v436
      %438 = vmatmul.bf16.gmra.mxu0 %v362
      %v439 = vpop.f32.mrf.mxu0
      %v440 = vadd.f32 0.0, %v439
      %v441 = vpop.f32.mrf.mxu0
      %v442 = vadd.f32 0.0, %v441
      %443 = vdwg.mxu0
      %v444 = vld [vmem:[%s3] sm:$0x1]
      %v446 = vperm.slane %v444, 0
      %v448 = vmul.f32 %v425, %v446
      %v449 = vmul.f32 %v427, %v446
      %v450 = vmul.f32 %v430, %v446
      %v451 = vmul.f32 %v432, %v446
      %v452 = vmul.f32 %v435, %v446
      %v453 = vmul.f32 %v437, %v446
      %v454 = vmul.f32 %v440, %v446
      %v455 = vmul.f32 %v442, %v446
      %v456 = vld [vmem:[%s4] sm:$0x1]
      %v458 = vperm.slane %v456, 0
      %v460 = vadd.f32 %v448, %v458
      %v461 = vadd.f32 %v449, %v458
      %v462 = vadd.f32 %v450, %v458
      %v463 = vadd.f32 %v451, %v458
      %v464 = vadd.f32 %v452, %v458
      %v465 = vadd.f32 %v453, %v458
      %v466 = vadd.f32 %v454, %v458
      %v467 = vadd.f32 %v455, %v458
      %vm468 = vcmp.ge.f32.partialorder %v460, 0.0
      %vm469 = vcmp.ge.f32.partialorder %v461, 0.0
      %vm470 = vcmp.ge.f32.partialorder %v462, 0.0
      %vm471 = vcmp.ge.f32.partialorder %v463, 0.0
      %vm472 = vcmp.ge.f32.partialorder %v464, 0.0
      %vm473 = vcmp.ge.f32.partialorder %v465, 0.0
      %vm474 = vcmp.ge.f32.partialorder %v466, 0.0
      %vm475 = vcmp.ge.f32.partialorder %v467, 0.0
      %v476 = vmul.f32 %v460, 0.1
      %v477 = vmul.f32 %v461, 0.1
      %v478 = vmul.f32 %v462, 0.1
      %v479 = vmul.f32 %v463, 0.1
      %v480 = vmul.f32 %v464, 0.1
      %v481 = vmul.f32 %v465, 0.1
      %v482 = vmul.f32 %v466, 0.1
      %v483 = vmul.f32 %v467, 0.1
      %v484 = vsel %vm468, %v460, %v476
      %v485 = vsel %vm469, %v461, %v477
      %v486 = vsel %vm470, %v462, %v478
      %v487 = vsel %vm471, %v463, %v479
      %v488 = vsel %vm472, %v464, %v480
      %v489 = vsel %vm473, %v465, %v481
      %v490 = vsel %vm474, %v466, %v482
      %v491 = vsel %vm475, %v467, %v483
      %v492 = vpack.c.bf16 %v484, %v484
      %v493 = vpack.c.bf16 %v485, %v485
      %v494 = vpack.c.bf16 %v486, %v486
      %v495 = vpack.c.bf16 %v487, %v487
      %v496 = vpack.c.bf16 %v488, %v488
      %v497 = vpack.c.bf16 %v489, %v489
      %v498 = vpack.c.bf16 %v490, %v490
      %v499 = vpack.c.bf16 %v491, %v491
      %500 = vst [vmem:[#allocation2] sm:$0xf] %v492
      %501 = vst [vmem:[#allocation2 + $0x4] sm:$0xf] %v493
      %502 = vst [vmem:[#allocation2 + $0x8] sm:$0xf] %v494
      %503 = vst [vmem:[#allocation2 + $0xc] sm:$0xf] %v495
      %504 = vst [vmem:[#allocation2 + $0x10] sm:$0xf] %v496
      %505 = vst [vmem:[#allocation2 + $0x14] sm:$0xf] %v497
      %506 = vst [vmem:[#allocation2 + $0x18] sm:$0xf] %v498
      %507 = vst [vmem:[#allocation2 + $0x1c] sm:$0xf] %v499
      %v508 = vld [vmem:[%s308 + $0x20] sm:$0xf]
      %v509 = vld [vmem:[%s308 + $0x24] sm:$0xf]
      %v510 = vld [vmem:[%s308 + $0x28] sm:$0xf]
      %v511 = vld [vmem:[%s308 + $0x2c] sm:$0xf]
      %v512 = vld [vmem:[%s308 + $0x30] sm:$0xf]
      %v513 = vld [vmem:[%s308 + $0x34] sm:$0xf]
      %v514 = vld [vmem:[%s308 + $0x38] sm:$0xf]
      %v515 = vld [vmem:[%s308 + $0x3c] sm:$0xf]
      %v516 = vld [vmem:[%s1] sm:$0xf]
      %v517 = vld [vmem:[%s1 + $0x4] sm:$0xf]
      %v518 = vld [vmem:[%s1 + $0x8] sm:$0xf]
      %v519 = vld [vmem:[%s1 + $0xc] sm:$0xf]
      %v520 = vld [vmem:[%s1 + $0x10] sm:$0xf]
      %v521 = vld [vmem:[%s1 + $0x14] sm:$0xf]
      %v522 = vld [vmem:[%s1 + $0x18] sm:$0xf]
      %v523 = vld [vmem:[%s1 + $0x1c] sm:$0xf]
      %v524 = vld [vmem:[%s1 + $0x20] sm:$0xf]
      %v525 = vld [vmem:[%s1 + $0x24] sm:$0xf]
      %v526 = vld [vmem:[%s1 + $0x28] sm:$0xf]
      %v527 = vld [vmem:[%s1 + $0x2c] sm:$0xf]
      %v528 = vld [vmem:[%s1 + $0x30] sm:$0xf]
      %v529 = vld [vmem:[%s1 + $0x34] sm:$0xf]
      %v530 = vld [vmem:[%s1 + $0x38] sm:$0xf]
      %v531 = vld [vmem:[%s1 + $0x3c] sm:$0xf]
      %v540 = vunpack.c.l.b16 %v508
      %v541 = vunpack.c.l.b16 %v509
      %v542 = vunpack.c.l.b16 %v510
      %v543 = vunpack.c.l.b16 %v511
      %v544 = vunpack.c.l.b16 %v512
      %v545 = vunpack.c.l.b16 %v513
      %v546 = vunpack.c.l.b16 %v514
      %v547 = vunpack.c.l.b16 %v515
      %v548 = vpack.c.b16 %v541, %v540
      %v549 = vpack.c.b16 %v543, %v542
      %v550 = vpack.c.b16 %v545, %v544
      %v551 = vpack.c.b16 %v547, %v546
      %v572 = vunpack.c.l.b16 %v516
      %v573 = vunpack.c.l.b16 %v517
      %v574 = vunpack.c.l.b16 %v518
      %v575 = vunpack.c.l.b16 %v519
      %v576 = vunpack.c.l.b16 %v520
      %v577 = vunpack.c.l.b16 %v521
      %v578 = vunpack.c.l.b16 %v522
      %v579 = vunpack.c.l.b16 %v523
      %v580 = vunpack.c.l.b16 %v524
      %v581 = vunpack.c.l.b16 %v525
      %v582 = vunpack.c.l.b16 %v526
      %v583 = vunpack.c.l.b16 %v527
      %v584 = vunpack.c.l.b16 %v528
      %v585 = vunpack.c.l.b16 %v529
      %v586 = vunpack.c.l.b16 %v530
      %v587 = vunpack.c.l.b16 %v531
      %v588 = vpack.c.b16 %v573, %v572
      %v589 = vpack.c.b16 %v575, %v574
      %v590 = vpack.c.b16 %v577, %v576
      %v591 = vpack.c.b16 %v579, %v578
      %v592 = vpack.c.b16 %v581, %v580
      %v593 = vpack.c.b16 %v583, %v582
      %v594 = vpack.c.b16 %v585, %v584
      %v595 = vpack.c.b16 %v587, %v586
      %604 = vmatpush.bf16.msra.mxu0 %v595
      %605 = vmatpush.bf16.msra.mxu0 %v594
      %606 = vmatpush.bf16.msra.mxu0 %v593
      %607 = vmatpush.bf16.msra.mxu0 %v592
      %608 = vmatpush.bf16.msra.mxu0 %v591
      %609 = vmatpush.bf16.msra.mxu0 %v590
      %610 = vmatpush.bf16.msra.mxu0 %v589
      %611 = vmatpush.bf16.msra.mxu0 %v588
      %612 = vmatmul.bf16.gmra.mxu0 %v548
      %v613 = vpop.f32.mrf.mxu0
      %v614 = vadd.f32 0.0, %v613
      %v615 = vpop.f32.mrf.mxu0
      %v616 = vadd.f32 0.0, %v615
      %617 = vmatmul.bf16.gmra.mxu0 %v549
      %v618 = vpop.f32.mrf.mxu0
      %v619 = vadd.f32 0.0, %v618
      %v620 = vpop.f32.mrf.mxu0
      %v621 = vadd.f32 0.0, %v620
      %622 = vmatmul.bf16.gmra.mxu0 %v550
      %v623 = vpop.f32.mrf.mxu0
      %v624 = vadd.f32 0.0, %v623
      %v625 = vpop.f32.mrf.mxu0
      %v626 = vadd.f32 0.0, %v625
      %627 = vmatmul.bf16.gmra.mxu0 %v551
      %v628 = vpop.f32.mrf.mxu0
      %v629 = vadd.f32 0.0, %v628
      %v630 = vpop.f32.mrf.mxu0
      %v631 = vadd.f32 0.0, %v630
      %632 = vdwg.mxu0
      %v633 = vld [vmem:[%s3] sm:$0x1]
      %v635 = vperm.slane %v633, 0
      %v637 = vmul.f32 %v614, %v635
      %v638 = vmul.f32 %v616, %v635
      %v639 = vmul.f32 %v619, %v635
      %v640 = vmul.f32 %v621, %v635
      %v641 = vmul.f32 %v624, %v635
      %v642 = vmul.f32 %v626, %v635
      %v643 = vmul.f32 %v629, %v635
      %v644 = vmul.f32 %v631, %v635
      %v645 = vld [vmem:[%s4] sm:$0x1]
      %v647 = vperm.slane %v645, 0
      %v649 = vadd.f32 %v637, %v647
      %v650 = vadd.f32 %v638, %v647
      %v651 = vadd.f32 %v639, %v647
      %v652 = vadd.f32 %v640, %v647
      %v653 = vadd.f32 %v641, %v647
      %v654 = vadd.f32 %v642, %v647
      %v655 = vadd.f32 %v643, %v647
      %v656 = vadd.f32 %v644, %v647
      %vm657 = vcmp.ge.f32.partialorder %v649, 0.0
      %vm658 = vcmp.ge.f32.partialorder %v650, 0.0
      %vm659 = vcmp.ge.f32.partialorder %v651, 0.0
      %vm660 = vcmp.ge.f32.partialorder %v652, 0.0
      %vm661 = vcmp.ge.f32.partialorder %v653, 0.0
      %vm662 = vcmp.ge.f32.partialorder %v654, 0.0
      %vm663 = vcmp.ge.f32.partialorder %v655, 0.0
      %vm664 = vcmp.ge.f32.partialorder %v656, 0.0
      %v665 = vmul.f32 %v649, 0.1
      %v666 = vmul.f32 %v650, 0.1
      %v667 = vmul.f32 %v651, 0.1
      %v668 = vmul.f32 %v652, 0.1
      %v669 = vmul.f32 %v653, 0.1
      %v670 = vmul.f32 %v654, 0.1
      %v671 = vmul.f32 %v655, 0.1
      %v672 = vmul.f32 %v656, 0.1
      %v673 = vsel %vm657, %v649, %v665
      %v674 = vsel %vm658, %v650, %v666
      %v675 = vsel %vm659, %v651, %v667
      %v676 = vsel %vm660, %v652, %v668
      %v677 = vsel %vm661, %v653, %v669
      %v678 = vsel %vm662, %v654, %v670
      %v679 = vsel %vm663, %v655, %v671
      %v680 = vsel %vm664, %v656, %v672
      %v681 = vpack.c.bf16 %v673, %v673
      %v682 = vpack.c.bf16 %v674, %v674
      %v683 = vpack.c.bf16 %v675, %v675
      %v684 = vpack.c.bf16 %v676, %v676
      %v685 = vpack.c.bf16 %v677, %v677
      %v686 = vpack.c.bf16 %v678, %v678
      %v687 = vpack.c.bf16 %v679, %v679
      %v688 = vpack.c.bf16 %v680, %v680
      %689 = vst [vmem:[#allocation2 + $0x20] sm:$0xf] %v681
      %690 = vst [vmem:[#allocation2 + $0x24] sm:$0xf] %v682
      %691 = vst [vmem:[#allocation2 + $0x28] sm:$0xf] %v683
      %692 = vst [vmem:[#allocation2 + $0x2c] sm:$0xf] %v684
      %693 = vst [vmem:[#allocation2 + $0x30] sm:$0xf] %v685
      %694 = vst [vmem:[#allocation2 + $0x34] sm:$0xf] %v686
      %695 = vst [vmem:[#allocation2 + $0x38] sm:$0xf] %v687
      %696 = vst [vmem:[#allocation2 + $0x3c] sm:$0xf] %v688
      %v697 = vld [vmem:[%s308 + $0x40] sm:$0xf]
      %v698 = vld [vmem:[%s308 + $0x44] sm:$0xf]
      %v699 = vld [vmem:[%s308 + $0x48] sm:$0xf]
      %v700 = vld [vmem:[%s308 + $0x4c] sm:$0xf]
      %v701 = vld [vmem:[%s308 + $0x50] sm:$0xf]
      %v702 = vld [vmem:[%s308 + $0x54] sm:$0xf]
      %v703 = vld [vmem:[%s308 + $0x58] sm:$0xf]
      %v704 = vld [vmem:[%s308 + $0x5c] sm:$0xf]
      %v705 = vld [vmem:[%s1] sm:$0xf]
      %v706 = vld [vmem:[%s1 + $0x4] sm:$0xf]
      %v707 = vld [vmem:[%s1 + $0x8] sm:$0xf]
      %v708 = vld [vmem:[%s1 + $0xc] sm:$0xf]
      %v709 = vld [vmem:[%s1 + $0x10] sm:$0xf]
      %v710 = vld [vmem:[%s1 + $0x14] sm:$0xf]
      %v711 = vld [vmem:[%s1 + $0x18] sm:$0xf]
      %v712 = vld [vmem:[%s1 + $0x1c] sm:$0xf]
      %v713 = vld [vmem:[%s1 + $0x20] sm:$0xf]
      %v714 = vld [vmem:[%s1 + $0x24] sm:$0xf]
      %v715 = vld [vmem:[%s1 + $0x28] sm:$0xf]
      %v716 = vld [vmem:[%s1 + $0x2c] sm:$0xf]
      %v717 = vld [vmem:[%s1 + $0x30] sm:$0xf]
      %v718 = vld [vmem:[%s1 + $0x34] sm:$0xf]
      %v719 = vld [vmem:[%s1 + $0x38] sm:$0xf]
      %v720 = vld [vmem:[%s1 + $0x3c] sm:$0xf]
      %v729 = vunpack.c.l.b16 %v697
      %v730 = vunpack.c.l.b16 %v698
      %v731 = vunpack.c.l.b16 %v699
      %v732 = vunpack.c.l.b16 %v700
      %v733 = vunpack.c.l.b16 %v701
      %v734 = vunpack.c.l.b16 %v702
      %v735 = vunpack.c.l.b16 %v703
      %v736 = vunpack.c.l.b16 %v704
      %v737 = vpack.c.b16 %v730, %v729
      %v738 = vpack.c.b16 %v732, %v731
      %v739 = vpack.c.b16 %v734, %v733
      %v740 = vpack.c.b16 %v736, %v735
      %v761 = vunpack.c.l.b16 %v705
      %v762 = vunpack.c.l.b16 %v706
      %v763 = vunpack.c.l.b16 %v707
      %v764 = vunpack.c.l.b16 %v708
      %v765 = vunpack.c.l.b16 %v709
      %v766 = vunpack.c.l.b16 %v710
      %v767 = vunpack.c.l.b16 %v711
      %v768 = vunpack.c.l.b16 %v712
      %v769 = vunpack.c.l.b16 %v713
      %v770 = vunpack.c.l.b16 %v714
      %v771 = vunpack.c.l.b16 %v715
      %v772 = vunpack.c.l.b16 %v716
      %v773 = vunpack.c.l.b16 %v717
      %v774 = vunpack.c.l.b16 %v718
      %v775 = vunpack.c.l.b16 %v719
      %v776 = vunpack.c.l.b16 %v720
      %v777 = vpack.c.b16 %v762, %v761
      %v778 = vpack.c.b16 %v764, %v763
      %v779 = vpack.c.b16 %v766, %v765
      %v780 = vpack.c.b16 %v768, %v767
      %v781 = vpack.c.b16 %v770, %v769
      %v782 = vpack.c.b16 %v772, %v771
      %v783 = vpack.c.b16 %v774, %v773
      %v784 = vpack.c.b16 %v776, %v775
      %793 = vmatpush.bf16.msra.mxu0 %v784
      %794 = vmatpush.bf16.msra.mxu0 %v783
      %795 = vmatpush.bf16.msra.mxu0 %v782
      %796 = vmatpush.bf16.msra.mxu0 %v781
      %797 = vmatpush.bf16.msra.mxu0 %v780
      %798 = vmatpush.bf16.msra.mxu0 %v779
      %799 = vmatpush.bf16.msra.mxu0 %v778
      %800 = vmatpush.bf16.msra.mxu0 %v777
      %801 = vmatmul.bf16.gmra.mxu0 %v737
      %v802 = vpop.f32.mrf.mxu0
      %v803 = vadd.f32 0.0, %v802
      %v804 = vpop.f32.mrf.mxu0
      %v805 = vadd.f32 0.0, %v804
      %806 = vmatmul.bf16.gmra.mxu0 %v738
      %v807 = vpop.f32.mrf.mxu0
      %v808 = vadd.f32 0.0, %v807
      %v809 = vpop.f32.mrf.mxu0
      %v810 = vadd.f32 0.0, %v809
      %811 = vmatmul.bf16.gmra.mxu0 %v739
      %v812 = vpop.f32.mrf.mxu0
      %v813 = vadd.f32 0.0, %v812
      %v814 = vpop.f32.mrf.mxu0
      %v815 = vadd.f32 0.0, %v814
      %816 = vmatmul.bf16.gmra.mxu0 %v740
      %v817 = vpop.f32.mrf.mxu0
      %v818 = vadd.f32 0.0, %v817
      %v819 = vpop.f32.mrf.mxu0
      %v820 = vadd.f32 0.0, %v819
      %821 = vdwg.mxu0
      %v822 = vld [vmem:[%s3] sm:$0x1]
      %v824 = vperm.slane %v822, 0
      %v826 = vmul.f32 %v803, %v824
      %v827 = vmul.f32 %v805, %v824
      %v828 = vmul.f32 %v808, %v824
      %v829 = vmul.f32 %v810, %v824
      %v830 = vmul.f32 %v813, %v824
      %v831 = vmul.f32 %v815, %v824
      %v832 = vmul.f32 %v818, %v824
      %v833 = vmul.f32 %v820, %v824
      %v834 = vld [vmem:[%s4] sm:$0x1]
      %v836 = vperm.slane %v834, 0
      %v838 = vadd.f32 %v826, %v836
      %v839 = vadd.f32 %v827, %v836
      %v840 = vadd.f32 %v828, %v836
      %v841 = vadd.f32 %v829, %v836
      %v842 = vadd.f32 %v830, %v836
      %v843 = vadd.f32 %v831, %v836
      %v844 = vadd.f32 %v832, %v836
      %v845 = vadd.f32 %v833, %v836
      %vm846 = vcmp.ge.f32.partialorder %v838, 0.0
      %vm847 = vcmp.ge.f32.partialorder %v839, 0.0
      %vm848 = vcmp.ge.f32.partialorder %v840, 0.0
      %vm849 = vcmp.ge.f32.partialorder %v841, 0.0
      %vm850 = vcmp.ge.f32.partialorder %v842, 0.0
      %vm851 = vcmp.ge.f32.partialorder %v843, 0.0
      %vm852 = vcmp.ge.f32.partialorder %v844, 0.0
      %vm853 = vcmp.ge.f32.partialorder %v845, 0.0
      %v854 = vmul.f32 %v838, 0.1
      %v855 = vmul.f32 %v839, 0.1
      %v856 = vmul.f32 %v840, 0.1
      %v857 = vmul.f32 %v841, 0.1
      %v858 = vmul.f32 %v842, 0.1
      %v859 = vmul.f32 %v843, 0.1
      %v860 = vmul.f32 %v844, 0.1
      %v861 = vmul.f32 %v845, 0.1
      %v862 = vsel %vm846, %v838, %v854
      %v863 = vsel %vm847, %v839, %v855
      %v864 = vsel %vm848, %v840, %v856
      %v865 = vsel %vm849, %v841, %v857
      %v866 = vsel %vm850, %v842, %v858
      %v867 = vsel %vm851, %v843, %v859
      %v868 = vsel %vm852, %v844, %v860
      %v869 = vsel %vm853, %v845, %v861
      %v870 = vpack.c.bf16 %v862, %v862
      %v871 = vpack.c.bf16 %v863, %v863
      %v872 = vpack.c.bf16 %v864, %v864
      %v873 = vpack.c.bf16 %v865, %v865
      %v874 = vpack.c.bf16 %v866, %v866
      %v875 = vpack.c.bf16 %v867, %v867
      %v876 = vpack.c.bf16 %v868, %v868
      %v877 = vpack.c.bf16 %v869, %v869
      %878 = vst [vmem:[#allocation2 + $0x40] sm:$0xf] %v870
      %879 = vst [vmem:[#allocation2 + $0x44] sm:$0xf] %v871
      %880 = vst [vmem:[#allocation2 + $0x48] sm:$0xf] %v872
      %881 = vst [vmem:[#allocation2 + $0x4c] sm:$0xf] %v873
      %882 = vst [vmem:[#allocation2 + $0x50] sm:$0xf] %v874
      %883 = vst [vmem:[#allocation2 + $0x54] sm:$0xf] %v875
      %884 = vst [vmem:[#allocation2 + $0x58] sm:$0xf] %v876
      %885 = vst [vmem:[#allocation2 + $0x5c] sm:$0xf] %v877
      %v886 = vld [vmem:[%s308 + $0x60] sm:$0xf]
      %v887 = vld [vmem:[%s308 + $0x64] sm:$0xf]
      %v888 = vld [vmem:[%s308 + $0x68] sm:$0xf]
      %v889 = vld [vmem:[%s308 + $0x6c] sm:$0xf]
      %v890 = vld [vmem:[%s308 + $0x70] sm:$0xf]
      %v891 = vld [vmem:[%s308 + $0x74] sm:$0xf]
      %v892 = vld [vmem:[%s308 + $0x78] sm:$0xf]
      %v893 = vld [vmem:[%s308 + $0x7c] sm:$0xf]
      %v894 = vld [vmem:[%s1] sm:$0xf]
      %v895 = vld [vmem:[%s1 + $0x4] sm:$0xf]
      %v896 = vld [vmem:[%s1 + $0x8] sm:$0xf]
      %v897 = vld [vmem:[%s1 + $0xc] sm:$0xf]
      %v898 = vld [vmem:[%s1 + $0x10] sm:$0xf]
      %v899 = vld [vmem:[%s1 + $0x14] sm:$0xf]
      %v900 = vld [vmem:[%s1 + $0x18] sm:$0xf]
      %v901 = vld [vmem:[%s1 + $0x1c] sm:$0xf]
      %v902 = vld [vmem:[%s1 + $0x20] sm:$0xf]
      %v903 = vld [vmem:[%s1 + $0x24] sm:$0xf]
      %v904 = vld [vmem:[%s1 + $0x28] sm:$0xf]
      %v905 = vld [vmem:[%s1 + $0x2c] sm:$0xf]
      %v906 = vld [vmem:[%s1 + $0x30] sm:$0xf]
      %v907 = vld [vmem:[%s1 + $0x34] sm:$0xf]
      %v908 = vld [vmem:[%s1 + $0x38] sm:$0xf]
      %v909 = vld [vmem:[%s1 + $0x3c] sm:$0xf]
      %v918 = vunpack.c.l.b16 %v886
      %v919 = vunpack.c.l.b16 %v887
      %v920 = vunpack.c.l.b16 %v888
      %v921 = vunpack.c.l.b16 %v889
      %v922 = vunpack.c.l.b16 %v890
      %v923 = vunpack.c.l.b16 %v891
      %v924 = vunpack.c.l.b16 %v892
      %v925 = vunpack.c.l.b16 %v893
      %v926 = vpack.c.b16 %v919, %v918
      %v927 = vpack.c.b16 %v921, %v920
      %v928 = vpack.c.b16 %v923, %v922
      %v929 = vpack.c.b16 %v925, %v924
      %v950 = vunpack.c.l.b16 %v894
      %v951 = vunpack.c.l.b16 %v895
      %v952 = vunpack.c.l.b16 %v896
      %v953 = vunpack.c.l.b16 %v897
      %v954 = vunpack.c.l.b16 %v898
      %v955 = vunpack.c.l.b16 %v899
      %v956 = vunpack.c.l.b16 %v900
      %v957 = vunpack.c.l.b16 %v901
      %v958 = vunpack.c.l.b16 %v902
      %v959 = vunpack.c.l.b16 %v903
      %v960 = vunpack.c.l.b16 %v904
      %v961 = vunpack.c.l.b16 %v905
      %v962 = vunpack.c.l.b16 %v906
      %v963 = vunpack.c.l.b16 %v907
      %v964 = vunpack.c.l.b16 %v908
      %v965 = vunpack.c.l.b16 %v909
      %v966 = vpack.c.b16 %v951, %v950
      %v967 = vpack.c.b16 %v953, %v952
      %v968 = vpack.c.b16 %v955, %v954
      %v969 = vpack.c.b16 %v957, %v956
      %v970 = vpack.c.b16 %v959, %v958
      %v971 = vpack.c.b16 %v961, %v960
      %v972 = vpack.c.b16 %v963, %v962
      %v973 = vpack.c.b16 %v965, %v964
      %982 = vmatpush.bf16.msra.mxu0 %v973
      %983 = vmatpush.bf16.msra.mxu0 %v972
      %984 = vmatpush.bf16.msra.mxu0 %v971
      %985 = vmatpush.bf16.msra.mxu0 %v970
      %986 = vmatpush.bf16.msra.mxu0 %v969
      %987 = vmatpush.bf16.msra.mxu0 %v968
      %988 = vmatpush.bf16.msra.mxu0 %v967
      %989 = vmatpush.bf16.msra.mxu0 %v966
      %990 = vmatmul.bf16.gmra.mxu0 %v926
      %v991 = vpop.f32.mrf.mxu0
      %v992 = vadd.f32 0.0, %v991
      %v993 = vpop.f32.mrf.mxu0
      %v994 = vadd.f32 0.0, %v993
      %995 = vmatmul.bf16.gmra.mxu0 %v927
      %v996 = vpop.f32.mrf.mxu0
      %v997 = vadd.f32 0.0, %v996
      %v998 = vpop.f32.mrf.mxu0
      %v999 = vadd.f32 0.0, %v998
      %1000 = vmatmul.bf16.gmra.mxu0 %v928
      %v1001 = vpop.f32.mrf.mxu0
      %v1002 = vadd.f32 0.0, %v1001
      %v1003 = vpop.f32.mrf.mxu0
      %v1004 = vadd.f32 0.0, %v1003
      %1005 = vmatmul.bf16.gmra.mxu0 %v929
      %v1006 = vpop.f32.mrf.mxu0
      %v1007 = vadd.f32 0.0, %v1006
      %v1008 = vpop.f32.mrf.mxu0
      %v1009 = vadd.f32 0.0, %v1008
      %1010 = vdwg.mxu0
      %v1011 = vld [vmem:[%s3] sm:$0x1]
      %v1013 = vperm.slane %v1011, 0
      %v1015 = vmul.f32 %v992, %v1013
      %v1016 = vmul.f32 %v994, %v1013
      %v1017 = vmul.f32 %v997, %v1013
      %v1018 = vmul.f32 %v999, %v1013
      %v1019 = vmul.f32 %v1002, %v1013
      %v1020 = vmul.f32 %v1004, %v1013
      %v1021 = vmul.f32 %v1007, %v1013
      %v1022 = vmul.f32 %v1009, %v1013
      %v1023 = vld [vmem:[%s4] sm:$0x1]
      %v1025 = vperm.slane %v1023, 0
      %v1027 = vadd.f32 %v1015, %v1025
      %v1028 = vadd.f32 %v1016, %v1025
      %v1029 = vadd.f32 %v1017, %v1025
      %v1030 = vadd.f32 %v1018, %v1025
      %v1031 = vadd.f32 %v1019, %v1025
      %v1032 = vadd.f32 %v1020, %v1025
      %v1033 = vadd.f32 %v1021, %v1025
      %v1034 = vadd.f32 %v1022, %v1025
      %vm1035 = vcmp.ge.f32.partialorder %v1027, 0.0
      %vm1036 = vcmp.ge.f32.partialorder %v1028, 0.0
      %vm1037 = vcmp.ge.f32.partialorder %v1029, 0.0
      %vm1038 = vcmp.ge.f32.partialorder %v1030, 0.0
      %vm1039 = vcmp.ge.f32.partialorder %v1031, 0.0
      %vm1040 = vcmp.ge.f32.partialorder %v1032, 0.0
      %vm1041 = vcmp.ge.f32.partialorder %v1033, 0.0
      %vm1042 = vcmp.ge.f32.partialorder %v1034, 0.0
      %v1043 = vmul.f32 %v1027, 0.1
      %v1044 = vmul.f32 %v1028, 0.1
      %v1045 = vmul.f32 %v1029, 0.1
      %v1046 = vmul.f32 %v1030, 0.1
      %v1047 = vmul.f32 %v1031, 0.1
      %v1048 = vmul.f32 %v1032, 0.1
      %v1049 = vmul.f32 %v1033, 0.1
      %v1050 = vmul.f32 %v1034, 0.1
      %v1051 = vsel %vm1035, %v1027, %v1043
      %v1052 = vsel %vm1036, %v1028, %v1044
      %v1053 = vsel %vm1037, %v1029, %v1045
      %v1054 = vsel %vm1038, %v1030, %v1046
      %v1055 = vsel %vm1039, %v1031, %v1047
      %v1056 = vsel %vm1040, %v1032, %v1048
      %v1057 = vsel %vm1041, %v1033, %v1049
      %v1058 = vsel %vm1042, %v1034, %v1050
      %v1059 = vpack.c.bf16 %v1051, %v1051
      %v1060 = vpack.c.bf16 %v1052, %v1052
      %v1061 = vpack.c.bf16 %v1053, %v1053
      %v1062 = vpack.c.bf16 %v1054, %v1054
      %v1063 = vpack.c.bf16 %v1055, %v1055
      %v1064 = vpack.c.bf16 %v1056, %v1056
      %v1065 = vpack.c.bf16 %v1057, %v1057
      %v1066 = vpack.c.bf16 %v1058, %v1058
      %1067 = vst [vmem:[#allocation2 + $0x60] sm:$0xf] %v1059
      %1068 = vst [vmem:[#allocation2 + $0x64] sm:$0xf] %v1060
      %1069 = vst [vmem:[#allocation2 + $0x68] sm:$0xf] %v1061
      %1070 = vst [vmem:[#allocation2 + $0x6c] sm:$0xf] %v1062
      %1071 = vst [vmem:[#allocation2 + $0x70] sm:$0xf] %v1063
      %1072 = vst [vmem:[#allocation2 + $0x74] sm:$0xf] %v1064
      %1073 = vst [vmem:[#allocation2 + $0x78] sm:$0xf] %v1065
      %1074 = vst [vmem:[#allocation2 + $0x7c] sm:$0xf] %v1066
      %v1075 = vld [vmem:[%s308 + $0x80] sm:$0xf]
      %v1076 = vld [vmem:[%s308 + $0x84] sm:$0xf]
      %v1077 = vld [vmem:[%s308 + $0x88] sm:$0xf]
      %v1078 = vld [vmem:[%s308 + $0x8c] sm:$0xf]
      %v1079 = vld [vmem:[%s308 + $0x90] sm:$0xf]
      %v1080 = vld [vmem:[%s308 + $0x94] sm:$0xf]
      %v1081 = vld [vmem:[%s308 + $0x98] sm:$0xf]
      %v1082 = vld [vmem:[%s308 + $0x9c] sm:$0xf]
      %v1083 = vld [vmem:[%s1] sm:$0xf]
      %v1084 = vld [vmem:[%s1 + $0x4] sm:$0xf]
      %v1085 = vld [vmem:[%s1 + $0x8] sm:$0xf]
      %v1086 = vld [vmem:[%s1 + $0xc] sm:$0xf]
      %v1087 = vld [vmem:[%s1 + $0x10] sm:$0xf]
      %v1088 = vld [vmem:[%s1 + $0x14] sm:$0xf]
      %v1089 = vld [vmem:[%s1 + $0x18] sm:$0xf]
      %v1090 = vld [vmem:[%s1 + $0x1c] sm:$0xf]
      %v1091 = vld [vmem:[%s1 + $0x20] sm:$0xf]
      %v1092 = vld [vmem:[%s1 + $0x24] sm:$0xf]
      %v1093 = vld [vmem:[%s1 + $0x28] sm:$0xf]
      %v1094 = vld [vmem:[%s1 + $0x2c] sm:$0xf]
      %v1095 = vld [vmem:[%s1 + $0x30] sm:$0xf]
      %v1096 = vld [vmem:[%s1 + $0x34] sm:$0xf]
      %v1097 = vld [vmem:[%s1 + $0x38] sm:$0xf]
      %v1098 = vld [vmem:[%s1 + $0x3c] sm:$0xf]
      %v1107 = vunpack.c.l.b16 %v1075
      %v1108 = vunpack.c.l.b16 %v1076
      %v1109 = vunpack.c.l.b16 %v1077
      %v1110 = vunpack.c.l.b16 %v1078
      %v1111 = vunpack.c.l.b16 %v1079
      %v1112 = vunpack.c.l.b16 %v1080
      %v1113 = vunpack.c.l.b16 %v1081
      %v1114 = vunpack.c.l.b16 %v1082
      %v1115 = vpack.c.b16 %v1108, %v1107
      %v1116 = vpack.c.b16 %v1110, %v1109
      %v1117 = vpack.c.b16 %v1112, %v1111
      %v1118 = vpack.c.b16 %v1114, %v1113
      %v1139 = vunpack.c.l.b16 %v1083
      %v1140 = vunpack.c.l.b16 %v1084
      %v1141 = vunpack.c.l.b16 %v1085
      %v1142 = vunpack.c.l.b16 %v1086
      %v1143 = vunpack.c.l.b16 %v1087
      %v1144 = vunpack.c.l.b16 %v1088
      %v1145 = vunpack.c.l.b16 %v1089
      %v1146 = vunpack.c.l.b16 %v1090
      %v1147 = vunpack.c.l.b16 %v1091
      %v1148 = vunpack.c.l.b16 %v1092
      %v1149 = vunpack.c.l.b16 %v1093
      %v1150 = vunpack.c.l.b16 %v1094
      %v1151 = vunpack.c.l.b16 %v1095
      %v1152 = vunpack.c.l.b16 %v1096
      %v1153 = vunpack.c.l.b16 %v1097
      %v1154 = vunpack.c.l.b16 %v1098
      %v1155 = vpack.c.b16 %v1140, %v1139
      %v1156 = vpack.c.b16 %v1142, %v1141
      %v1157 = vpack.c.b16 %v1144, %v1143
      %v1158 = vpack.c.b16 %v1146, %v1145
      %v1159 = vpack.c.b16 %v1148, %v1147
      %v1160 = vpack.c.b16 %v1150, %v1149
      %v1161 = vpack.c.b16 %v1152, %v1151
      %v1162 = vpack.c.b16 %v1154, %v1153
      %1171 = vmatpush.bf16.msra.mxu0 %v1162
      %1172 = vmatpush.bf16.msra.mxu0 %v1161
      %1173 = vmatpush.bf16.msra.mxu0 %v1160
      %1174 = vmatpush.bf16.msra.mxu0 %v1159
      %1175 = vmatpush.bf16.msra.mxu0 %v1158
      %1176 = vmatpush.bf16.msra.mxu0 %v1157
      %1177 = vmatpush.bf16.msra.mxu0 %v1156
      %1178 = vmatpush.bf16.msra.mxu0 %v1155
      %1179 = vmatmul.bf16.gmra.mxu0 %v1115
      %v1180 = vpop.f32.mrf.mxu0
      %v1181 = vadd.f32 0.0, %v1180
      %v1182 = vpop.f32.mrf.mxu0
      %v1183 = vadd.f32 0.0, %v1182
      %1184 = vmatmul.bf16.gmra.mxu0 %v1116
      %v1185 = vpop.f32.mrf.mxu0
      %v1186 = vadd.f32 0.0, %v1185
      %v1187 = vpop.f32.mrf.mxu0
      %v1188 = vadd.f32 0.0, %v1187
      %1189 = vmatmul.bf16.gmra.mxu0 %v1117
      %v1190 = vpop.f32.mrf.mxu0
      %v1191 = vadd.f32 0.0, %v1190
      %v1192 = vpop.f32.mrf.mxu0
      %v1193 = vadd.f32 0.0, %v1192
      %1194 = vmatmul.bf16.gmra.mxu0 %v1118
      %v1195 = vpop.f32.mrf.mxu0
      %v1196 = vadd.f32 0.0, %v1195
      %v1197 = vpop.f32.mrf.mxu0
      %v1198 = vadd.f32 0.0, %v1197
      %1199 = vdwg.mxu0
      %v1200 = vld [vmem:[%s3] sm:$0x1]
      %v1202 = vperm.slane %v1200, 0
      %v1204 = vmul.f32 %v1181, %v1202
      %v1205 = vmul.f32 %v1183, %v1202
      %v1206 = vmul.f32 %v1186, %v1202
      %v1207 = vmul.f32 %v1188, %v1202
      %v1208 = vmul.f32 %v1191, %v1202
      %v1209 = vmul.f32 %v1193, %v1202
      %v1210 = vmul.f32 %v1196, %v1202
      %v1211 = vmul.f32 %v1198, %v1202
      %v1212 = vld [vmem:[%s4] sm:$0x1]
      %v1214 = vperm.slane %v1212, 0
      %v1216 = vadd.f32 %v1204, %v1214
      %v1217 = vadd.f32 %v1205, %v1214
      %v1218 = vadd.f32 %v1206, %v1214
      %v1219 = vadd.f32 %v1207, %v1214
      %v1220 = vadd.f32 %v1208, %v1214
      %v1221 = vadd.f32 %v1209, %v1214
      %v1222 = vadd.f32 %v1210, %v1214
      %v1223 = vadd.f32 %v1211, %v1214
      %vm1224 = vcmp.ge.f32.partialorder %v1216, 0.0
      %vm1225 = vcmp.ge.f32.partialorder %v1217, 0.0
      %vm1226 = vcmp.ge.f32.partialorder %v1218, 0.0
      %vm1227 = vcmp.ge.f32.partialorder %v1219, 0.0
      %vm1228 = vcmp.ge.f32.partialorder %v1220, 0.0
      %vm1229 = vcmp.ge.f32.partialorder %v1221, 0.0
      %vm1230 = vcmp.ge.f32.partialorder %v1222, 0.0
      %vm1231 = vcmp.ge.f32.partialorder %v1223, 0.0
      %v1232 = vmul.f32 %v1216, 0.1
      %v1233 = vmul.f32 %v1217, 0.1
      %v1234 = vmul.f32 %v1218, 0.1
      %v1235 = vmul.f32 %v1219, 0.1
      %v1236 = vmul.f32 %v1220, 0.1
      %v1237 = vmul.f32 %v1221, 0.1
      %v1238 = vmul.f32 %v1222, 0.1
      %v1239 = vmul.f32 %v1223, 0.1
      %v1240 = vsel %vm1224, %v1216, %v1232
      %v1241 = vsel %vm1225, %v1217, %v1233
      %v1242 = vsel %vm1226, %v1218, %v1234
      %v1243 = vsel %vm1227, %v1219, %v1235
      %v1244 = vsel %vm1228, %v1220, %v1236
      %v1245 = vsel %vm1229, %v1221, %v1237
      %v1246 = vsel %vm1230, %v1222, %v1238
      %v1247 = vsel %vm1231, %v1223, %v1239
      %v1248 = vpack.c.bf16 %v1240, %v1240
      %v1249 = vpack.c.bf16 %v1241, %v1241
      %v1250 = vpack.c.bf16 %v1242, %v1242
      %v1251 = vpack.c.bf16 %v1243, %v1243
      %v1252 = vpack.c.bf16 %v1244, %v1244
      %v1253 = vpack.c.bf16 %v1245, %v1245
      %v1254 = vpack.c.bf16 %v1246, %v1246
      %v1255 = vpack.c.bf16 %v1247, %v1247
      %1256 = vst [vmem:[#allocation2 + $0x80] sm:$0xf] %v1248
      %1257 = vst [vmem:[#allocation2 + $0x84] sm:$0xf] %v1249
      %1258 = vst [vmem:[#allocation2 + $0x88] sm:$0xf] %v1250
      %1259 = vst [vmem:[#allocation2 + $0x8c] sm:$0xf] %v1251
      %1260 = vst [vmem:[#allocation2 + $0x90] sm:$0xf] %v1252
      %1261 = vst [vmem:[#allocation2 + $0x94] sm:$0xf] %v1253
      %1262 = vst [vmem:[#allocation2 + $0x98] sm:$0xf] %v1254
      %1263 = vst [vmem:[#allocation2 + $0x9c] sm:$0xf] %v1255
      %v1264 = vld [vmem:[%s308 + $0xa0] sm:$0xf]
      %v1265 = vld [vmem:[%s1] sm:$0xf]
      %v1266 = vld [vmem:[%s1 + $0x4] sm:$0xf]
      %v1267 = vld [vmem:[%s1 + $0x8] sm:$0xf]
      %v1268 = vld [vmem:[%s1 + $0xc] sm:$0xf]
      %v1269 = vld [vmem:[%s1 + $0x10] sm:$0xf]
      %v1270 = vld [vmem:[%s1 + $0x14] sm:$0xf]
      %v1271 = vld [vmem:[%s1 + $0x18] sm:$0xf]
      %v1272 = vld [vmem:[%s1 + $0x1c] sm:$0xf]
      %v1273 = vld [vmem:[%s1 + $0x20] sm:$0xf]
      %v1274 = vld [vmem:[%s1 + $0x24] sm:$0xf]
      %v1275 = vld [vmem:[%s1 + $0x28] sm:$0xf]
      %v1276 = vld [vmem:[%s1 + $0x2c] sm:$0xf]
      %v1277 = vld [vmem:[%s1 + $0x30] sm:$0xf]
      %v1278 = vld [vmem:[%s1 + $0x34] sm:$0xf]
      %v1279 = vld [vmem:[%s1 + $0x38] sm:$0xf]
      %v1280 = vld [vmem:[%s1 + $0x3c] sm:$0xf]
      %v1297 = vunpack.c.l.b16 %v1265
      %v1298 = vunpack.c.l.b16 %v1266
      %v1299 = vunpack.c.l.b16 %v1267
      %v1300 = vunpack.c.l.b16 %v1268
      %v1301 = vunpack.c.l.b16 %v1269
      %v1302 = vunpack.c.l.b16 %v1270
      %v1303 = vunpack.c.l.b16 %v1271
      %v1304 = vunpack.c.l.b16 %v1272
      %v1305 = vunpack.c.l.b16 %v1273
      %v1306 = vunpack.c.l.b16 %v1274
      %v1307 = vunpack.c.l.b16 %v1275
      %v1308 = vunpack.c.l.b16 %v1276
      %v1309 = vunpack.c.l.b16 %v1277
      %v1310 = vunpack.c.l.b16 %v1278
      %v1311 = vunpack.c.l.b16 %v1279
      %v1312 = vunpack.c.l.b16 %v1280
      %v1313 = vpack.c.b16 %v1298, %v1297
      %v1314 = vpack.c.b16 %v1300, %v1299
      %v1315 = vpack.c.b16 %v1302, %v1301
      %v1316 = vpack.c.b16 %v1304, %v1303
      %v1317 = vpack.c.b16 %v1306, %v1305
      %v1318 = vpack.c.b16 %v1308, %v1307
      %v1319 = vpack.c.b16 %v1310, %v1309
      %v1320 = vpack.c.b16 %v1312, %v1311
      %1329 = vmatpush.bf16.msra.mxu0 %v1320
      %1330 = vmatpush.bf16.msra.mxu0 %v1319
      %1331 = vmatpush.bf16.msra.mxu0 %v1318
      %1332 = vmatpush.bf16.msra.mxu0 %v1317
      %1333 = vmatpush.bf16.msra.mxu0 %v1316
      %1334 = vmatpush.bf16.msra.mxu0 %v1315
      %1335 = vmatpush.bf16.msra.mxu0 %v1314
      %1336 = vmatpush.bf16.msra.mxu0 %v1313
      %1337 = vmatmul.bf16.gmra.mxu0 %v1264
      %v1338 = vpop.f32.mrf.mxu0
      %v1339 = vadd.f32 0.0, %v1338
      %v1340 = vpop.f32.mrf.mxu0
      %1341 = vdwg.mxu0
      %v1342 = vld [vmem:[%s3] sm:$0x1]
      %v1344 = vperm.slane %v1342, 0
      %v1346 = vmul.f32 %v1339, %v1344
      %v1347 = vld [vmem:[%s4] sm:$0x1]
      %v1349 = vperm.slane %v1347, 0
      %v1351 = vadd.f32 %v1346, %v1349
      %vm1352 = vcmp.ge.f32.partialorder %v1351, 0.0
      %v1353 = vmul.f32 %v1351, 0.1
      %v1354 = vsel %vm1352, %v1351, %v1353
      %v1355 = vpack.c.bf16 %v1354, %v1354
      %1356 = vst [vmem:[#allocation2 + $0xa0] sm:$0xf] %v1355
      %v1357 = vld [vmem:[#allocation2] sm:$0xf]
      %v1358 = vld [vmem:[#allocation2 + $0x4] sm:$0xf]
      %v1359 = vld [vmem:[#allocation2 + $0x8] sm:$0xf]
      %v1360 = vld [vmem:[#allocation2 + $0xc] sm:$0xf]
      %v1361 = vld [vmem:[#allocation2 + $0x10] sm:$0xf]
      %v1362 = vld [vmem:[#allocation2 + $0x14] sm:$0xf]
      %v1363 = vld [vmem:[#allocation2 + $0x18] sm:$0xf]
      %v1364 = vld [vmem:[#allocation2 + $0x1c] sm:$0xf]
      %v1365 = vld [vmem:[#allocation2 + $0x20] sm:$0xf]
      %v1366 = vld [vmem:[#allocation2 + $0x24] sm:$0xf]
      %v1367 = vld [vmem:[#allocation2 + $0x28] sm:$0xf]
      %v1368 = vld [vmem:[#allocation2 + $0x2c] sm:$0xf]
      %v1369 = vld [vmem:[#allocation2 + $0x30] sm:$0xf]
      %v1370 = vld [vmem:[#allocation2 + $0x34] sm:$0xf]
      %v1371 = vld [vmem:[#allocation2 + $0x38] sm:$0xf]
      %v1372 = vld [vmem:[#allocation2 + $0x3c] sm:$0xf]
      %v1373 = vld [vmem:[#allocation2 + $0x40] sm:$0xf]
      %v1374 = vld [vmem:[#allocation2 + $0x44] sm:$0xf]
      %v1375 = vld [vmem:[%s2] sm:$0xf]
      %v1376 = vld [vmem:[%s2 + $0x4] sm:$0xf]
      %v1377 = vld [vmem:[%s2 + $0x8] sm:$0xf]
      %v1378 = vld [vmem:[%s2 + $0xc] sm:$0xf]
      %v1379 = vld [vmem:[%s2 + $0x10] sm:$0xf]
      %v1380 = vld [vmem:[%s2 + $0x14] sm:$0xf]
      %v1381 = vld [vmem:[%s2 + $0x18] sm:$0xf]
      %v1382 = vld [vmem:[%s2 + $0x1c] sm:$0xf]
      %v1383 = vld [vmem:[%s2 + $0x20] sm:$0xf]
      %v1384 = vld [vmem:[%s2 + $0x24] sm:$0xf]
      %v1385 = vld [vmem:[%s2 + $0x28] sm:$0xf]
      %v1386 = vld [vmem:[%s2 + $0x2c] sm:$0xf]
      %v1387 = vld [vmem:[%s2 + $0x30] sm:$0xf]
      %v1388 = vld [vmem:[%s2 + $0x34] sm:$0xf]
      %v1389 = vld [vmem:[%s2 + $0x38] sm:$0xf]
      %v1390 = vld [vmem:[%s2 + $0x3c] sm:$0xf]
      %v1391 = vld [vmem:[#allocation2 + $0x48] sm:$0x1]
      %s1392 = scalar_lea.vmem %s2, 64
      %v1393 = vld [vmem:[%s1392] sm:$0xf]
      %v1394 = vld [vmem:[%s1392 + $0x4] sm:$0xf]
      %v1395 = vld [vmem:[%s1392 + $0x8] sm:$0xf]
      %v1396 = vld [vmem:[%s1392 + $0xc] sm:$0xf]
      %v1397 = vld [vmem:[%s1392 + $0x10] sm:$0xf]
      %v1398 = vld [vmem:[%s1392 + $0x14] sm:$0xf]
      %v1399 = vld [vmem:[%s1392 + $0x18] sm:$0xf]
      %v1400 = vld [vmem:[%s1392 + $0x1c] sm:$0xf]
      %v1401 = vld [vmem:[%s1392 + $0x20] sm:$0xf]
      %v1402 = vld [vmem:[%s1392 + $0x24] sm:$0xf]
      %v1403 = vld [vmem:[%s1392 + $0x28] sm:$0xf]
      %v1404 = vld [vmem:[%s1392 + $0x2c] sm:$0xf]
      %v1405 = vld [vmem:[%s1392 + $0x30] sm:$0xf]
      %v1406 = vld [vmem:[%s1392 + $0x34] sm:$0xf]
      %v1407 = vld [vmem:[%s1392 + $0x38] sm:$0xf]
      %v1408 = vld [vmem:[%s1392 + $0x3c] sm:$0xf]
      %v1428 = vunpack.c.l.b16 %v1357
      %v1429 = vunpack.c.l.b16 %v1358
      %v1430 = vunpack.c.l.b16 %v1359
      %v1431 = vunpack.c.l.b16 %v1360
      %v1432 = vunpack.c.l.b16 %v1361
      %v1433 = vunpack.c.l.b16 %v1362
      %v1434 = vunpack.c.l.b16 %v1363
      %v1435 = vunpack.c.l.b16 %v1364
      %v1436 = vunpack.c.l.b16 %v1365
      %v1437 = vunpack.c.l.b16 %v1366
      %v1438 = vunpack.c.l.b16 %v1367
      %v1439 = vunpack.c.l.b16 %v1368
      %v1440 = vunpack.c.l.b16 %v1369
      %v1441 = vunpack.c.l.b16 %v1370
      %v1442 = vunpack.c.l.b16 %v1371
      %v1443 = vunpack.c.l.b16 %v1372
      %v1444 = vunpack.c.l.b16 %v1373
      %v1445 = vunpack.c.l.b16 %v1374
      %v1446 = vunpack.c.l.b16 %v1391
      %v1447 = vpack.c.b16 %v1429, %v1428
      %v1448 = vpack.c.b16 %v1431, %v1430
      %v1449 = vpack.c.b16 %v1433, %v1432
      %v1450 = vpack.c.b16 %v1435, %v1434
      %v1451 = vpack.c.b16 %v1437, %v1436
      %v1452 = vpack.c.b16 %v1439, %v1438
      %v1453 = vpack.c.b16 %v1441, %v1440
      %v1454 = vpack.c.b16 %v1443, %v1442
      %v1455 = vpack.c.b16 %v1445, %v1444
      %v1456 = vpack.c.b16 %v1446, %v1446
      %vm1457 = vsmask.f32 7424
      %v1459 = vshrl.u32 %v1447, 16
      %v1461 = vshll.u32 %v1447, 16
      %v1463 = vrot.slane %v1461, 1
      %v1464 = vor.u32 %v1459, %v1463
      %v1466 = vshll.u32 %v1448, 16
      %v1468 = vrot.slane %v1466, 1
      %v1469 = vsel %vm1457, %v1464, %v1468
      %v1470 = vshrl.u32 %v1448, 16
      %v1472 = vor.u32 %v1470, %v1468
      %v1474 = vshll.u32 %v1449, 16
      %v1476 = vrot.slane %v1474, 1
      %v1477 = vsel %vm1457, %v1472, %v1476
      %v1478 = vshrl.u32 %v1449, 16
      %v1480 = vor.u32 %v1478, %v1476
      %v1482 = vshll.u32 %v1450, 16
      %v1484 = vrot.slane %v1482, 1
      %v1485 = vsel %vm1457, %v1480, %v1484
      %v1486 = vshrl.u32 %v1450, 16
      %v1488 = vor.u32 %v1486, %v1484
      %v1490 = vshll.u32 %v1451, 16
      %v1492 = vrot.slane %v1490, 1
      %v1493 = vsel %vm1457, %v1488, %v1492
      %v1494 = vshrl.u32 %v1451, 16
      %v1496 = vor.u32 %v1494, %v1492
      %v1498 = vshll.u32 %v1452, 16
      %v1500 = vrot.slane %v1498, 1
      %v1501 = vsel %vm1457, %v1496, %v1500
      %v1502 = vshrl.u32 %v1452, 16
      %v1504 = vor.u32 %v1502, %v1500
      %v1506 = vshll.u32 %v1453, 16
      %v1508 = vrot.slane %v1506, 1
      %v1509 = vsel %vm1457, %v1504, %v1508
      %v1510 = vshrl.u32 %v1453, 16
      %v1512 = vor.u32 %v1510, %v1508
      %v1514 = vshll.u32 %v1454, 16
      %v1516 = vrot.slane %v1514, 1
      %v1517 = vsel %vm1457, %v1512, %v1516
      %v1518 = vshrl.u32 %v1454, 16
      %v1520 = vor.u32 %v1518, %v1516
      %v1522 = vshll.u32 %v1455, 16
      %v1524 = vrot.slane %v1522, 1
      %v1525 = vsel %vm1457, %v1520, %v1524
      %v1526 = vshrl.u32 %v1455, 16
      %v1528 = vor.u32 %v1526, %v1524
      %v1530 = vshll.u32 %v1456, 16
      %v1532 = vrot.slane %v1530, 1
      %v1533 = vsel %vm1457, %v1528, %v1532
      %v1559 = vunpack.c.l.b16 %v1393
      %v1560 = vunpack.c.l.b16 %v1394
      %v1561 = vunpack.c.l.b16 %v1395
      %v1562 = vunpack.c.l.b16 %v1396
      %v1563 = vunpack.c.l.b16 %v1397
      %v1564 = vunpack.c.l.b16 %v1398
      %v1565 = vunpack.c.l.b16 %v1399
      %v1566 = vunpack.c.l.b16 %v1400
      %v1567 = vunpack.c.l.b16 %v1401
      %v1568 = vunpack.c.l.b16 %v1402
      %v1569 = vunpack.c.l.b16 %v1403
      %v1570 = vunpack.c.l.b16 %v1404
      %v1571 = vunpack.c.l.b16 %v1405
      %v1572 = vunpack.c.l.b16 %v1406
      %v1573 = vunpack.c.l.b16 %v1407
      %v1574 = vunpack.c.l.b16 %v1408
      %v1575 = vpack.c.b16 %v1560, %v1559
      %v1576 = vpack.c.b16 %v1562, %v1561
      %v1577 = vpack.c.b16 %v1564, %v1563
      %v1578 = vpack.c.b16 %v1566, %v1565
      %v1579 = vpack.c.b16 %v1568, %v1567
      %v1580 = vpack.c.b16 %v1570, %v1569
      %v1581 = vpack.c.b16 %v1572, %v1571
      %v1582 = vpack.c.b16 %v1574, %v1573
      %1591 = vmatpush.bf16.msra.mxu0 %v1582
      %1592 = vmatpush.bf16.msra.mxu0 %v1581
      %1593 = vmatpush.bf16.msra.mxu0 %v1580
      %1594 = vmatpush.bf16.msra.mxu0 %v1579
      %1595 = vmatpush.bf16.msra.mxu0 %v1578
      %1596 = vmatpush.bf16.msra.mxu0 %v1577
      %1597 = vmatpush.bf16.msra.mxu0 %v1576
      %1598 = vmatpush.bf16.msra.mxu0 %v1575
      %1599 = vmatmul.bf16.gmra.mxu0 %v1469
      %v1600 = vpop.f32.mrf.mxu0
      %v1601 = vadd.f32 0.0, %v1600
      %v1602 = vpop.f32.mrf.mxu0
      %v1603 = vadd.f32 0.0, %v1602
      %1604 = vmatmul.bf16.gmra.mxu0 %v1477
      %v1605 = vpop.f32.mrf.mxu0
      %v1606 = vadd.f32 0.0, %v1605
      %v1607 = vpop.f32.mrf.mxu0
      %v1608 = vadd.f32 0.0, %v1607
      %1609 = vmatmul.bf16.gmra.mxu0 %v1485
      %v1610 = vpop.f32.mrf.mxu0
      %v1611 = vadd.f32 0.0, %v1610
      %v1612 = vpop.f32.mrf.mxu0
      %v1613 = vadd.f32 0.0, %v1612
      %1614 = vmatmul.bf16.gmra.mxu0 %v1493
      %v1615 = vpop.f32.mrf.mxu0
      %v1616 = vadd.f32 0.0, %v1615
      %v1617 = vpop.f32.mrf.mxu0
      %v1618 = vadd.f32 0.0, %v1617
      %1619 = vmatmul.bf16.gmra.mxu0 %v1501
      %v1620 = vpop.f32.mrf.mxu0
      %v1621 = vadd.f32 0.0, %v1620
      %v1622 = vpop.f32.mrf.mxu0
      %v1623 = vadd.f32 0.0, %v1622
      %1624 = vmatmul.bf16.gmra.mxu0 %v1509
      %v1625 = vpop.f32.mrf.mxu0
      %v1626 = vadd.f32 0.0, %v1625
      %v1627 = vpop.f32.mrf.mxu0
      %v1628 = vadd.f32 0.0, %v1627
      %1629 = vmatmul.bf16.gmra.mxu0 %v1517
      %v1630 = vpop.f32.mrf.mxu0
      %v1631 = vadd.f32 0.0, %v1630
      %v1632 = vpop.f32.mrf.mxu0
      %v1633 = vadd.f32 0.0, %v1632
      %1634 = vmatmul.bf16.gmra.mxu0 %v1525
      %v1635 = vpop.f32.mrf.mxu0
      %v1636 = vadd.f32 0.0, %v1635
      %v1637 = vpop.f32.mrf.mxu0
      %v1638 = vadd.f32 0.0, %v1637
      %1639 = vmatmul.bf16.gmra.mxu0 %v1533
      %v1640 = vpop.f32.mrf.mxu0
      %v1641 = vadd.f32 0.0, %v1640
      %v1642 = vpop.f32.mrf.mxu0
      %v1643 = vadd.f32 0.0, %v1642
      %1644 = vdwg.mxu0
      %v1670 = vunpack.c.l.b16 %v1375
      %v1671 = vunpack.c.l.b16 %v1376
      %v1672 = vunpack.c.l.b16 %v1377
      %v1673 = vunpack.c.l.b16 %v1378
      %v1674 = vunpack.c.l.b16 %v1379
      %v1675 = vunpack.c.l.b16 %v1380
      %v1676 = vunpack.c.l.b16 %v1381
      %v1677 = vunpack.c.l.b16 %v1382
      %v1678 = vunpack.c.l.b16 %v1383
      %v1679 = vunpack.c.l.b16 %v1384
      %v1680 = vunpack.c.l.b16 %v1385
      %v1681 = vunpack.c.l.b16 %v1386
      %v1682 = vunpack.c.l.b16 %v1387
      %v1683 = vunpack.c.l.b16 %v1388
      %v1684 = vunpack.c.l.b16 %v1389
      %v1685 = vunpack.c.l.b16 %v1390
      %v1686 = vpack.c.b16 %v1671, %v1670
      %v1687 = vpack.c.b16 %v1673, %v1672
      %v1688 = vpack.c.b16 %v1675, %v1674
      %v1689 = vpack.c.b16 %v1677, %v1676
      %v1690 = vpack.c.b16 %v1679, %v1678
      %v1691 = vpack.c.b16 %v1681, %v1680
      %v1692 = vpack.c.b16 %v1683, %v1682
      %v1693 = vpack.c.b16 %v1685, %v1684
      %1702 = vmatpush.bf16.msra.mxu0 %v1693
      %1703 = vmatpush.bf16.msra.mxu0 %v1692
      %1704 = vmatpush.bf16.msra.mxu0 %v1691
      %1705 = vmatpush.bf16.msra.mxu0 %v1690
      %1706 = vmatpush.bf16.msra.mxu0 %v1689
      %1707 = vmatpush.bf16.msra.mxu0 %v1688
      %1708 = vmatpush.bf16.msra.mxu0 %v1687
      %1709 = vmatpush.bf16.msra.mxu0 %v1686
      %1710 = vmatmul.bf16.gmra.mxu0 %v1447
      %v1711 = vpop.f32.mrf.mxu0
      %v1712 = vadd.f32 %v1601, %v1711
      %v1713 = vpop.f32.mrf.mxu0
      %v1714 = vadd.f32 %v1603, %v1713
      %1715 = vmatmul.bf16.gmra.mxu0 %v1448
      %v1716 = vpop.f32.mrf.mxu0
      %v1717 = vadd.f32 %v1606, %v1716
      %v1718 = vpop.f32.mrf.mxu0
      %v1719 = vadd.f32 %v1608, %v1718
      %1720 = vmatmul.bf16.gmra.mxu0 %v1449
      %v1721 = vpop.f32.mrf.mxu0
      %v1722 = vadd.f32 %v1611, %v1721
      %v1723 = vpop.f32.mrf.mxu0
      %v1724 = vadd.f32 %v1613, %v1723
      %1725 = vmatmul.bf16.gmra.mxu0 %v1450
      %v1726 = vpop.f32.mrf.mxu0
      %v1727 = vadd.f32 %v1616, %v1726
      %v1728 = vpop.f32.mrf.mxu0
      %v1729 = vadd.f32 %v1618, %v1728
      %1730 = vmatmul.bf16.gmra.mxu0 %v1451
      %v1731 = vpop.f32.mrf.mxu0
      %v1732 = vadd.f32 %v1621, %v1731
      %v1733 = vpop.f32.mrf.mxu0
      %v1734 = vadd.f32 %v1623, %v1733
      %1735 = vmatmul.bf16.gmra.mxu0 %v1452
      %v1736 = vpop.f32.mrf.mxu0
      %v1737 = vadd.f32 %v1626, %v1736
      %v1738 = vpop.f32.mrf.mxu0
      %v1739 = vadd.f32 %v1628, %v1738
      %1740 = vmatmul.bf16.gmra.mxu0 %v1453
      %v1741 = vpop.f32.mrf.mxu0
      %v1742 = vadd.f32 %v1631, %v1741
      %v1743 = vpop.f32.mrf.mxu0
      %v1744 = vadd.f32 %v1633, %v1743
      %1745 = vmatmul.bf16.gmra.mxu0 %v1454
      %v1746 = vpop.f32.mrf.mxu0
      %v1747 = vadd.f32 %v1636, %v1746
      %v1748 = vpop.f32.mrf.mxu0
      %v1749 = vadd.f32 %v1638, %v1748
      %1750 = vmatmul.bf16.gmra.mxu0 %v1455
      %v1751 = vpop.f32.mrf.mxu0
      %v1752 = vadd.f32 %v1641, %v1751
      %v1753 = vpop.f32.mrf.mxu0
      %v1754 = vadd.f32 %v1643, %v1753
      %1755 = vdwg.mxu0
      %v1756 = vld [vmem:[#allocation2] sm:$0xe]
      %s1757 = scalar_lea.vmem %s2, 128
      %v1758 = vld [vmem:[%s1757] sm:$0xf]
      %v1759 = vld [vmem:[%s1757 + $0x4] sm:$0xf]
      %v1760 = vld [vmem:[%s1757 + $0x8] sm:$0xf]
      %v1761 = vld [vmem:[%s1757 + $0xc] sm:$0xf]
      %v1762 = vld [vmem:[%s1757 + $0x10] sm:$0xf]
      %v1763 = vld [vmem:[%s1757 + $0x14] sm:$0xf]
      %v1764 = vld [vmem:[%s1757 + $0x18] sm:$0xf]
      %v1765 = vld [vmem:[%s1757 + $0x1c] sm:$0xf]
      %v1766 = vld [vmem:[%s1757 + $0x20] sm:$0xf]
      %v1767 = vld [vmem:[%s1757 + $0x24] sm:$0xf]
      %v1768 = vld [vmem:[%s1757 + $0x28] sm:$0xf]
      %v1769 = vld [vmem:[%s1757 + $0x2c] sm:$0xf]
      %v1770 = vld [vmem:[%s1757 + $0x30] sm:$0xf]
      %v1771 = vld [vmem:[%s1757 + $0x34] sm:$0xf]
      %v1772 = vld [vmem:[%s1757 + $0x38] sm:$0xf]
      %v1773 = vld [vmem:[%s1757 + $0x3c] sm:$0xf]
      %v1775 = vunpack.c.l.b16 %v1756
      %v1776 = vpack.c.b16 %v1429, %v1775
      %vm1777 = vcmask 1046528
      %v1778 = vrot.slane %v1776, 1
      %v1779 = vrot.slane %v1448, 1
      %v1780 = vsel %vm1777, %v1778, %v1779
      %v1781 = vrot.slane %v1449, 1
      %v1782 = vsel %vm1777, %v1779, %v1781
      %v1783 = vrot.slane %v1450, 1
      %v1784 = vsel %vm1777, %v1781, %v1783
      %v1785 = vrot.slane %v1451, 1
      %v1786 = vsel %vm1777, %v1783, %v1785
      %v1787 = vrot.slane %v1452, 1
      %v1788 = vsel %vm1777, %v1785, %v1787
      %v1789 = vrot.slane %v1453, 1
      %v1790 = vsel %vm1777, %v1787, %v1789
      %v1791 = vrot.slane %v1454, 1
      %v1792 = vsel %vm1777, %v1789, %v1791
      %v1793 = vrot.slane %v1455, 1
      %v1794 = vsel %vm1777, %v1791, %v1793
      %v1795 = vrot.slane %v1456, 1
      %v1796 = vsel %vm1777, %v1793, %v1795
      %v1822 = vunpack.c.l.b16 %v1758
      %v1823 = vunpack.c.l.b16 %v1759
      %v1824 = vunpack.c.l.b16 %v1760
      %v1825 = vunpack.c.l.b16 %v1761
      %v1826 = vunpack.c.l.b16 %v1762
      %v1827 = vunpack.c.l.b16 %v1763
      %v1828 = vunpack.c.l.b16 %v1764
      %v1829 = vunpack.c.l.b16 %v1765
      %v1830 = vunpack.c.l.b16 %v1766
      %v1831 = vunpack.c.l.b16 %v1767
      %v1832 = vunpack.c.l.b16 %v1768
      %v1833 = vunpack.c.l.b16 %v1769
      %v1834 = vunpack.c.l.b16 %v1770
      %v1835 = vunpack.c.l.b16 %v1771
      %v1836 = vunpack.c.l.b16 %v1772
      %v1837 = vunpack.c.l.b16 %v1773
      %v1838 = vpack.c.b16 %v1823, %v1822
      %v1839 = vpack.c.b16 %v1825, %v1824
      %v1840 = vpack.c.b16 %v1827, %v1826
      %v1841 = vpack.c.b16 %v1829, %v1828
      %v1842 = vpack.c.b16 %v1831, %v1830
      %v1843 = vpack.c.b16 %v1833, %v1832
      %v1844 = vpack.c.b16 %v1835, %v1834
      %v1845 = vpack.c.b16 %v1837, %v1836
      %1854 = vmatpush.bf16.msra.mxu0 %v1845
      %1855 = vmatpush.bf16.msra.mxu0 %v1844
      %1856 = vmatpush.bf16.msra.mxu0 %v1843
      %1857 = vmatpush.bf16.msra.mxu0 %v1842
      %1858 = vmatpush.bf16.msra.mxu0 %v1841
      %1859 = vmatpush.bf16.msra.mxu0 %v1840
      %1860 = vmatpush.bf16.msra.mxu0 %v1839
      %1861 = vmatpush.bf16.msra.mxu0 %v1838
      %1862 = vmatmul.bf16.gmra.mxu0 %v1780
      %v1863 = vpop.f32.mrf.mxu0
      %v1864 = vadd.f32 0.0, %v1863
      %v1865 = vpop.f32.mrf.mxu0
      %v1866 = vadd.f32 0.0, %v1865
      %1867 = vmatmul.bf16.gmra.mxu0 %v1782
      %v1868 = vpop.f32.mrf.mxu0
      %v1869 = vadd.f32 0.0, %v1868
      %v1870 = vpop.f32.mrf.mxu0
      %v1871 = vadd.f32 0.0, %v1870
      %1872 = vmatmul.bf16.gmra.mxu0 %v1784
      %v1873 = vpop.f32.mrf.mxu0
      %v1874 = vadd.f32 0.0, %v1873
      %v1875 = vpop.f32.mrf.mxu0
      %v1876 = vadd.f32 0.0, %v1875
      %1877 = vmatmul.bf16.gmra.mxu0 %v1786
      %v1878 = vpop.f32.mrf.mxu0
      %v1879 = vadd.f32 0.0, %v1878
      %v1880 = vpop.f32.mrf.mxu0
      %v1881 = vadd.f32 0.0, %v1880
      %1882 = vmatmul.bf16.gmra.mxu0 %v1788
      %v1883 = vpop.f32.mrf.mxu0
      %v1884 = vadd.f32 0.0, %v1883
      %v1885 = vpop.f32.mrf.mxu0
      %v1886 = vadd.f32 0.0, %v1885
      %1887 = vmatmul.bf16.gmra.mxu0 %v1790
      %v1888 = vpop.f32.mrf.mxu0
      %v1889 = vadd.f32 0.0, %v1888
      %v1890 = vpop.f32.mrf.mxu0
      %v1891 = vadd.f32 0.0, %v1890
      %1892 = vmatmul.bf16.gmra.mxu0 %v1792
      %v1893 = vpop.f32.mrf.mxu0
      %v1894 = vadd.f32 0.0, %v1893
      %v1895 = vpop.f32.mrf.mxu0
      %v1896 = vadd.f32 0.0, %v1895
      %1897 = vmatmul.bf16.gmra.mxu0 %v1794
      %v1898 = vpop.f32.mrf.mxu0
      %v1899 = vadd.f32 0.0, %v1898
      %v1900 = vpop.f32.mrf.mxu0
      %v1901 = vadd.f32 0.0, %v1900
      %1902 = vmatmul.bf16.gmra.mxu0 %v1796
      %v1903 = vpop.f32.mrf.mxu0
      %v1904 = vadd.f32 0.0, %v1903
      %v1905 = vpop.f32.mrf.mxu0
      %v1906 = vadd.f32 0.0, %v1905
      %1907 = vdwg.mxu0
      %v1908 = vadd.f32 %v1712, %v1864
      %v1909 = vadd.f32 %v1714, %v1866
      %v1910 = vadd.f32 %v1717, %v1869
      %v1911 = vadd.f32 %v1719, %v1871
      %v1912 = vadd.f32 %v1722, %v1874
      %v1913 = vadd.f32 %v1724, %v1876
      %v1914 = vadd.f32 %v1727, %v1879
      %v1915 = vadd.f32 %v1729, %v1881
      %v1916 = vadd.f32 %v1732, %v1884
      %v1917 = vadd.f32 %v1734, %v1886
      %v1918 = vadd.f32 %v1737, %v1889
      %v1919 = vadd.f32 %v1739, %v1891
      %v1920 = vadd.f32 %v1742, %v1894
      %v1921 = vadd.f32 %v1744, %v1896
      %v1922 = vadd.f32 %v1747, %v1899
      %v1923 = vadd.f32 %v1749, %v1901
      %v1924 = vadd.f32 %v1752, %v1904
      %v1925 = vadd.f32 %v1754, %v1906
      %v1926 = vld [vmem:[#allocation2 + $0x8] sm:$0xe]
      %v1927 = vld [vmem:[#allocation2 + $0xc] sm:$0xf]
      %v1928 = vld [vmem:[#allocation2 + $0x10] sm:$0xf]
      %v1929 = vld [vmem:[#allocation2 + $0x14] sm:$0xf]
      %v1930 = vld [vmem:[#allocation2 + $0x18] sm:$0xf]
      %v1931 = vld [vmem:[#allocation2 + $0x1c] sm:$0xf]
      %v1932 = vld [vmem:[#allocation2 + $0x20] sm:$0xf]
      %v1933 = vld [vmem:[#allocation2 + $0x24] sm:$0xf]
      %v1934 = vld [vmem:[#allocation2 + $0x28] sm:$0xf]
      %v1935 = vld [vmem:[#allocation2 + $0x2c] sm:$0xf]
      %v1936 = vld [vmem:[#allocation2 + $0x30] sm:$0xf]
      %v1937 = vld [vmem:[#allocation2 + $0x34] sm:$0xf]
      %v1938 = vld [vmem:[#allocation2 + $0x38] sm:$0xf]
      %v1939 = vld [vmem:[#allocation2 + $0x3c] sm:$0xf]
      %v1940 = vld [vmem:[#allocation2 + $0x40] sm:$0xf]
      %v1941 = vld [vmem:[#allocation2 + $0x44] sm:$0xf]
      %v1942 = vld [vmem:[#allocation2 + $0x48] sm:$0xf]
      %v1943 = vld [vmem:[#allocation2 + $0x4c] sm:$0xf]
      %v1944 = vld [vmem:[#allocation2 + $0x50] sm:$0x1]
      %s1945 = scalar_lea.vmem %s2, 192
      %v1946 = vld [vmem:[%s1945] sm:$0xf]
      %v1947 = vld [vmem:[%s1945 + $0x4] sm:$0xf]
      %v1948 = vld [vmem:[%s1945 + $0x8] sm:$0xf]
      %v1949 = vld [vmem:[%s1945 + $0xc] sm:$0xf]
      %v1950 = vld [vmem:[%s1945 + $0x10] sm:$0xf]
      %v1951 = vld [vmem:[%s1945 + $0x14] sm:$0xf]
      %v1952 = vld [vmem:[%s1945 + $0x18] sm:$0xf]
      %v1953 = vld [vmem:[%s1945 + $0x1c] sm:$0xf]
      %v1954 = vld [vmem:[%s1945 + $0x20] sm:$0xf]
      %v1955 = vld [vmem:[%s1945 + $0x24] sm:$0xf]
      %v1956 = vld [vmem:[%s1945 + $0x28] sm:$0xf]
      %v1957 = vld [vmem:[%s1945 + $0x2c] sm:$0xf]
      %v1958 = vld [vmem:[%s1945 + $0x30] sm:$0xf]
      %v1959 = vld [vmem:[%s1945 + $0x34] sm:$0xf]
      %v1960 = vld [vmem:[%s1945 + $0x38] sm:$0xf]
      %v1961 = vld [vmem:[%s1945 + $0x3c] sm:$0xf]
      %v1981 = vunpack.c.l.b16 %v1926
      %v1982 = vunpack.c.l.b16 %v1927
      %v1983 = vunpack.c.l.b16 %v1928
      %v1984 = vunpack.c.l.b16 %v1929
      %v1985 = vunpack.c.l.b16 %v1930
      %v1986 = vunpack.c.l.b16 %v1931
      %v1987 = vunpack.c.l.b16 %v1932
      %v1988 = vunpack.c.l.b16 %v1933
      %v1989 = vunpack.c.l.b16 %v1934
      %v1990 = vunpack.c.l.b16 %v1935
      %v1991 = vunpack.c.l.b16 %v1936
      %v1992 = vunpack.c.l.b16 %v1937
      %v1993 = vunpack.c.l.b16 %v1938
      %v1994 = vunpack.c.l.b16 %v1939
      %v1995 = vunpack.c.l.b16 %v1940
      %v1996 = vunpack.c.l.b16 %v1941
      %v1997 = vunpack.c.l.b16 %v1942
      %v1998 = vunpack.c.l.b16 %v1943
      %v1999 = vunpack.c.l.b16 %v1944
      %v2000 = vpack.c.b16 %v1982, %v1981
      %v2001 = vpack.c.b16 %v1984, %v1983
      %v2002 = vpack.c.b16 %v1986, %v1985
      %v2003 = vpack.c.b16 %v1988, %v1987
      %v2004 = vpack.c.b16 %v1990, %v1989
      %v2005 = vpack.c.b16 %v1992, %v1991
      %v2006 = vpack.c.b16 %v1994, %v1993
      %v2007 = vpack.c.b16 %v1996, %v1995
      %v2008 = vpack.c.b16 %v1998, %v1997
      %v2009 = vpack.c.b16 %v1999, %v1999
      %v2010 = vrot.slane %v2000, 1
      %v2011 = vrot.slane %v2001, 1
      %v2012 = vsel %vm1777, %v2010, %v2011
      %v2013 = vrot.slane %v2002, 1
      %v2014 = vsel %vm1777, %v2011, %v2013
      %v2015 = vrot.slane %v2003, 1
      %v2016 = vsel %vm1777, %v2013, %v2015
      %v2017 = vrot.slane %v2004, 1
      %v2018 = vsel %vm1777, %v2015, %v2017
      %v2019 = vrot.slane %v2005, 1
      %v2020 = vsel %vm1777, %v2017, %v2019
      %v2021 = vrot.slane %v2006, 1
      %v2022 = vsel %vm1777, %v2019, %v2021
      %v2023 = vrot.slane %v2007, 1
      %v2024 = vsel %vm1777, %v2021, %v2023
      %v2025 = vrot.slane %v2008, 1
      %v2026 = vsel %vm1777, %v2023, %v2025
      %v2027 = vrot.slane %v2009, 1
      %v2028 = vsel %vm1777, %v2025, %v2027
      %v2054 = vunpack.c.l.b16 %v1946
      %v2055 = vunpack.c.l.b16 %v1947
      %v2056 = vunpack.c.l.b16 %v1948
      %v2057 = vunpack.c.l.b16 %v1949
      %v2058 = vunpack.c.l.b16 %v1950
      %v2059 = vunpack.c.l.b16 %v1951
      %v2060 = vunpack.c.l.b16 %v1952
      %v2061 = vunpack.c.l.b16 %v1953
      %v2062 = vunpack.c.l.b16 %v1954
      %v2063 = vunpack.c.l.b16 %v1955
      %v2064 = vunpack.c.l.b16 %v1956
      %v2065 = vunpack.c.l.b16 %v1957
      %v2066 = vunpack.c.l.b16 %v1958
      %v2067 = vunpack.c.l.b16 %v1959
      %v2068 = vunpack.c.l.b16 %v1960
      %v2069 = vunpack.c.l.b16 %v1961
      %v2070 = vpack.c.b16 %v2055, %v2054
      %v2071 = vpack.c.b16 %v2057, %v2056
      %v2072 = vpack.c.b16 %v2059, %v2058
      %v2073 = vpack.c.b16 %v2061, %v2060
      %v2074 = vpack.c.b16 %v2063, %v2062
      %v2075 = vpack.c.b16 %v2065, %v2064
      %v2076 = vpack.c.b16 %v2067, %v2066
      %v2077 = vpack.c.b16 %v2069, %v2068
      %2086 = vmatpush.bf16.msra.mxu0 %v2077
      %2087 = vmatpush.bf16.msra.mxu0 %v2076
      %2088 = vmatpush.bf16.msra.mxu0 %v2075
      %2089 = vmatpush.bf16.msra.mxu0 %v2074
      %2090 = vmatpush.bf16.msra.mxu0 %v2073
      %2091 = vmatpush.bf16.msra.mxu0 %v2072
      %2092 = vmatpush.bf16.msra.mxu0 %v2071
      %2093 = vmatpush.bf16.msra.mxu0 %v2070
      %2094 = vmatmul.bf16.gmra.mxu0 %v2012
      %v2095 = vpop.f32.mrf.mxu0
      %v2096 = vadd.f32 0.0, %v2095
      %v2097 = vpop.f32.mrf.mxu0
      %v2098 = vadd.f32 0.0, %v2097
      %2099 = vmatmul.bf16.gmra.mxu0 %v2014
      %v2100 = vpop.f32.mrf.mxu0
      %v2101 = vadd.f32 0.0, %v2100
      %v2102 = vpop.f32.mrf.mxu0
      %v2103 = vadd.f32 0.0, %v2102
      %2104 = vmatmul.bf16.gmra.mxu0 %v2016
      %v2105 = vpop.f32.mrf.mxu0
      %v2106 = vadd.f32 0.0, %v2105
      %v2107 = vpop.f32.mrf.mxu0
      %v2108 = vadd.f32 0.0, %v2107
      %2109 = vmatmul.bf16.gmra.mxu0 %v2018
      %v2110 = vpop.f32.mrf.mxu0
      %v2111 = vadd.f32 0.0, %v2110
      %v2112 = vpop.f32.mrf.mxu0
      %v2113 = vadd.f32 0.0, %v2112
      %2114 = vmatmul.bf16.gmra.mxu0 %v2020
      %v2115 = vpop.f32.mrf.mxu0
      %v2116 = vadd.f32 0.0, %v2115
      %v2117 = vpop.f32.mrf.mxu0
      %v2118 = vadd.f32 0.0, %v2117
      %2119 = vmatmul.bf16.gmra.mxu0 %v2022
      %v2120 = vpop.f32.mrf.mxu0
      %v2121 = vadd.f32 0.0, %v2120
      %v2122 = vpop.f32.mrf.mxu0
      %v2123 = vadd.f32 0.0, %v2122
      %2124 = vmatmul.bf16.gmra.mxu0 %v2024
      %v2125 = vpop.f32.mrf.mxu0
      %v2126 = vadd.f32 0.0, %v2125
      %v2127 = vpop.f32.mrf.mxu0
      %v2128 = vadd.f32 0.0, %v2127
      %2129 = vmatmul.bf16.gmra.mxu0 %v2026
      %v2130 = vpop.f32.mrf.mxu0
      %v2131 = vadd.f32 0.0, %v2130
      %v2132 = vpop.f32.mrf.mxu0
      %v2133 = vadd.f32 0.0, %v2132
      %2134 = vmatmul.bf16.gmra.mxu0 %v2028
      %v2135 = vpop.f32.mrf.mxu0
      %v2136 = vadd.f32 0.0, %v2135
      %v2137 = vpop.f32.mrf.mxu0
      %v2138 = vadd.f32 0.0, %v2137
      %2139 = vdwg.mxu0
      %v2140 = vadd.f32 %v1908, %v2096
      %v2141 = vadd.f32 %v1909, %v2098
      %v2142 = vadd.f32 %v1910, %v2101
      %v2143 = vadd.f32 %v1911, %v2103
      %v2144 = vadd.f32 %v1912, %v2106
      %v2145 = vadd.f32 %v1913, %v2108
      %v2146 = vadd.f32 %v1914, %v2111
      %v2147 = vadd.f32 %v1915, %v2113
      %v2148 = vadd.f32 %v1916, %v2116
      %v2149 = vadd.f32 %v1917, %v2118
      %v2150 = vadd.f32 %v1918, %v2121
      %v2151 = vadd.f32 %v1919, %v2123
      %v2152 = vadd.f32 %v1920, %v2126
      %v2153 = vadd.f32 %v1921, %v2128
      %v2154 = vadd.f32 %v1922, %v2131
      %v2155 = vadd.f32 %v1923, %v2133
      %v2156 = vadd.f32 %v1924, %v2136
      %v2157 = vadd.f32 %v1925, %v2138
      %v2158 = vld [vmem:[#allocation2 + $0x50] sm:$0x3]
      %s2159 = scalar_lea.vmem %s2, 256
      %v2160 = vld [vmem:[%s2159] sm:$0xf]
      %v2161 = vld [vmem:[%s2159 + $0x4] sm:$0xf]
      %v2162 = vld [vmem:[%s2159 + $0x8] sm:$0xf]
      %v2163 = vld [vmem:[%s2159 + $0xc] sm:$0xf]
      %v2164 = vld [vmem:[%s2159 + $0x10] sm:$0xf]
      %v2165 = vld [vmem:[%s2159 + $0x14] sm:$0xf]
      %v2166 = vld [vmem:[%s2159 + $0x18] sm:$0xf]
      %v2167 = vld [vmem:[%s2159 + $0x1c] sm:$0xf]
      %v2168 = vld [vmem:[%s2159 + $0x20] sm:$0xf]
      %v2169 = vld [vmem:[%s2159 + $0x24] sm:$0xf]
      %v2170 = vld [vmem:[%s2159 + $0x28] sm:$0xf]
      %v2171 = vld [vmem:[%s2159 + $0x2c] sm:$0xf]
      %v2172 = vld [vmem:[%s2159 + $0x30] sm:$0xf]
      %v2173 = vld [vmem:[%s2159 + $0x34] sm:$0xf]
      %v2174 = vld [vmem:[%s2159 + $0x38] sm:$0xf]
      %v2175 = vld [vmem:[%s2159 + $0x3c] sm:$0xf]
      %v2177 = vunpack.c.l.b16 %v2158
      %v2178 = vpack.c.b16 %v2177, %v2177
      %vm2179 = vsmask.f32 6400
      %v2181 = vshrl.u32 %v2000, 16
      %v2183 = vrot.slane %v2181, 1
      %v2184 = vshll.u32 %v2000, 16
      %v2186 = vrot.slane %v2184, 2
      %v2187 = vor.u32 %v2183, %v2186
      %v2189 = vshrl.u32 %v2001, 16
      %v2191 = vrot.slane %v2189, 1
      %v2192 = vshll.u32 %v2001, 16
      %v2194 = vrot.slane %v2192, 2
      %v2195 = vor.u32 %v2191, %v2194
      %v2196 = vsel %vm2179, %v2187, %v2195
      %v2198 = vshrl.u32 %v2002, 16
      %v2200 = vrot.slane %v2198, 1
      %v2201 = vshll.u32 %v2002, 16
      %v2203 = vrot.slane %v2201, 2
      %v2204 = vor.u32 %v2200, %v2203
      %v2205 = vsel %vm2179, %v2195, %v2204
      %v2207 = vshrl.u32 %v2003, 16
      %v2209 = vrot.slane %v2207, 1
      %v2210 = vshll.u32 %v2003, 16
      %v2212 = vrot.slane %v2210, 2
      %v2213 = vor.u32 %v2209, %v2212
      %v2214 = vsel %vm2179, %v2204, %v2213
      %v2216 = vshrl.u32 %v2004, 16
      %v2218 = vrot.slane %v2216, 1
      %v2219 = vshll.u32 %v2004, 16
      %v2221 = vrot.slane %v2219, 2
      %v2222 = vor.u32 %v2218, %v2221
      %v2223 = vsel %vm2179, %v2213, %v2222
      %v2225 = vshrl.u32 %v2005, 16
      %v2227 = vrot.slane %v2225, 1
      %v2228 = vshll.u32 %v2005, 16
      %v2230 = vrot.slane %v2228, 2
      %v2231 = vor.u32 %v2227, %v2230
      %v2232 = vsel %vm2179, %v2222, %v2231
      %v2234 = vshrl.u32 %v2006, 16
      %v2236 = vrot.slane %v2234, 1
      %v2237 = vshll.u32 %v2006, 16
      %v2239 = vrot.slane %v2237, 2
      %v2240 = vor.u32 %v2236, %v2239
      %v2241 = vsel %vm2179, %v2231, %v2240
      %v2243 = vshrl.u32 %v2007, 16
      %v2245 = vrot.slane %v2243, 1
      %v2246 = vshll.u32 %v2007, 16
      %v2248 = vrot.slane %v2246, 2
      %v2249 = vor.u32 %v2245, %v2248
      %v2250 = vsel %vm2179, %v2240, %v2249
      %v2252 = vshrl.u32 %v2008, 16
      %v2254 = vrot.slane %v2252, 1
      %v2255 = vshll.u32 %v2008, 16
      %v2257 = vrot.slane %v2255, 2
      %v2258 = vor.u32 %v2254, %v2257
      %v2259 = vsel %vm2179, %v2249, %v2258
      %v2261 = vshrl.u32 %v2178, 16
      %v2263 = vrot.slane %v2261, 1
      %v2264 = vshll.u32 %v2178, 16
      %v2266 = vrot.slane %v2264, 2
      %v2267 = vor.u32 %v2263, %v2266
      %v2268 = vsel %vm2179, %v2258, %v2267
      %v2294 = vunpack.c.l.b16 %v2160
      %v2295 = vunpack.c.l.b16 %v2161
      %v2296 = vunpack.c.l.b16 %v2162
      %v2297 = vunpack.c.l.b16 %v2163
      %v2298 = vunpack.c.l.b16 %v2164
      %v2299 = vunpack.c.l.b16 %v2165
      %v2300 = vunpack.c.l.b16 %v2166
      %v2301 = vunpack.c.l.b16 %v2167
      %v2302 = vunpack.c.l.b16 %v2168
      %v2303 = vunpack.c.l.b16 %v2169
      %v2304 = vunpack.c.l.b16 %v2170
      %v2305 = vunpack.c.l.b16 %v2171
      %v2306 = vunpack.c.l.b16 %v2172
      %v2307 = vunpack.c.l.b16 %v2173
      %v2308 = vunpack.c.l.b16 %v2174
      %v2309 = vunpack.c.l.b16 %v2175
      %v2310 = vpack.c.b16 %v2295, %v2294
      %v2311 = vpack.c.b16 %v2297, %v2296
      %v2312 = vpack.c.b16 %v2299, %v2298
      %v2313 = vpack.c.b16 %v2301, %v2300
      %v2314 = vpack.c.b16 %v2303, %v2302
      %v2315 = vpack.c.b16 %v2305, %v2304
      %v2316 = vpack.c.b16 %v2307, %v2306
      %v2317 = vpack.c.b16 %v2309, %v2308
      %2326 = vmatpush.bf16.msra.mxu0 %v2317
      %2327 = vmatpush.bf16.msra.mxu0 %v2316
      %2328 = vmatpush.bf16.msra.mxu0 %v2315
      %2329 = vmatpush.bf16.msra.mxu0 %v2314
      %2330 = vmatpush.bf16.msra.mxu0 %v2313
      %2331 = vmatpush.bf16.msra.mxu0 %v2312
      %2332 = vmatpush.bf16.msra.mxu0 %v2311
      %2333 = vmatpush.bf16.msra.mxu0 %v2310
      %2334 = vmatmul.bf16.gmra.mxu0 %v2196
      %v2335 = vpop.f32.mrf.mxu0
      %v2336 = vadd.f32 0.0, %v2335
      %v2337 = vpop.f32.mrf.mxu0
      %v2338 = vadd.f32 0.0, %v2337
      %2339 = vmatmul.bf16.gmra.mxu0 %v2205
      %v2340 = vpop.f32.mrf.mxu0
      %v2341 = vadd.f32 0.0, %v2340
      %v2342 = vpop.f32.mrf.mxu0
      %v2343 = vadd.f32 0.0, %v2342
      %2344 = vmatmul.bf16.gmra.mxu0 %v2214
      %v2345 = vpop.f32.mrf.mxu0
      %v2346 = vadd.f32 0.0, %v2345
      %v2347 = vpop.f32.mrf.mxu0
      %v2348 = vadd.f32 0.0, %v2347
      %2349 = vmatmul.bf16.gmra.mxu0 %v2223
      %v2350 = vpop.f32.mrf.mxu0
      %v2351 = vadd.f32 0.0, %v2350
      %v2352 = vpop.f32.mrf.mxu0
      %v2353 = vadd.f32 0.0, %v2352
      %2354 = vmatmul.bf16.gmra.mxu0 %v2232
      %v2355 = vpop.f32.mrf.mxu0
      %v2356 = vadd.f32 0.0, %v2355
      %v2357 = vpop.f32.mrf.mxu0
      %v2358 = vadd.f32 0.0, %v2357
      %2359 = vmatmul.bf16.gmra.mxu0 %v2241
      %v2360 = vpop.f32.mrf.mxu0
      %v2361 = vadd.f32 0.0, %v2360
      %v2362 = vpop.f32.mrf.mxu0
      %v2363 = vadd.f32 0.0, %v2362
      %2364 = vmatmul.bf16.gmra.mxu0 %v2250
      %v2365 = vpop.f32.mrf.mxu0
      %v2366 = vadd.f32 0.0, %v2365
      %v2367 = vpop.f32.mrf.mxu0
      %v2368 = vadd.f32 0.0, %v2367
      %2369 = vmatmul.bf16.gmra.mxu0 %v2259
      %v2370 = vpop.f32.mrf.mxu0
      %v2371 = vadd.f32 0.0, %v2370
      %v2372 = vpop.f32.mrf.mxu0
      %v2373 = vadd.f32 0.0, %v2372
      %2374 = vmatmul.bf16.gmra.mxu0 %v2268
      %v2375 = vpop.f32.mrf.mxu0
      %v2376 = vadd.f32 0.0, %v2375
      %v2377 = vpop.f32.mrf.mxu0
      %v2378 = vadd.f32 0.0, %v2377
      %2379 = vdwg.mxu0
      %v2380 = vadd.f32 %v2140, %v2336
      %v2381 = vadd.f32 %v2141, %v2338
      %v2382 = vadd.f32 %v2142, %v2341
      %v2383 = vadd.f32 %v2143, %v2343
      %v2384 = vadd.f32 %v2144, %v2346
      %v2385 = vadd.f32 %v2145, %v2348
      %v2386 = vadd.f32 %v2146, %v2351
      %v2387 = vadd.f32 %v2147, %v2353
      %v2388 = vadd.f32 %v2148, %v2356
      %v2389 = vadd.f32 %v2149, %v2358
      %v2390 = vadd.f32 %v2150, %v2361
      %v2391 = vadd.f32 %v2151, %v2363
      %v2392 = vadd.f32 %v2152, %v2366
      %v2393 = vadd.f32 %v2153, %v2368
      %v2394 = vadd.f32 %v2154, %v2371
      %v2395 = vadd.f32 %v2155, %v2373
      %v2396 = vadd.f32 %v2156, %v2376
      %v2397 = vadd.f32 %v2157, %v2378
      %v2398 = vld [vmem:[#allocation2 + $0x8] sm:$0xc]
      %s2399 = scalar_lea.vmem %s2, 320
      %v2400 = vld [vmem:[%s2399] sm:$0xf]
      %v2401 = vld [vmem:[%s2399 + $0x4] sm:$0xf]
      %v2402 = vld [vmem:[%s2399 + $0x8] sm:$0xf]
      %v2403 = vld [vmem:[%s2399 + $0xc] sm:$0xf]
      %v2404 = vld [vmem:[%s2399 + $0x10] sm:$0xf]
      %v2405 = vld [vmem:[%s2399 + $0x14] sm:$0xf]
      %v2406 = vld [vmem:[%s2399 + $0x18] sm:$0xf]
      %v2407 = vld [vmem:[%s2399 + $0x1c] sm:$0xf]
      %v2408 = vld [vmem:[%s2399 + $0x20] sm:$0xf]
      %v2409 = vld [vmem:[%s2399 + $0x24] sm:$0xf]
      %v2410 = vld [vmem:[%s2399 + $0x28] sm:$0xf]
      %v2411 = vld [vmem:[%s2399 + $0x2c] sm:$0xf]
      %v2412 = vld [vmem:[%s2399 + $0x30] sm:$0xf]
      %v2413 = vld [vmem:[%s2399 + $0x34] sm:$0xf]
      %v2414 = vld [vmem:[%s2399 + $0x38] sm:$0xf]
      %v2415 = vld [vmem:[%s2399 + $0x3c] sm:$0xf]
      %v2417 = vunpack.c.l.b16 %v2398
      %v2418 = vpack.c.b16 %v1982, %v2417
      %vm2419 = vcmask 1045504
      %v2420 = vrot.slane %v2418, 2
      %v2421 = vrot.slane %v2001, 2
      %v2422 = vsel %vm2419, %v2420, %v2421
      %v2423 = vrot.slane %v2002, 2
      %v2424 = vsel %vm2419, %v2421, %v2423
      %v2425 = vrot.slane %v2003, 2
      %v2426 = vsel %vm2419, %v2423, %v2425
      %v2427 = vrot.slane %v2004, 2
      %v2428 = vsel %vm2419, %v2425, %v2427
      %v2429 = vrot.slane %v2005, 2
      %v2430 = vsel %vm2419, %v2427, %v2429
      %v2431 = vrot.slane %v2006, 2
      %v2432 = vsel %vm2419, %v2429, %v2431
      %v2433 = vrot.slane %v2007, 2
      %v2434 = vsel %vm2419, %v2431, %v2433
      %v2435 = vrot.slane %v2008, 2
      %v2436 = vsel %vm2419, %v2433, %v2435
      %v2437 = vrot.slane %v2178, 2
      %v2438 = vsel %vm2419, %v2435, %v2437
      %v2464 = vunpack.c.l.b16 %v2400
      %v2465 = vunpack.c.l.b16 %v2401
      %v2466 = vunpack.c.l.b16 %v2402
      %v2467 = vunpack.c.l.b16 %v2403
      %v2468 = vunpack.c.l.b16 %v2404
      %v2469 = vunpack.c.l.b16 %v2405
      %v2470 = vunpack.c.l.b16 %v2406
      %v2471 = vunpack.c.l.b16 %v2407
      %v2472 = vunpack.c.l.b16 %v2408
      %v2473 = vunpack.c.l.b16 %v2409
      %v2474 = vunpack.c.l.b16 %v2410
      %v2475 = vunpack.c.l.b16 %v2411
      %v2476 = vunpack.c.l.b16 %v2412
      %v2477 = vunpack.c.l.b16 %v2413
      %v2478 = vunpack.c.l.b16 %v2414
      %v2479 = vunpack.c.l.b16 %v2415
      %v2480 = vpack.c.b16 %v2465, %v2464
      %v2481 = vpack.c.b16 %v2467, %v2466
      %v2482 = vpack.c.b16 %v2469, %v2468
      %v2483 = vpack.c.b16 %v2471, %v2470
      %v2484 = vpack.c.b16 %v2473, %v2472
      %v2485 = vpack.c.b16 %v2475, %v2474
      %v2486 = vpack.c.b16 %v2477, %v2476
      %v2487 = vpack.c.b16 %v2479, %v2478
      %2496 = vmatpush.bf16.msra.mxu0 %v2487
      %2497 = vmatpush.bf16.msra.mxu0 %v2486
      %2498 = vmatpush.bf16.msra.mxu0 %v2485
      %2499 = vmatpush.bf16.msra.mxu0 %v2484
      %2500 = vmatpush.bf16.msra.mxu0 %v2483
      %2501 = vmatpush.bf16.msra.mxu0 %v2482
      %2502 = vmatpush.bf16.msra.mxu0 %v2481
      %2503 = vmatpush.bf16.msra.mxu0 %v2480
      %2504 = vmatmul.bf16.gmra.mxu0 %v2422
      %v2505 = vpop.f32.mrf.mxu0
      %v2506 = vadd.f32 0.0, %v2505
      %v2507 = vpop.f32.mrf.mxu0
      %v2508 = vadd.f32 0.0, %v2507
      %2509 = vmatmul.bf16.gmra.mxu0 %v2424
      %v2510 = vpop.f32.mrf.mxu0
      %v2511 = vadd.f32 0.0, %v2510
      %v2512 = vpop.f32.mrf.mxu0
      %v2513 = vadd.f32 0.0, %v2512
      %2514 = vmatmul.bf16.gmra.mxu0 %v2426
      %v2515 = vpop.f32.mrf.mxu0
      %v2516 = vadd.f32 0.0, %v2515
      %v2517 = vpop.f32.mrf.mxu0
      %v2518 = vadd.f32 0.0, %v2517
      %2519 = vmatmul.bf16.gmra.mxu0 %v2428
      %v2520 = vpop.f32.mrf.mxu0
      %v2521 = vadd.f32 0.0, %v2520
      %v2522 = vpop.f32.mrf.mxu0
      %v2523 = vadd.f32 0.0, %v2522
      %2524 = vmatmul.bf16.gmra.mxu0 %v2430
      %v2525 = vpop.f32.mrf.mxu0
      %v2526 = vadd.f32 0.0, %v2525
      %v2527 = vpop.f32.mrf.mxu0
      %v2528 = vadd.f32 0.0, %v2527
      %2529 = vmatmul.bf16.gmra.mxu0 %v2432
      %v2530 = vpop.f32.mrf.mxu0
      %v2531 = vadd.f32 0.0, %v2530
      %v2532 = vpop.f32.mrf.mxu0
      %v2533 = vadd.f32 0.0, %v2532
      %2534 = vmatmul.bf16.gmra.mxu0 %v2434
      %v2535 = vpop.f32.mrf.mxu0
      %v2536 = vadd.f32 0.0, %v2535
      %v2537 = vpop.f32.mrf.mxu0
      %v2538 = vadd.f32 0.0, %v2537
      %2539 = vmatmul.bf16.gmra.mxu0 %v2436
      %v2540 = vpop.f32.mrf.mxu0
      %v2541 = vadd.f32 0.0, %v2540
      %v2542 = vpop.f32.mrf.mxu0
      %v2543 = vadd.f32 0.0, %v2542
      %2544 = vmatmul.bf16.gmra.mxu0 %v2438
      %v2545 = vpop.f32.mrf.mxu0
      %v2546 = vadd.f32 0.0, %v2545
      %v2547 = vpop.f32.mrf.mxu0
      %v2548 = vadd.f32 0.0, %v2547
      %2549 = vdwg.mxu0
      %v2550 = vadd.f32 %v2380, %v2506
      %v2551 = vadd.f32 %v2381, %v2508
      %v2552 = vadd.f32 %v2382, %v2511
      %v2553 = vadd.f32 %v2383, %v2513
      %v2554 = vadd.f32 %v2384, %v2516
      %v2555 = vadd.f32 %v2385, %v2518
      %v2556 = vadd.f32 %v2386, %v2521
      %v2557 = vadd.f32 %v2387, %v2523
      %v2558 = vadd.f32 %v2388, %v2526
      %v2559 = vadd.f32 %v2389, %v2528
      %v2560 = vadd.f32 %v2390, %v2531
      %v2561 = vadd.f32 %v2391, %v2533
      %v2562 = vadd.f32 %v2392, %v2536
      %v2563 = vadd.f32 %v2393, %v2538
      %v2564 = vadd.f32 %v2394, %v2541
      %v2565 = vadd.f32 %v2395, %v2543
      %v2566 = vadd.f32 %v2396, %v2546
      %v2567 = vadd.f32 %v2397, %v2548
      %v2568 = vld [vmem:[#allocation2 + $0x10] sm:$0xc]
      %v2569 = vld [vmem:[#allocation2 + $0x14] sm:$0xf]
      %v2570 = vld [vmem:[#allocation2 + $0x18] sm:$0xf]
      %v2571 = vld [vmem:[#allocation2 + $0x1c] sm:$0xf]
      %v2572 = vld [vmem:[#allocation2 + $0x20] sm:$0xf]
      %v2573 = vld [vmem:[#allocation2 + $0x24] sm:$0xf]
      %v2574 = vld [vmem:[#allocation2 + $0x28] sm:$0xf]
      %v2575 = vld [vmem:[#allocation2 + $0x2c] sm:$0xf]
      %v2576 = vld [vmem:[#allocation2 + $0x30] sm:$0xf]
      %v2577 = vld [vmem:[#allocation2 + $0x34] sm:$0xf]
      %v2578 = vld [vmem:[#allocation2 + $0x38] sm:$0xf]
      %v2579 = vld [vmem:[#allocation2 + $0x3c] sm:$0xf]
      %v2580 = vld [vmem:[#allocation2 + $0x40] sm:$0xf]
      %v2581 = vld [vmem:[#allocation2 + $0x44] sm:$0xf]
      %v2582 = vld [vmem:[#allocation2 + $0x48] sm:$0xf]
      %v2583 = vld [vmem:[#allocation2 + $0x4c] sm:$0xf]
      %v2584 = vld [vmem:[#allocation2 + $0x50] sm:$0xf]
      %v2585 = vld [vmem:[#allocation2 + $0x54] sm:$0xf]
      %v2586 = vld [vmem:[#allocation2 + $0x58] sm:$0x3]
      %s2587 = scalar_lea.vmem %s2, 384
      %v2588 = vld [vmem:[%s2587] sm:$0xf]
      %v2589 = vld [vmem:[%s2587 + $0x4] sm:$0xf]
      %v2590 = vld [vmem:[%s2587 + $0x8] sm:$0xf]
      %v2591 = vld [vmem:[%s2587 + $0xc] sm:$0xf]
      %v2592 = vld [vmem:[%s2587 + $0x10] sm:$0xf]
      %v2593 = vld [vmem:[%s2587 + $0x14] sm:$0xf]
      %v2594 = vld [vmem:[%s2587 + $0x18] sm:$0xf]
      %v2595 = vld [vmem:[%s2587 + $0x1c] sm:$0xf]
      %v2596 = vld [vmem:[%s2587 + $0x20] sm:$0xf]
      %v2597 = vld [vmem:[%s2587 + $0x24] sm:$0xf]
      %v2598 = vld [vmem:[%s2587 + $0x28] sm:$0xf]
      %v2599 = vld [vmem:[%s2587 + $0x2c] sm:$0xf]
      %v2600 = vld [vmem:[%s2587 + $0x30] sm:$0xf]
      %v2601 = vld [vmem:[%s2587 + $0x34] sm:$0xf]
      %v2602 = vld [vmem:[%s2587 + $0x38] sm:$0xf]
      %v2603 = vld [vmem:[%s2587 + $0x3c] sm:$0xf]
      %v2623 = vunpack.c.l.b16 %v2568
      %v2624 = vunpack.c.l.b16 %v2569
      %v2625 = vunpack.c.l.b16 %v2570
      %v2626 = vunpack.c.l.b16 %v2571
      %v2627 = vunpack.c.l.b16 %v2572
      %v2628 = vunpack.c.l.b16 %v2573
      %v2629 = vunpack.c.l.b16 %v2574
      %v2630 = vunpack.c.l.b16 %v2575
      %v2631 = vunpack.c.l.b16 %v2576
      %v2632 = vunpack.c.l.b16 %v2577
      %v2633 = vunpack.c.l.b16 %v2578
      %v2634 = vunpack.c.l.b16 %v2579
      %v2635 = vunpack.c.l.b16 %v2580
      %v2636 = vunpack.c.l.b16 %v2581
      %v2637 = vunpack.c.l.b16 %v2582
      %v2638 = vunpack.c.l.b16 %v2583
      %v2639 = vunpack.c.l.b16 %v2584
      %v2640 = vunpack.c.l.b16 %v2585
      %v2641 = vunpack.c.l.b16 %v2586
      %v2642 = vpack.c.b16 %v2624, %v2623
      %v2643 = vpack.c.b16 %v2626, %v2625
      %v2644 = vpack.c.b16 %v2628, %v2627
      %v2645 = vpack.c.b16 %v2630, %v2629
      %v2646 = vpack.c.b16 %v2632, %v2631
      %v2647 = vpack.c.b16 %v2634, %v2633
      %v2648 = vpack.c.b16 %v2636, %v2635
      %v2649 = vpack.c.b16 %v2638, %v2637
      %v2650 = vpack.c.b16 %v2640, %v2639
      %v2651 = vpack.c.b16 %v2641, %v2641
      %v2652 = vrot.slane %v2642, 2
      %v2653 = vrot.slane %v2643, 2
      %v2654 = vsel %vm2419, %v2652, %v2653
      %v2655 = vrot.slane %v2644, 2
      %v2656 = vsel %vm2419, %v2653, %v2655
      %v2657 = vrot.slane %v2645, 2
      %v2658 = vsel %vm2419, %v2655, %v2657
      %v2659 = vrot.slane %v2646, 2
      %v2660 = vsel %vm2419, %v2657, %v2659
      %v2661 = vrot.slane %v2647, 2
      %v2662 = vsel %vm2419, %v2659, %v2661
      %v2663 = vrot.slane %v2648, 2
      %v2664 = vsel %vm2419, %v2661, %v2663
      %v2665 = vrot.slane %v2649, 2
      %v2666 = vsel %vm2419, %v2663, %v2665
      %v2667 = vrot.slane %v2650, 2
      %v2668 = vsel %vm2419, %v2665, %v2667
      %v2669 = vrot.slane %v2651, 2
      %v2670 = vsel %vm2419, %v2667, %v2669
      %v2696 = vunpack.c.l.b16 %v2588
      %v2697 = vunpack.c.l.b16 %v2589
      %v2698 = vunpack.c.l.b16 %v2590
      %v2699 = vunpack.c.l.b16 %v2591
      %v2700 = vunpack.c.l.b16 %v2592
      %v2701 = vunpack.c.l.b16 %v2593
      %v2702 = vunpack.c.l.b16 %v2594
      %v2703 = vunpack.c.l.b16 %v2595
      %v2704 = vunpack.c.l.b16 %v2596
      %v2705 = vunpack.c.l.b16 %v2597
      %v2706 = vunpack.c.l.b16 %v2598
      %v2707 = vunpack.c.l.b16 %v2599
      %v2708 = vunpack.c.l.b16 %v2600
      %v2709 = vunpack.c.l.b16 %v2601
      %v2710 = vunpack.c.l.b16 %v2602
      %v2711 = vunpack.c.l.b16 %v2603
      %v2712 = vpack.c.b16 %v2697, %v2696
      %v2713 = vpack.c.b16 %v2699, %v2698
      %v2714 = vpack.c.b16 %v2701, %v2700
      %v2715 = vpack.c.b16 %v2703, %v2702
      %v2716 = vpack.c.b16 %v2705, %v2704
      %v2717 = vpack.c.b16 %v2707, %v2706
      %v2718 = vpack.c.b16 %v2709, %v2708
      %v2719 = vpack.c.b16 %v2711, %v2710
      %2728 = vmatpush.bf16.msra.mxu0 %v2719
      %2729 = vmatpush.bf16.msra.mxu0 %v2718
      %2730 = vmatpush.bf16.msra.mxu0 %v2717
      %2731 = vmatpush.bf16.msra.mxu0 %v2716
      %2732 = vmatpush.bf16.msra.mxu0 %v2715
      %2733 = vmatpush.bf16.msra.mxu0 %v2714
      %2734 = vmatpush.bf16.msra.mxu0 %v2713
      %2735 = vmatpush.bf16.msra.mxu0 %v2712
      %2736 = vmatmul.bf16.gmra.mxu0 %v2654
      %v2737 = vpop.f32.mrf.mxu0
      %v2738 = vadd.f32 0.0, %v2737
      %v2739 = vpop.f32.mrf.mxu0
      %v2740 = vadd.f32 0.0, %v2739
      %2741 = vmatmul.bf16.gmra.mxu0 %v2656
      %v2742 = vpop.f32.mrf.mxu0
      %v2743 = vadd.f32 0.0, %v2742
      %v2744 = vpop.f32.mrf.mxu0
      %v2745 = vadd.f32 0.0, %v2744
      %2746 = vmatmul.bf16.gmra.mxu0 %v2658
      %v2747 = vpop.f32.mrf.mxu0
      %v2748 = vadd.f32 0.0, %v2747
      %v2749 = vpop.f32.mrf.mxu0
      %v2750 = vadd.f32 0.0, %v2749
      %2751 = vmatmul.bf16.gmra.mxu0 %v2660
      %v2752 = vpop.f32.mrf.mxu0
      %v2753 = vadd.f32 0.0, %v2752
      %v2754 = vpop.f32.mrf.mxu0
      %v2755 = vadd.f32 0.0, %v2754
      %2756 = vmatmul.bf16.gmra.mxu0 %v2662
      %v2757 = vpop.f32.mrf.mxu0
      %v2758 = vadd.f32 0.0, %v2757
      %v2759 = vpop.f32.mrf.mxu0
      %v2760 = vadd.f32 0.0, %v2759
      %2761 = vmatmul.bf16.gmra.mxu0 %v2664
      %v2762 = vpop.f32.mrf.mxu0
      %v2763 = vadd.f32 0.0, %v2762
      %v2764 = vpop.f32.mrf.mxu0
      %v2765 = vadd.f32 0.0, %v2764
      %2766 = vmatmul.bf16.gmra.mxu0 %v2666
      %v2767 = vpop.f32.mrf.mxu0
      %v2768 = vadd.f32 0.0, %v2767
      %v2769 = vpop.f32.mrf.mxu0
      %v2770 = vadd.f32 0.0, %v2769
      %2771 = vmatmul.bf16.gmra.mxu0 %v2668
      %v2772 = vpop.f32.mrf.mxu0
      %v2773 = vadd.f32 0.0, %v2772
      %v2774 = vpop.f32.mrf.mxu0
      %v2775 = vadd.f32 0.0, %v2774
      %2776 = vmatmul.bf16.gmra.mxu0 %v2670
      %v2777 = vpop.f32.mrf.mxu0
      %v2778 = vadd.f32 0.0, %v2777
      %v2779 = vpop.f32.mrf.mxu0
      %v2780 = vadd.f32 0.0, %v2779
      %2781 = vdwg.mxu0
      %v2782 = vadd.f32 %v2550, %v2738
      %v2783 = vadd.f32 %v2551, %v2740
      %v2784 = vadd.f32 %v2552, %v2743
      %v2785 = vadd.f32 %v2553, %v2745
      %v2786 = vadd.f32 %v2554, %v2748
      %v2787 = vadd.f32 %v2555, %v2750
      %v2788 = vadd.f32 %v2556, %v2753
      %v2789 = vadd.f32 %v2557, %v2755
      %v2790 = vadd.f32 %v2558, %v2758
      %v2791 = vadd.f32 %v2559, %v2760
      %v2792 = vadd.f32 %v2560, %v2763
      %v2793 = vadd.f32 %v2561, %v2765
      %v2794 = vadd.f32 %v2562, %v2768
      %v2795 = vadd.f32 %v2563, %v2770
      %v2796 = vadd.f32 %v2564, %v2773
      %v2797 = vadd.f32 %v2565, %v2775
      %v2798 = vadd.f32 %v2566, %v2778
      %v2799 = vadd.f32 %v2567, %v2780
      %v2800 = vld [vmem:[#allocation2 + $0x58] sm:$0x7]
      %s2801 = scalar_lea.vmem %s2, 448
      %v2802 = vld [vmem:[%s2801] sm:$0xf]
      %v2803 = vld [vmem:[%s2801 + $0x4] sm:$0xf]
      %v2804 = vld [vmem:[%s2801 + $0x8] sm:$0xf]
      %v2805 = vld [vmem:[%s2801 + $0xc] sm:$0xf]
      %v2806 = vld [vmem:[%s2801 + $0x10] sm:$0xf]
      %v2807 = vld [vmem:[%s2801 + $0x14] sm:$0xf]
      %v2808 = vld [vmem:[%s2801 + $0x18] sm:$0xf]
      %v2809 = vld [vmem:[%s2801 + $0x1c] sm:$0xf]
      %v2810 = vld [vmem:[%s2801 + $0x20] sm:$0xf]
      %v2811 = vld [vmem:[%s2801 + $0x24] sm:$0xf]
      %v2812 = vld [vmem:[%s2801 + $0x28] sm:$0xf]
      %v2813 = vld [vmem:[%s2801 + $0x2c] sm:$0xf]
      %v2814 = vld [vmem:[%s2801 + $0x30] sm:$0xf]
      %v2815 = vld [vmem:[%s2801 + $0x34] sm:$0xf]
      %v2816 = vld [vmem:[%s2801 + $0x38] sm:$0xf]
      %v2817 = vld [vmem:[%s2801 + $0x3c] sm:$0xf]
      %v2819 = vunpack.c.l.b16 %v2800
      %v2820 = vpack.c.b16 %v2819, %v2819
      %vm2821 = vsmask.f32 5376
      %v2823 = vshrl.u32 %v2642, 16
      %v2825 = vrot.slane %v2823, 2
      %v2826 = vshll.u32 %v2642, 16
      %v2828 = vrot.slane %v2826, 3
      %v2829 = vor.u32 %v2825, %v2828
      %v2831 = vshrl.u32 %v2643, 16
      %v2833 = vrot.slane %v2831, 2
      %v2834 = vshll.u32 %v2643, 16
      %v2836 = vrot.slane %v2834, 3
      %v2837 = vor.u32 %v2833, %v2836
      %v2838 = vsel %vm2821, %v2829, %v2837
      %v2840 = vshrl.u32 %v2644, 16
      %v2842 = vrot.slane %v2840, 2
      %v2843 = vshll.u32 %v2644, 16
      %v2845 = vrot.slane %v2843, 3
      %v2846 = vor.u32 %v2842, %v2845
      %v2847 = vsel %vm2821, %v2837, %v2846
      %v2849 = vshrl.u32 %v2645, 16
      %v2851 = vrot.slane %v2849, 2
      %v2852 = vshll.u32 %v2645, 16
      %v2854 = vrot.slane %v2852, 3
      %v2855 = vor.u32 %v2851, %v2854
      %v2856 = vsel %vm2821, %v2846, %v2855
      %v2858 = vshrl.u32 %v2646, 16
      %v2860 = vrot.slane %v2858, 2
      %v2861 = vshll.u32 %v2646, 16
      %v2863 = vrot.slane %v2861, 3
      %v2864 = vor.u32 %v2860, %v2863
      %v2865 = vsel %vm2821, %v2855, %v2864
      %v2867 = vshrl.u32 %v2647, 16
      %v2869 = vrot.slane %v2867, 2
      %v2870 = vshll.u32 %v2647, 16
      %v2872 = vrot.slane %v2870, 3
      %v2873 = vor.u32 %v2869, %v2872
      %v2874 = vsel %vm2821, %v2864, %v2873
      %v2876 = vshrl.u32 %v2648, 16
      %v2878 = vrot.slane %v2876, 2
      %v2879 = vshll.u32 %v2648, 16
      %v2881 = vrot.slane %v2879, 3
      %v2882 = vor.u32 %v2878, %v2881
      %v2883 = vsel %vm2821, %v2873, %v2882
      %v2885 = vshrl.u32 %v2649, 16
      %v2887 = vrot.slane %v2885, 2
      %v2888 = vshll.u32 %v2649, 16
      %v2890 = vrot.slane %v2888, 3
      %v2891 = vor.u32 %v2887, %v2890
      %v2892 = vsel %vm2821, %v2882, %v2891
      %v2894 = vshrl.u32 %v2650, 16
      %v2896 = vrot.slane %v2894, 2
      %v2897 = vshll.u32 %v2650, 16
      %v2899 = vrot.slane %v2897, 3
      %v2900 = vor.u32 %v2896, %v2899
      %v2901 = vsel %vm2821, %v2891, %v2900
      %v2903 = vshrl.u32 %v2820, 16
      %v2905 = vrot.slane %v2903, 2
      %v2906 = vshll.u32 %v2820, 16
      %v2908 = vrot.slane %v2906, 3
      %v2909 = vor.u32 %v2905, %v2908
      %v2910 = vsel %vm2821, %v2900, %v2909
      %v2936 = vunpack.c.l.b16 %v2802
      %v2937 = vunpack.c.l.b16 %v2803
      %v2938 = vunpack.c.l.b16 %v2804
      %v2939 = vunpack.c.l.b16 %v2805
      %v2940 = vunpack.c.l.b16 %v2806
      %v2941 = vunpack.c.l.b16 %v2807
      %v2942 = vunpack.c.l.b16 %v2808
      %v2943 = vunpack.c.l.b16 %v2809
      %v2944 = vunpack.c.l.b16 %v2810
      %v2945 = vunpack.c.l.b16 %v2811
      %v2946 = vunpack.c.l.b16 %v2812
      %v2947 = vunpack.c.l.b16 %v2813
      %v2948 = vunpack.c.l.b16 %v2814
      %v2949 = vunpack.c.l.b16 %v2815
      %v2950 = vunpack.c.l.b16 %v2816
      %v2951 = vunpack.c.l.b16 %v2817
      %v2952 = vpack.c.b16 %v2937, %v2936
      %v2953 = vpack.c.b16 %v2939, %v2938
      %v2954 = vpack.c.b16 %v2941, %v2940
      %v2955 = vpack.c.b16 %v2943, %v2942
      %v2956 = vpack.c.b16 %v2945, %v2944
      %v2957 = vpack.c.b16 %v2947, %v2946
      %v2958 = vpack.c.b16 %v2949, %v2948
      %v2959 = vpack.c.b16 %v2951, %v2950
      %2968 = vmatpush.bf16.msra.mxu0 %v2959
      %2969 = vmatpush.bf16.msra.mxu0 %v2958
      %2970 = vmatpush.bf16.msra.mxu0 %v2957
      %2971 = vmatpush.bf16.msra.mxu0 %v2956
      %2972 = vmatpush.bf16.msra.mxu0 %v2955
      %2973 = vmatpush.bf16.msra.mxu0 %v2954
      %2974 = vmatpush.bf16.msra.mxu0 %v2953
      %2975 = vmatpush.bf16.msra.mxu0 %v2952
      %2976 = vmatmul.bf16.gmra.mxu0 %v2838
      %v2977 = vpop.f32.mrf.mxu0
      %v2978 = vadd.f32 0.0, %v2977
      %v2979 = vpop.f32.mrf.mxu0
      %v2980 = vadd.f32 0.0, %v2979
      %2981 = vmatmul.bf16.gmra.mxu0 %v2847
      %v2982 = vpop.f32.mrf.mxu0
      %v2983 = vadd.f32 0.0, %v2982
      %v2984 = vpop.f32.mrf.mxu0
      %v2985 = vadd.f32 0.0, %v2984
      %2986 = vmatmul.bf16.gmra.mxu0 %v2856
      %v2987 = vpop.f32.mrf.mxu0
      %v2988 = vadd.f32 0.0, %v2987
      %v2989 = vpop.f32.mrf.mxu0
      %v2990 = vadd.f32 0.0, %v2989
      %2991 = vmatmul.bf16.gmra.mxu0 %v2865
      %v2992 = vpop.f32.mrf.mxu0
      %v2993 = vadd.f32 0.0, %v2992
      %v2994 = vpop.f32.mrf.mxu0
      %v2995 = vadd.f32 0.0, %v2994
      %2996 = vmatmul.bf16.gmra.mxu0 %v2874
      %v2997 = vpop.f32.mrf.mxu0
      %v2998 = vadd.f32 0.0, %v2997
      %v2999 = vpop.f32.mrf.mxu0
      %v3000 = vadd.f32 0.0, %v2999
      %3001 = vmatmul.bf16.gmra.mxu0 %v2883
      %v3002 = vpop.f32.mrf.mxu0
      %v3003 = vadd.f32 0.0, %v3002
      %v3004 = vpop.f32.mrf.mxu0
      %v3005 = vadd.f32 0.0, %v3004
      %3006 = vmatmul.bf16.gmra.mxu0 %v2892
      %v3007 = vpop.f32.mrf.mxu0
      %v3008 = vadd.f32 0.0, %v3007
      %v3009 = vpop.f32.mrf.mxu0
      %v3010 = vadd.f32 0.0, %v3009
      %3011 = vmatmul.bf16.gmra.mxu0 %v2901
      %v3012 = vpop.f32.mrf.mxu0
      %v3013 = vadd.f32 0.0, %v3012
      %v3014 = vpop.f32.mrf.mxu0
      %v3015 = vadd.f32 0.0, %v3014
      %3016 = vmatmul.bf16.gmra.mxu0 %v2910
      %v3017 = vpop.f32.mrf.mxu0
      %v3018 = vadd.f32 0.0, %v3017
      %v3019 = vpop.f32.mrf.mxu0
      %v3020 = vadd.f32 0.0, %v3019
      %3021 = vdwg.mxu0
      %v3022 = vadd.f32 %v2782, %v2978
      %v3023 = vadd.f32 %v2783, %v2980
      %v3024 = vadd.f32 %v2784, %v2983
      %v3025 = vadd.f32 %v2785, %v2985
      %v3026 = vadd.f32 %v2786, %v2988
      %v3027 = vadd.f32 %v2787, %v2990
      %v3028 = vadd.f32 %v2788, %v2993
      %v3029 = vadd.f32 %v2789, %v2995
      %v3030 = vadd.f32 %v2790, %v2998
      %v3031 = vadd.f32 %v2791, %v3000
      %v3032 = vadd.f32 %v2792, %v3003
      %v3033 = vadd.f32 %v2793, %v3005
      %v3034 = vadd.f32 %v2794, %v3008
      %v3035 = vadd.f32 %v2795, %v3010
      %v3036 = vadd.f32 %v2796, %v3013
      %v3037 = vadd.f32 %v2797, %v3015
      %v3038 = vadd.f32 %v2798, %v3018
      %v3039 = vadd.f32 %v2799, %v3020
      %v3040 = vld [vmem:[#allocation2 + $0x10] sm:$0x8]
      %s3041 = scalar_lea.vmem %s2, 512
      %v3042 = vld [vmem:[%s3041] sm:$0xf]
      %v3043 = vld [vmem:[%s3041 + $0x4] sm:$0xf]
      %v3044 = vld [vmem:[%s3041 + $0x8] sm:$0xf]
      %v3045 = vld [vmem:[%s3041 + $0xc] sm:$0xf]
      %v3046 = vld [vmem:[%s3041 + $0x10] sm:$0xf]
      %v3047 = vld [vmem:[%s3041 + $0x14] sm:$0xf]
      %v3048 = vld [vmem:[%s3041 + $0x18] sm:$0xf]
      %v3049 = vld [vmem:[%s3041 + $0x1c] sm:$0xf]
      %v3050 = vld [vmem:[%s3041 + $0x20] sm:$0xf]
      %v3051 = vld [vmem:[%s3041 + $0x24] sm:$0xf]
      %v3052 = vld [vmem:[%s3041 + $0x28] sm:$0xf]
      %v3053 = vld [vmem:[%s3041 + $0x2c] sm:$0xf]
      %v3054 = vld [vmem:[%s3041 + $0x30] sm:$0xf]
      %v3055 = vld [vmem:[%s3041 + $0x34] sm:$0xf]
      %v3056 = vld [vmem:[%s3041 + $0x38] sm:$0xf]
      %v3057 = vld [vmem:[%s3041 + $0x3c] sm:$0xf]
      %v3059 = vunpack.c.l.b16 %v3040
      %v3060 = vpack.c.b16 %v2624, %v3059
      %vm3061 = vcmask 1044480
      %v3062 = vrot.slane %v3060, 3
      %v3063 = vrot.slane %v2643, 3
      %v3064 = vsel %vm3061, %v3062, %v3063
      %v3065 = vrot.slane %v2644, 3
      %v3066 = vsel %vm3061, %v3063, %v3065
      %v3067 = vrot.slane %v2645, 3
      %v3068 = vsel %vm3061, %v3065, %v3067
      %v3069 = vrot.slane %v2646, 3
      %v3070 = vsel %vm3061, %v3067, %v3069
      %v3071 = vrot.slane %v2647, 3
      %v3072 = vsel %vm3061, %v3069, %v3071
      %v3073 = vrot.slane %v2648, 3
      %v3074 = vsel %vm3061, %v3071, %v3073
      %v3075 = vrot.slane %v2649, 3
      %v3076 = vsel %vm3061, %v3073, %v3075
      %v3077 = vrot.slane %v2650, 3
      %v3078 = vsel %vm3061, %v3075, %v3077
      %v3079 = vrot.slane %v2820, 3
      %v3080 = vsel %vm3061, %v3077, %v3079
      %v3106 = vunpack.c.l.b16 %v3042
      %v3107 = vunpack.c.l.b16 %v3043
      %v3108 = vunpack.c.l.b16 %v3044
      %v3109 = vunpack.c.l.b16 %v3045
      %v3110 = vunpack.c.l.b16 %v3046
      %v3111 = vunpack.c.l.b16 %v3047
      %v3112 = vunpack.c.l.b16 %v3048
      %v3113 = vunpack.c.l.b16 %v3049
      %v3114 = vunpack.c.l.b16 %v3050
      %v3115 = vunpack.c.l.b16 %v3051
      %v3116 = vunpack.c.l.b16 %v3052
      %v3117 = vunpack.c.l.b16 %v3053
      %v3118 = vunpack.c.l.b16 %v3054
      %v3119 = vunpack.c.l.b16 %v3055
      %v3120 = vunpack.c.l.b16 %v3056
      %v3121 = vunpack.c.l.b16 %v3057
      %v3122 = vpack.c.b16 %v3107, %v3106
      %v3123 = vpack.c.b16 %v3109, %v3108
      %v3124 = vpack.c.b16 %v3111, %v3110
      %v3125 = vpack.c.b16 %v3113, %v3112
      %v3126 = vpack.c.b16 %v3115, %v3114
      %v3127 = vpack.c.b16 %v3117, %v3116
      %v3128 = vpack.c.b16 %v3119, %v3118
      %v3129 = vpack.c.b16 %v3121, %v3120
      %3138 = vmatpush.bf16.msra.mxu0 %v3129
      %3139 = vmatpush.bf16.msra.mxu0 %v3128
      %3140 = vmatpush.bf16.msra.mxu0 %v3127
      %3141 = vmatpush.bf16.msra.mxu0 %v3126
      %3142 = vmatpush.bf16.msra.mxu0 %v3125
      %3143 = vmatpush.bf16.msra.mxu0 %v3124
      %3144 = vmatpush.bf16.msra.mxu0 %v3123
      %3145 = vmatpush.bf16.msra.mxu0 %v3122
      %3146 = vmatmul.bf16.gmra.mxu0 %v3064
      %v3147 = vpop.f32.mrf.mxu0
      %v3148 = vadd.f32 0.0, %v3147
      %v3149 = vpop.f32.mrf.mxu0
      %v3150 = vadd.f32 0.0, %v3149
      %3151 = vmatmul.bf16.gmra.mxu0 %v3066
      %v3152 = vpop.f32.mrf.mxu0
      %v3153 = vadd.f32 0.0, %v3152
      %v3154 = vpop.f32.mrf.mxu0
      %v3155 = vadd.f32 0.0, %v3154
      %3156 = vmatmul.bf16.gmra.mxu0 %v3068
      %v3157 = vpop.f32.mrf.mxu0
      %v3158 = vadd.f32 0.0, %v3157
      %v3159 = vpop.f32.mrf.mxu0
      %v3160 = vadd.f32 0.0, %v3159
      %3161 = vmatmul.bf16.gmra.mxu0 %v3070
      %v3162 = vpop.f32.mrf.mxu0
      %v3163 = vadd.f32 0.0, %v3162
      %v3164 = vpop.f32.mrf.mxu0
      %v3165 = vadd.f32 0.0, %v3164
      %3166 = vmatmul.bf16.gmra.mxu0 %v3072
      %v3167 = vpop.f32.mrf.mxu0
      %v3168 = vadd.f32 0.0, %v3167
      %v3169 = vpop.f32.mrf.mxu0
      %v3170 = vadd.f32 0.0, %v3169
      %3171 = vmatmul.bf16.gmra.mxu0 %v3074
      %v3172 = vpop.f32.mrf.mxu0
      %v3173 = vadd.f32 0.0, %v3172
      %v3174 = vpop.f32.mrf.mxu0
      %v3175 = vadd.f32 0.0, %v3174
      %3176 = vmatmul.bf16.gmra.mxu0 %v3076
      %v3177 = vpop.f32.mrf.mxu0
      %v3178 = vadd.f32 0.0, %v3177
      %v3179 = vpop.f32.mrf.mxu0
      %v3180 = vadd.f32 0.0, %v3179
      %3181 = vmatmul.bf16.gmra.mxu0 %v3078
      %v3182 = vpop.f32.mrf.mxu0
      %v3183 = vadd.f32 0.0, %v3182
      %v3184 = vpop.f32.mrf.mxu0
      %v3185 = vadd.f32 0.0, %v3184
      %3186 = vmatmul.bf16.gmra.mxu0 %v3080
      %v3187 = vpop.f32.mrf.mxu0
      %v3188 = vadd.f32 0.0, %v3187
      %v3189 = vpop.f32.mrf.mxu0
      %v3190 = vadd.f32 0.0, %v3189
      %3191 = vdwg.mxu0
      %v3192 = vadd.f32 %v3022, %v3148
      %v3193 = vadd.f32 %v3023, %v3150
      %v3194 = vadd.f32 %v3024, %v3153
      %v3195 = vadd.f32 %v3025, %v3155
      %v3196 = vadd.f32 %v3026, %v3158
      %v3197 = vadd.f32 %v3027, %v3160
      %v3198 = vadd.f32 %v3028, %v3163
      %v3199 = vadd.f32 %v3029, %v3165
      %v3200 = vadd.f32 %v3030, %v3168
      %v3201 = vadd.f32 %v3031, %v3170
      %v3202 = vadd.f32 %v3032, %v3173
      %v3203 = vadd.f32 %v3033, %v3175
      %v3204 = vadd.f32 %v3034, %v3178
      %v3205 = vadd.f32 %v3035, %v3180
      %v3206 = vadd.f32 %v3036, %v3183
      %v3207 = vadd.f32 %v3037, %v3185
      %v3208 = vadd.f32 %v3038, %v3188
      %v3209 = vadd.f32 %v3039, %v3190
      %v3210 = vld [vmem:[%s5] sm:$0x1]
      %v3212 = vperm.slane %v3210, 0
      %v3214 = vmul.f32 %v3192, %v3212
      %v3215 = vmul.f32 %v3193, %v3212
      %v3216 = vmul.f32 %v3194, %v3212
      %v3217 = vmul.f32 %v3195, %v3212
      %v3218 = vmul.f32 %v3196, %v3212
      %v3219 = vmul.f32 %v3197, %v3212
      %v3220 = vmul.f32 %v3198, %v3212
      %v3221 = vmul.f32 %v3199, %v3212
      %v3222 = vmul.f32 %v3200, %v3212
      %v3223 = vmul.f32 %v3201, %v3212
      %v3224 = vmul.f32 %v3202, %v3212
      %v3225 = vmul.f32 %v3203, %v3212
      %v3226 = vmul.f32 %v3204, %v3212
      %v3227 = vmul.f32 %v3205, %v3212
      %v3228 = vmul.f32 %v3206, %v3212
      %v3229 = vmul.f32 %v3207, %v3212
      %v3230 = vmul.f32 %v3208, %v3212
      %v3231 = vmul.f32 %v3209, %v3212
      %v3232 = vld [vmem:[%s6] sm:$0x1]
      %v3234 = vperm.slane %v3232, 0
      %v3236 = vadd.f32 %v3214, %v3234
      %v3237 = vadd.f32 %v3215, %v3234
      %v3238 = vadd.f32 %v3216, %v3234
      %v3239 = vadd.f32 %v3217, %v3234
      %v3240 = vadd.f32 %v3218, %v3234
      %v3241 = vadd.f32 %v3219, %v3234
      %v3242 = vadd.f32 %v3220, %v3234
      %v3243 = vadd.f32 %v3221, %v3234
      %v3244 = vadd.f32 %v3222, %v3234
      %v3245 = vadd.f32 %v3223, %v3234
      %v3246 = vadd.f32 %v3224, %v3234
      %v3247 = vadd.f32 %v3225, %v3234
      %v3248 = vadd.f32 %v3226, %v3234
      %v3249 = vadd.f32 %v3227, %v3234
      %v3250 = vadd.f32 %v3228, %v3234
      %v3251 = vadd.f32 %v3229, %v3234
      %v3252 = vadd.f32 %v3230, %v3234
      %v3253 = vadd.f32 %v3231, %v3234
      %vm3254 = vcmp.ge.f32.partialorder %v3236, 0.0
      %vm3255 = vcmp.ge.f32.partialorder %v3237, 0.0
      %vm3256 = vcmp.ge.f32.partialorder %v3238, 0.0
      %vm3257 = vcmp.ge.f32.partialorder %v3239, 0.0
      %vm3258 = vcmp.ge.f32.partialorder %v3240, 0.0
      %vm3259 = vcmp.ge.f32.partialorder %v3241, 0.0
      %vm3260 = vcmp.ge.f32.partialorder %v3242, 0.0
      %vm3261 = vcmp.ge.f32.partialorder %v3243, 0.0
      %vm3262 = vcmp.ge.f32.partialorder %v3244, 0.0
      %vm3263 = vcmp.ge.f32.partialorder %v3245, 0.0
      %vm3264 = vcmp.ge.f32.partialorder %v3246, 0.0
      %vm3265 = vcmp.ge.f32.partialorder %v3247, 0.0
      %vm3266 = vcmp.ge.f32.partialorder %v3248, 0.0
      %vm3267 = vcmp.ge.f32.partialorder %v3249, 0.0
      %vm3268 = vcmp.ge.f32.partialorder %v3250, 0.0
      %vm3269 = vcmp.ge.f32.partialorder %v3251, 0.0
      %vm3270 = vcmp.ge.f32.partialorder %v3252, 0.0
      %vm3271 = vcmp.ge.f32.partialorder %v3253, 0.0
      %v3272 = vmul.f32 %v3236, 0.1
      %v3273 = vmul.f32 %v3237, 0.1
      %v3274 = vmul.f32 %v3238, 0.1
      %v3275 = vmul.f32 %v3239, 0.1
      %v3276 = vmul.f32 %v3240, 0.1
      %v3277 = vmul.f32 %v3241, 0.1
      %v3278 = vmul.f32 %v3242, 0.1
      %v3279 = vmul.f32 %v3243, 0.1
      %v3280 = vmul.f32 %v3244, 0.1
      %v3281 = vmul.f32 %v3245, 0.1
      %v3282 = vmul.f32 %v3246, 0.1
      %v3283 = vmul.f32 %v3247, 0.1
      %v3284 = vmul.f32 %v3248, 0.1
      %v3285 = vmul.f32 %v3249, 0.1
      %v3286 = vmul.f32 %v3250, 0.1
      %v3287 = vmul.f32 %v3251, 0.1
      %v3288 = vmul.f32 %v3252, 0.1
      %v3289 = vmul.f32 %v3253, 0.1
      %v3290 = vsel %vm3254, %v3236, %v3272
      %v3291 = vsel %vm3255, %v3237, %v3273
      %v3292 = vsel %vm3256, %v3238, %v3274
      %v3293 = vsel %vm3257, %v3239, %v3275
      %v3294 = vsel %vm3258, %v3240, %v3276
      %v3295 = vsel %vm3259, %v3241, %v3277
      %v3296 = vsel %vm3260, %v3242, %v3278
      %v3297 = vsel %vm3261, %v3243, %v3279
      %v3298 = vsel %vm3262, %v3244, %v3280
      %v3299 = vsel %vm3263, %v3245, %v3281
      %v3300 = vsel %vm3264, %v3246, %v3282
      %v3301 = vsel %vm3265, %v3247, %v3283
      %v3302 = vsel %vm3266, %v3248, %v3284
      %v3303 = vsel %vm3267, %v3249, %v3285
      %v3304 = vsel %vm3268, %v3250, %v3286
      %v3305 = vsel %vm3269, %v3251, %v3287
      %v3306 = vsel %vm3270, %v3252, %v3288
      %v3307 = vsel %vm3271, %v3253, %v3289
      %v3308 = vunpack.c.l.bf16 %v1926
      %v3309 = vunpack.c.l.bf16 %v1927
      %v3310 = vunpack.c.l.bf16 %v1928
      %v3311 = vunpack.c.l.bf16 %v1929
      %v3312 = vunpack.c.l.bf16 %v1930
      %v3313 = vunpack.c.l.bf16 %v1931
      %v3314 = vunpack.c.l.bf16 %v1932
      %v3315 = vunpack.c.l.bf16 %v1933
      %v3316 = vunpack.c.l.bf16 %v1934
      %v3317 = vunpack.c.l.bf16 %v1935
      %v3318 = vunpack.c.l.bf16 %v1936
      %v3319 = vunpack.c.l.bf16 %v1937
      %v3320 = vunpack.c.l.bf16 %v1938
      %v3321 = vunpack.c.l.bf16 %v1939
      %v3322 = vunpack.c.l.bf16 %v1940
      %v3323 = vunpack.c.l.bf16 %v1941
      %v3324 = vunpack.c.l.bf16 %v1942
      %v3325 = vunpack.c.l.bf16 %v1943
      %v3326 = vunpack.c.l.bf16 %v2158
      %vm3346 = vcmask 1044480
      %v3347 = vrot.slane %v3308, 3
      %v3348 = vrot.slane %v3309, 3
      %v3349 = vsel %vm3346, %v3347, %v3348
      %v3350 = vrot.slane %v3310, 3
      %v3351 = vsel %vm3346, %v3348, %v3350
      %v3352 = vrot.slane %v3311, 3
      %v3353 = vsel %vm3346, %v3350, %v3352
      %v3354 = vrot.slane %v3312, 3
      %v3355 = vsel %vm3346, %v3352, %v3354
      %v3356 = vrot.slane %v3313, 3
      %v3357 = vsel %vm3346, %v3354, %v3356
      %v3358 = vrot.slane %v3314, 3
      %v3359 = vsel %vm3346, %v3356, %v3358
      %v3360 = vrot.slane %v3315, 3
      %v3361 = vsel %vm3346, %v3358, %v3360
      %v3362 = vrot.slane %v3316, 3
      %v3363 = vsel %vm3346, %v3360, %v3362
      %v3364 = vrot.slane %v3317, 3
      %v3365 = vsel %vm3346, %v3362, %v3364
      %v3366 = vrot.slane %v3318, 3
      %v3367 = vsel %vm3346, %v3364, %v3366
      %v3368 = vrot.slane %v3319, 3
      %v3369 = vsel %vm3346, %v3366, %v3368
      %v3370 = vrot.slane %v3320, 3
      %v3371 = vsel %vm3346, %v3368, %v3370
      %v3372 = vrot.slane %v3321, 3
      %v3373 = vsel %vm3346, %v3370, %v3372
      %v3374 = vrot.slane %v3322, 3
      %v3375 = vsel %vm3346, %v3372, %v3374
      %v3376 = vrot.slane %v3323, 3
      %v3377 = vsel %vm3346, %v3374, %v3376
      %v3378 = vrot.slane %v3324, 3
      %v3379 = vsel %vm3346, %v3376, %v3378
      %v3380 = vrot.slane %v3325, 3
      %v3381 = vsel %vm3346, %v3378, %v3380
      %v3382 = vrot.slane %v3326, 3
      %v3383 = vsel %vm3346, %v3380, %v3382
      %v3402 = vadd.f32 %v3290, %v3349
      %v3403 = vadd.f32 %v3291, %v3351
      %v3404 = vadd.f32 %v3292, %v3353
      %v3405 = vadd.f32 %v3293, %v3355
      %v3406 = vadd.f32 %v3294, %v3357
      %v3407 = vadd.f32 %v3295, %v3359
      %v3408 = vadd.f32 %v3296, %v3361
      %v3409 = vadd.f32 %v3297, %v3363
      %v3410 = vadd.f32 %v3298, %v3365
      %v3411 = vadd.f32 %v3299, %v3367
      %v3412 = vadd.f32 %v3300, %v3369
      %v3413 = vadd.f32 %v3301, %v3371
      %v3414 = vadd.f32 %v3302, %v3373
      %v3415 = vadd.f32 %v3303, %v3375
      %v3416 = vadd.f32 %v3304, %v3377
      %v3417 = vadd.f32 %v3305, %v3379
      %v3418 = vadd.f32 %v3306, %v3381
      %v3419 = vadd.f32 %v3307, %v3383
      %3420 = vst [vmem:[%s313] sm:$0xff] %v3402
      %3421 = vst [vmem:[%s313 + $0x8] sm:$0xff] %v3403
      %3422 = vst [vmem:[%s313 + $0x10] sm:$0xff] %v3404
      %3423 = vst [vmem:[%s313 + $0x18] sm:$0xff] %v3405
      %3424 = vst [vmem:[%s313 + $0x20] sm:$0xff] %v3406
      %3425 = vst [vmem:[%s313 + $0x28] sm:$0xff] %v3407
      %3426 = vst [vmem:[%s313 + $0x30] sm:$0xff] %v3408
      %3427 = vst [vmem:[%s313 + $0x38] sm:$0xff] %v3409
      %3428 = vst [vmem:[%s313 + $0x40] sm:$0xff] %v3410
      %3429 = vst [vmem:[%s313 + $0x48] sm:$0xff] %v3411
      %3430 = vst [vmem:[%s313 + $0x50] sm:$0xff] %v3412
      %3431 = vst [vmem:[%s313 + $0x58] sm:$0xff] %v3413
      %3432 = vst [vmem:[%s313 + $0x60] sm:$0xff] %v3414
      %3433 = vst [vmem:[%s313 + $0x68] sm:$0xff] %v3415
      %3434 = vst [vmem:[%s313 + $0x70] sm:$0xff] %v3416
      %3435 = vst [vmem:[%s313 + $0x78] sm:$0xff] %v3417
      %3436 = vst [vmem:[%s313 + $0x80] sm:$0xff] %v3418
      %3437 = vst [vmem:[%s313 + $0x88] sm:$0xff] %v3419
      %v3438 = vld [vmem:[#allocation2 + $0x48] sm:$0xf]
      %v3439 = vld [vmem:[#allocation2 + $0x4c] sm:$0xf]
      %v3440 = vld [vmem:[#allocation2 + $0x50] sm:$0xf]
      %v3441 = vld [vmem:[#allocation2 + $0x54] sm:$0xf]
      %v3442 = vld [vmem:[#allocation2 + $0x58] sm:$0xf]
      %v3443 = vld [vmem:[#allocation2 + $0x5c] sm:$0xf]
      %v3444 = vld [vmem:[#allocation2 + $0x60] sm:$0xf]
      %v3445 = vld [vmem:[#allocation2 + $0x64] sm:$0xf]
      %v3446 = vld [vmem:[#allocation2 + $0x68] sm:$0xf]
      %v3447 = vld [vmem:[#allocation2 + $0x6c] sm:$0xf]
      %v3448 = vld [vmem:[#allocation2 + $0x70] sm:$0xf]
      %v3449 = vld [vmem:[#allocation2 + $0x74] sm:$0xf]
      %v3450 = vld [vmem:[#allocation2 + $0x78] sm:$0xf]
      %v3451 = vld [vmem:[#allocation2 + $0x7c] sm:$0xf]
      %v3452 = vld [vmem:[#allocation2 + $0x80] sm:$0xf]
      %v3453 = vld [vmem:[#allocation2 + $0x84] sm:$0xf]
      %v3454 = vld [vmem:[#allocation2 + $0x88] sm:$0xf]
      %v3455 = vld [vmem:[#allocation2 + $0x8c] sm:$0xf]
      %v3456 = vld [vmem:[%s2] sm:$0xf]
      %v3457 = vld [vmem:[%s2 + $0x4] sm:$0xf]
      %v3458 = vld [vmem:[%s2 + $0x8] sm:$0xf]
      %v3459 = vld [vmem:[%s2 + $0xc] sm:$0xf]
      %v3460 = vld [vmem:[%s2 + $0x10] sm:$0xf]
      %v3461 = vld [vmem:[%s2 + $0x14] sm:$0xf]
      %v3462 = vld [vmem:[%s2 + $0x18] sm:$0xf]
      %v3463 = vld [vmem:[%s2 + $0x1c] sm:$0xf]
      %v3464 = vld [vmem:[%s2 + $0x20] sm:$0xf]
      %v3465 = vld [vmem:[%s2 + $0x24] sm:$0xf]
      %v3466 = vld [vmem:[%s2 + $0x28] sm:$0xf]
      %v3467 = vld [vmem:[%s2 + $0x2c] sm:$0xf]
      %v3468 = vld [vmem:[%s2 + $0x30] sm:$0xf]
      %v3469 = vld [vmem:[%s2 + $0x34] sm:$0xf]
      %v3470 = vld [vmem:[%s2 + $0x38] sm:$0xf]
      %v3471 = vld [vmem:[%s2 + $0x3c] sm:$0xf]
      %v3472 = vld [vmem:[#allocation2 + $0x90] sm:$0x1]
      %v3473 = vld [vmem:[%s1392] sm:$0xf]
      %v3474 = vld [vmem:[%s1392 + $0x4] sm:$0xf]
      %v3475 = vld [vmem:[%s1392 + $0x8] sm:$0xf]
      %v3476 = vld [vmem:[%s1392 + $0xc] sm:$0xf]
      %v3477 = vld [vmem:[%s1392 + $0x10] sm:$0xf]
      %v3478 = vld [vmem:[%s1392 + $0x14] sm:$0xf]
      %v3479 = vld [vmem:[%s1392 + $0x18] sm:$0xf]
      %v3480 = vld [vmem:[%s1392 + $0x1c] sm:$0xf]
      %v3481 = vld [vmem:[%s1392 + $0x20] sm:$0xf]
      %v3482 = vld [vmem:[%s1392 + $0x24] sm:$0xf]
      %v3483 = vld [vmem:[%s1392 + $0x28] sm:$0xf]
      %v3484 = vld [vmem:[%s1392 + $0x2c] sm:$0xf]
      %v3485 = vld [vmem:[%s1392 + $0x30] sm:$0xf]
      %v3486 = vld [vmem:[%s1392 + $0x34] sm:$0xf]
      %v3487 = vld [vmem:[%s1392 + $0x38] sm:$0xf]
      %v3488 = vld [vmem:[%s1392 + $0x3c] sm:$0xf]
      %v3508 = vunpack.c.l.b16 %v3438
      %v3509 = vunpack.c.l.b16 %v3439
      %v3510 = vunpack.c.l.b16 %v3440
      %v3511 = vunpack.c.l.b16 %v3441
      %v3512 = vunpack.c.l.b16 %v3442
      %v3513 = vunpack.c.l.b16 %v3443
      %v3514 = vunpack.c.l.b16 %v3444
      %v3515 = vunpack.c.l.b16 %v3445
      %v3516 = vunpack.c.l.b16 %v3446
      %v3517 = vunpack.c.l.b16 %v3447
      %v3518 = vunpack.c.l.b16 %v3448
      %v3519 = vunpack.c.l.b16 %v3449
      %v3520 = vunpack.c.l.b16 %v3450
      %v3521 = vunpack.c.l.b16 %v3451
      %v3522 = vunpack.c.l.b16 %v3452
      %v3523 = vunpack.c.l.b16 %v3453
      %v3524 = vunpack.c.l.b16 %v3454
      %v3525 = vunpack.c.l.b16 %v3455
      %v3526 = vunpack.c.l.b16 %v3472
      %v3527 = vpack.c.b16 %v3509, %v3508
      %v3528 = vpack.c.b16 %v3511, %v3510
      %v3529 = vpack.c.b16 %v3513, %v3512
      %v3530 = vpack.c.b16 %v3515, %v3514
      %v3531 = vpack.c.b16 %v3517, %v3516
      %v3532 = vpack.c.b16 %v3519, %v3518
      %v3533 = vpack.c.b16 %v3521, %v3520
      %v3534 = vpack.c.b16 %v3523, %v3522
      %v3535 = vpack.c.b16 %v3525, %v3524
      %v3536 = vpack.c.b16 %v3526, %v3526
      %v3538 = vshrl.u32 %v3527, 16
      %v3540 = vshll.u32 %v3527, 16
      %v3542 = vrot.slane %v3540, 1
      %v3543 = vor.u32 %v3538, %v3542
      %v3545 = vshll.u32 %v3528, 16
      %v3547 = vrot.slane %v3545, 1
      %v3548 = vsel %vm1457, %v3543, %v3547
      %v3549 = vshrl.u32 %v3528, 16
      %v3551 = vor.u32 %v3549, %v3547
      %v3553 = vshll.u32 %v3529, 16
      %v3555 = vrot.slane %v3553, 1
      %v3556 = vsel %vm1457, %v3551, %v3555
      %v3557 = vshrl.u32 %v3529, 16
      %v3559 = vor.u32 %v3557, %v3555
      %v3561 = vshll.u32 %v3530, 16
      %v3563 = vrot.slane %v3561, 1
      %v3564 = vsel %vm1457, %v3559, %v3563
      %v3565 = vshrl.u32 %v3530, 16
      %v3567 = vor.u32 %v3565, %v3563
      %v3569 = vshll.u32 %v3531, 16
      %v3571 = vrot.slane %v3569, 1
      %v3572 = vsel %vm1457, %v3567, %v3571
      %v3573 = vshrl.u32 %v3531, 16
      %v3575 = vor.u32 %v3573, %v3571
      %v3577 = vshll.u32 %v3532, 16
      %v3579 = vrot.slane %v3577, 1
      %v3580 = vsel %vm1457, %v3575, %v3579
      %v3581 = vshrl.u32 %v3532, 16
      %v3583 = vor.u32 %v3581, %v3579
      %v3585 = vshll.u32 %v3533, 16
      %v3587 = vrot.slane %v3585, 1
      %v3588 = vsel %vm1457, %v3583, %v3587
      %v3589 = vshrl.u32 %v3533, 16
      %v3591 = vor.u32 %v3589, %v3587
      %v3593 = vshll.u32 %v3534, 16
      %v3595 = vrot.slane %v3593, 1
      %v3596 = vsel %vm1457, %v3591, %v3595
      %v3597 = vshrl.u32 %v3534, 16
      %v3599 = vor.u32 %v3597, %v3595
      %v3601 = vshll.u32 %v3535, 16
      %v3603 = vrot.slane %v3601, 1
      %v3604 = vsel %vm1457, %v3599, %v3603
      %v3605 = vshrl.u32 %v3535, 16
      %v3607 = vor.u32 %v3605, %v3603
      %v3609 = vshll.u32 %v3536, 16
      %v3611 = vrot.slane %v3609, 1
      %v3612 = vsel %vm1457, %v3607, %v3611
      %v3638 = vunpack.c.l.b16 %v3473
      %v3639 = vunpack.c.l.b16 %v3474
      %v3640 = vunpack.c.l.b16 %v3475
      %v3641 = vunpack.c.l.b16 %v3476
      %v3642 = vunpack.c.l.b16 %v3477
      %v3643 = vunpack.c.l.b16 %v3478
      %v3644 = vunpack.c.l.b16 %v3479
      %v3645 = vunpack.c.l.b16 %v3480
      %v3646 = vunpack.c.l.b16 %v3481
      %v3647 = vunpack.c.l.b16 %v3482
      %v3648 = vunpack.c.l.b16 %v3483
      %v3649 = vunpack.c.l.b16 %v3484
      %v3650 = vunpack.c.l.b16 %v3485
      %v3651 = vunpack.c.l.b16 %v3486
      %v3652 = vunpack.c.l.b16 %v3487
      %v3653 = vunpack.c.l.b16 %v3488
      %v3654 = vpack.c.b16 %v3639, %v3638
      %v3655 = vpack.c.b16 %v3641, %v3640
      %v3656 = vpack.c.b16 %v3643, %v3642
      %v3657 = vpack.c.b16 %v3645, %v3644
      %v3658 = vpack.c.b16 %v3647, %v3646
      %v3659 = vpack.c.b16 %v3649, %v3648
      %v3660 = vpack.c.b16 %v3651, %v3650
      %v3661 = vpack.c.b16 %v3653, %v3652
      %3670 = vmatpush.bf16.msra.mxu0 %v3661
      %3671 = vmatpush.bf16.msra.mxu0 %v3660
      %3672 = vmatpush.bf16.msra.mxu0 %v3659
      %3673 = vmatpush.bf16.msra.mxu0 %v3658
      %3674 = vmatpush.bf16.msra.mxu0 %v3657
      %3675 = vmatpush.bf16.msra.mxu0 %v3656
      %3676 = vmatpush.bf16.msra.mxu0 %v3655
      %3677 = vmatpush.bf16.msra.mxu0 %v3654
      %3678 = vmatmul.bf16.gmra.mxu0 %v3548
      %v3679 = vpop.f32.mrf.mxu0
      %v3680 = vadd.f32 0.0, %v3679
      %v3681 = vpop.f32.mrf.mxu0
      %v3682 = vadd.f32 0.0, %v3681
      %3683 = vmatmul.bf16.gmra.mxu0 %v3556
      %v3684 = vpop.f32.mrf.mxu0
      %v3685 = vadd.f32 0.0, %v3684
      %v3686 = vpop.f32.mrf.mxu0
      %v3687 = vadd.f32 0.0, %v3686
      %3688 = vmatmul.bf16.gmra.mxu0 %v3564
      %v3689 = vpop.f32.mrf.mxu0
      %v3690 = vadd.f32 0.0, %v3689
      %v3691 = vpop.f32.mrf.mxu0
      %v3692 = vadd.f32 0.0, %v3691
      %3693 = vmatmul.bf16.gmra.mxu0 %v3572
      %v3694 = vpop.f32.mrf.mxu0
      %v3695 = vadd.f32 0.0, %v3694
      %v3696 = vpop.f32.mrf.mxu0
      %v3697 = vadd.f32 0.0, %v3696
      %3698 = vmatmul.bf16.gmra.mxu0 %v3580
      %v3699 = vpop.f32.mrf.mxu0
      %v3700 = vadd.f32 0.0, %v3699
      %v3701 = vpop.f32.mrf.mxu0
      %v3702 = vadd.f32 0.0, %v3701
      %3703 = vmatmul.bf16.gmra.mxu0 %v3588
      %v3704 = vpop.f32.mrf.mxu0
      %v3705 = vadd.f32 0.0, %v3704
      %v3706 = vpop.f32.mrf.mxu0
      %v3707 = vadd.f32 0.0, %v3706
      %3708 = vmatmul.bf16.gmra.mxu0 %v3596
      %v3709 = vpop.f32.mrf.mxu0
      %v3710 = vadd.f32 0.0, %v3709
      %v3711 = vpop.f32.mrf.mxu0
      %v3712 = vadd.f32 0.0, %v3711
      %3713 = vmatmul.bf16.gmra.mxu0 %v3604
      %v3714 = vpop.f32.mrf.mxu0
      %v3715 = vadd.f32 0.0, %v3714
      %v3716 = vpop.f32.mrf.mxu0
      %v3717 = vadd.f32 0.0, %v3716
      %3718 = vmatmul.bf16.gmra.mxu0 %v3612
      %v3719 = vpop.f32.mrf.mxu0
      %v3720 = vadd.f32 0.0, %v3719
      %v3721 = vpop.f32.mrf.mxu0
      %v3722 = vadd.f32 0.0, %v3721
      %3723 = vdwg.mxu0
      %v3749 = vunpack.c.l.b16 %v3456
      %v3750 = vunpack.c.l.b16 %v3457
      %v3751 = vunpack.c.l.b16 %v3458
      %v3752 = vunpack.c.l.b16 %v3459
      %v3753 = vunpack.c.l.b16 %v3460
      %v3754 = vunpack.c.l.b16 %v3461
      %v3755 = vunpack.c.l.b16 %v3462
      %v3756 = vunpack.c.l.b16 %v3463
      %v3757 = vunpack.c.l.b16 %v3464
      %v3758 = vunpack.c.l.b16 %v3465
      %v3759 = vunpack.c.l.b16 %v3466
      %v3760 = vunpack.c.l.b16 %v3467
      %v3761 = vunpack.c.l.b16 %v3468
      %v3762 = vunpack.c.l.b16 %v3469
      %v3763 = vunpack.c.l.b16 %v3470
      %v3764 = vunpack.c.l.b16 %v3471
      %v3765 = vpack.c.b16 %v3750, %v3749
      %v3766 = vpack.c.b16 %v3752, %v3751
      %v3767 = vpack.c.b16 %v3754, %v3753
      %v3768 = vpack.c.b16 %v3756, %v3755
      %v3769 = vpack.c.b16 %v3758, %v3757
      %v3770 = vpack.c.b16 %v3760, %v3759
      %v3771 = vpack.c.b16 %v3762, %v3761
      %v3772 = vpack.c.b16 %v3764, %v3763
      %3781 = vmatpush.bf16.msra.mxu0 %v3772
      %3782 = vmatpush.bf16.msra.mxu0 %v3771
      %3783 = vmatpush.bf16.msra.mxu0 %v3770
      %3784 = vmatpush.bf16.msra.mxu0 %v3769
      %3785 = vmatpush.bf16.msra.mxu0 %v3768
      %3786 = vmatpush.bf16.msra.mxu0 %v3767
      %3787 = vmatpush.bf16.msra.mxu0 %v3766
      %3788 = vmatpush.bf16.msra.mxu0 %v3765
      %3789 = vmatmul.bf16.gmra.mxu0 %v3527
      %v3790 = vpop.f32.mrf.mxu0
      %v3791 = vadd.f32 %v3680, %v3790
      %v3792 = vpop.f32.mrf.mxu0
      %v3793 = vadd.f32 %v3682, %v3792
      %3794 = vmatmul.bf16.gmra.mxu0 %v3528
      %v3795 = vpop.f32.mrf.mxu0
      %v3796 = vadd.f32 %v3685, %v3795
      %v3797 = vpop.f32.mrf.mxu0
      %v3798 = vadd.f32 %v3687, %v3797
      %3799 = vmatmul.bf16.gmra.mxu0 %v3529
      %v3800 = vpop.f32.mrf.mxu0
      %v3801 = vadd.f32 %v3690, %v3800
      %v3802 = vpop.f32.mrf.mxu0
      %v3803 = vadd.f32 %v3692, %v3802
      %3804 = vmatmul.bf16.gmra.mxu0 %v3530
      %v3805 = vpop.f32.mrf.mxu0
      %v3806 = vadd.f32 %v3695, %v3805
      %v3807 = vpop.f32.mrf.mxu0
      %v3808 = vadd.f32 %v3697, %v3807
      %3809 = vmatmul.bf16.gmra.mxu0 %v3531
      %v3810 = vpop.f32.mrf.mxu0
      %v3811 = vadd.f32 %v3700, %v3810
      %v3812 = vpop.f32.mrf.mxu0
      %v3813 = vadd.f32 %v3702, %v3812
      %3814 = vmatmul.bf16.gmra.mxu0 %v3532
      %v3815 = vpop.f32.mrf.mxu0
      %v3816 = vadd.f32 %v3705, %v3815
      %v3817 = vpop.f32.mrf.mxu0
      %v3818 = vadd.f32 %v3707, %v3817
      %3819 = vmatmul.bf16.gmra.mxu0 %v3533
      %v3820 = vpop.f32.mrf.mxu0
      %v3821 = vadd.f32 %v3710, %v3820
      %v3822 = vpop.f32.mrf.mxu0
      %v3823 = vadd.f32 %v3712, %v3822
      %3824 = vmatmul.bf16.gmra.mxu0 %v3534
      %v3825 = vpop.f32.mrf.mxu0
      %v3826 = vadd.f32 %v3715, %v3825
      %v3827 = vpop.f32.mrf.mxu0
      %v3828 = vadd.f32 %v3717, %v3827
      %3829 = vmatmul.bf16.gmra.mxu0 %v3535
      %v3830 = vpop.f32.mrf.mxu0
      %v3831 = vadd.f32 %v3720, %v3830
      %v3832 = vpop.f32.mrf.mxu0
      %v3833 = vadd.f32 %v3722, %v3832
      %3834 = vdwg.mxu0
      %v3835 = vld [vmem:[#allocation2 + $0x48] sm:$0xe]
      %v3836 = vld [vmem:[%s1757] sm:$0xf]
      %v3837 = vld [vmem:[%s1757 + $0x4] sm:$0xf]
      %v3838 = vld [vmem:[%s1757 + $0x8] sm:$0xf]
      %v3839 = vld [vmem:[%s1757 + $0xc] sm:$0xf]
      %v3840 = vld [vmem:[%s1757 + $0x10] sm:$0xf]
      %v3841 = vld [vmem:[%s1757 + $0x14] sm:$0xf]
      %v3842 = vld [vmem:[%s1757 + $0x18] sm:$0xf]
      %v3843 = vld [vmem:[%s1757 + $0x1c] sm:$0xf]
      %v3844 = vld [vmem:[%s1757 + $0x20] sm:$0xf]
      %v3845 = vld [vmem:[%s1757 + $0x24] sm:$0xf]
      %v3846 = vld [vmem:[%s1757 + $0x28] sm:$0xf]
      %v3847 = vld [vmem:[%s1757 + $0x2c] sm:$0xf]
      %v3848 = vld [vmem:[%s1757 + $0x30] sm:$0xf]
      %v3849 = vld [vmem:[%s1757 + $0x34] sm:$0xf]
      %v3850 = vld [vmem:[%s1757 + $0x38] sm:$0xf]
      %v3851 = vld [vmem:[%s1757 + $0x3c] sm:$0xf]
      %v3853 = vunpack.c.l.b16 %v3835
      %v3854 = vpack.c.b16 %v3509, %v3853
      %v3855 = vrot.slane %v3854, 1
      %v3856 = vrot.slane %v3528, 1
      %v3857 = vsel %vm1777, %v3855, %v3856
      %v3858 = vrot.slane %v3529, 1
      %v3859 = vsel %vm1777, %v3856, %v3858
      %v3860 = vrot.slane %v3530, 1
      %v3861 = vsel %vm1777, %v3858, %v3860
      %v3862 = vrot.slane %v3531, 1
      %v3863 = vsel %vm1777, %v3860, %v3862
      %v3864 = vrot.slane %v3532, 1
      %v3865 = vsel %vm1777, %v3862, %v3864
      %v3866 = vrot.slane %v3533, 1
      %v3867 = vsel %vm1777, %v3864, %v3866
      %v3868 = vrot.slane %v3534, 1
      %v3869 = vsel %vm1777, %v3866, %v3868
      %v3870 = vrot.slane %v3535, 1
      %v3871 = vsel %vm1777, %v3868, %v3870
      %v3872 = vrot.slane %v3536, 1
      %v3873 = vsel %vm1777, %v3870, %v3872
      %v3899 = vunpack.c.l.b16 %v3836
      %v3900 = vunpack.c.l.b16 %v3837
      %v3901 = vunpack.c.l.b16 %v3838
      %v3902 = vunpack.c.l.b16 %v3839
      %v3903 = vunpack.c.l.b16 %v3840
      %v3904 = vunpack.c.l.b16 %v3841
      %v3905 = vunpack.c.l.b16 %v3842
      %v3906 = vunpack.c.l.b16 %v3843
      %v3907 = vunpack.c.l.b16 %v3844
      %v3908 = vunpack.c.l.b16 %v3845
      %v3909 = vunpack.c.l.b16 %v3846
      %v3910 = vunpack.c.l.b16 %v3847
      %v3911 = vunpack.c.l.b16 %v3848
      %v3912 = vunpack.c.l.b16 %v3849
      %v3913 = vunpack.c.l.b16 %v3850
      %v3914 = vunpack.c.l.b16 %v3851
      %v3915 = vpack.c.b16 %v3900, %v3899
      %v3916 = vpack.c.b16 %v3902, %v3901
      %v3917 = vpack.c.b16 %v3904, %v3903
      %v3918 = vpack.c.b16 %v3906, %v3905
      %v3919 = vpack.c.b16 %v3908, %v3907
      %v3920 = vpack.c.b16 %v3910, %v3909
      %v3921 = vpack.c.b16 %v3912, %v3911
      %v3922 = vpack.c.b16 %v3914, %v3913
      %3931 = vmatpush.bf16.msra.mxu0 %v3922
      %3932 = vmatpush.bf16.msra.mxu0 %v3921
      %3933 = vmatpush.bf16.msra.mxu0 %v3920
      %3934 = vmatpush.bf16.msra.mxu0 %v3919
      %3935 = vmatpush.bf16.msra.mxu0 %v3918
      %3936 = vmatpush.bf16.msra.mxu0 %v3917
      %3937 = vmatpush.bf16.msra.mxu0 %v3916
      %3938 = vmatpush.bf16.msra.mxu0 %v3915
      %3939 = vmatmul.bf16.gmra.mxu0 %v3857
      %v3940 = vpop.f32.mrf.mxu0
      %v3941 = vadd.f32 0.0, %v3940
      %v3942 = vpop.f32.mrf.mxu0
      %v3943 = vadd.f32 0.0, %v3942
      %3944 = vmatmul.bf16.gmra.mxu0 %v3859
      %v3945 = vpop.f32.mrf.mxu0
      %v3946 = vadd.f32 0.0, %v3945
      %v3947 = vpop.f32.mrf.mxu0
      %v3948 = vadd.f32 0.0, %v3947
      %3949 = vmatmul.bf16.gmra.mxu0 %v3861
      %v3950 = vpop.f32.mrf.mxu0
      %v3951 = vadd.f32 0.0, %v3950
      %v3952 = vpop.f32.mrf.mxu0
      %v3953 = vadd.f32 0.0, %v3952
      %3954 = vmatmul.bf16.gmra.mxu0 %v3863
      %v3955 = vpop.f32.mrf.mxu0
      %v3956 = vadd.f32 0.0, %v3955
      %v3957 = vpop.f32.mrf.mxu0
      %v3958 = vadd.f32 0.0, %v3957
      %3959 = vmatmul.bf16.gmra.mxu0 %v3865
      %v3960 = vpop.f32.mrf.mxu0
      %v3961 = vadd.f32 0.0, %v3960
      %v3962 = vpop.f32.mrf.mxu0
      %v3963 = vadd.f32 0.0, %v3962
      %3964 = vmatmul.bf16.gmra.mxu0 %v3867
      %v3965 = vpop.f32.mrf.mxu0
      %v3966 = vadd.f32 0.0, %v3965
      %v3967 = vpop.f32.mrf.mxu0
      %v3968 = vadd.f32 0.0, %v3967
      %3969 = vmatmul.bf16.gmra.mxu0 %v3869
      %v3970 = vpop.f32.mrf.mxu0
      %v3971 = vadd.f32 0.0, %v3970
      %v3972 = vpop.f32.mrf.mxu0
      %v3973 = vadd.f32 0.0, %v3972
      %3974 = vmatmul.bf16.gmra.mxu0 %v3871
      %v3975 = vpop.f32.mrf.mxu0
      %v3976 = vadd.f32 0.0, %v3975
      %v3977 = vpop.f32.mrf.mxu0
      %v3978 = vadd.f32 0.0, %v3977
      %3979 = vmatmul.bf16.gmra.mxu0 %v3873
      %v3980 = vpop.f32.mrf.mxu0
      %v3981 = vadd.f32 0.0, %v3980
      %v3982 = vpop.f32.mrf.mxu0
      %v3983 = vadd.f32 0.0, %v3982
      %3984 = vdwg.mxu0
      %v3985 = vadd.f32 %v3791, %v3941
      %v3986 = vadd.f32 %v3793, %v3943
      %v3987 = vadd.f32 %v3796, %v3946
      %v3988 = vadd.f32 %v3798, %v3948
      %v3989 = vadd.f32 %v3801, %v3951
      %v3990 = vadd.f32 %v3803, %v3953
      %v3991 = vadd.f32 %v3806, %v3956
      %v3992 = vadd.f32 %v3808, %v3958
      %v3993 = vadd.f32 %v3811, %v3961
      %v3994 = vadd.f32 %v3813, %v3963
      %v3995 = vadd.f32 %v3816, %v3966
      %v3996 = vadd.f32 %v3818, %v3968
      %v3997 = vadd.f32 %v3821, %v3971
      %v3998 = vadd.f32 %v3823, %v3973
      %v3999 = vadd.f32 %v3826, %v3976
      %v4000 = vadd.f32 %v3828, %v3978
      %v4001 = vadd.f32 %v3831, %v3981
      %v4002 = vadd.f32 %v3833, %v3983
      %v4003 = vld [vmem:[#allocation2 + $0x50] sm:$0xe]
      %v4004 = vld [vmem:[#allocation2 + $0x54] sm:$0xf]
      %v4005 = vld [vmem:[#allocation2 + $0x58] sm:$0xf]
      %v4006 = vld [vmem:[#allocation2 + $0x5c] sm:$0xf]
      %v4007 = vld [vmem:[#allocation2 + $0x60] sm:$0xf]
      %v4008 = vld [vmem:[#allocation2 + $0x64] sm:$0xf]
      %v4009 = vld [vmem:[#allocation2 + $0x68] sm:$0xf]
      %v4010 = vld [vmem:[#allocation2 + $0x6c] sm:$0xf]
      %v4011 = vld [vmem:[#allocation2 + $0x70] sm:$0xf]
      %v4012 = vld [vmem:[#allocation2 + $0x74] sm:$0xf]
      %v4013 = vld [vmem:[#allocation2 + $0x78] sm:$0xf]
      %v4014 = vld [vmem:[#allocation2 + $0x7c] sm:$0xf]
      %v4015 = vld [vmem:[#allocation2 + $0x80] sm:$0xf]
      %v4016 = vld [vmem:[#allocation2 + $0x84] sm:$0xf]
      %v4017 = vld [vmem:[#allocation2 + $0x88] sm:$0xf]
      %v4018 = vld [vmem:[#allocation2 + $0x8c] sm:$0xf]
      %v4019 = vld [vmem:[#allocation2 + $0x90] sm:$0xf]
      %v4020 = vld [vmem:[#allocation2 + $0x94] sm:$0xf]
      %v4021 = vld [vmem:[#allocation2 + $0x98] sm:$0x1]
      %v4022 = vld [vmem:[%s1945] sm:$0xf]
      %v4023 = vld [vmem:[%s1945 + $0x4] sm:$0xf]
      %v4024 = vld [vmem:[%s1945 + $0x8] sm:$0xf]
      %v4025 = vld [vmem:[%s1945 + $0xc] sm:$0xf]
      %v4026 = vld [vmem:[%s1945 + $0x10] sm:$0xf]
      %v4027 = vld [vmem:[%s1945 + $0x14] sm:$0xf]
      %v4028 = vld [vmem:[%s1945 + $0x18] sm:$0xf]
      %v4029 = vld [vmem:[%s1945 + $0x1c] sm:$0xf]
      %v4030 = vld [vmem:[%s1945 + $0x20] sm:$0xf]
      %v4031 = vld [vmem:[%s1945 + $0x24] sm:$0xf]
      %v4032 = vld [vmem:[%s1945 + $0x28] sm:$0xf]
      %v4033 = vld [vmem:[%s1945 + $0x2c] sm:$0xf]
      %v4034 = vld [vmem:[%s1945 + $0x30] sm:$0xf]
      %v4035 = vld [vmem:[%s1945 + $0x34] sm:$0xf]
      %v4036 = vld [vmem:[%s1945 + $0x38] sm:$0xf]
      %v4037 = vld [vmem:[%s1945 + $0x3c] sm:$0xf]
      %v4057 = vunpack.c.l.b16 %v4003
      %v4058 = vunpack.c.l.b16 %v4004
      %v4059 = vunpack.c.l.b16 %v4005
      %v4060 = vunpack.c.l.b16 %v4006
      %v4061 = vunpack.c.l.b16 %v4007
      %v4062 = vunpack.c.l.b16 %v4008
      %v4063 = vunpack.c.l.b16 %v4009
      %v4064 = vunpack.c.l.b16 %v4010
      %v4065 = vunpack.c.l.b16 %v4011
      %v4066 = vunpack.c.l.b16 %v4012
      %v4067 = vunpack.c.l.b16 %v4013
      %v4068 = vunpack.c.l.b16 %v4014
      %v4069 = vunpack.c.l.b16 %v4015
      %v4070 = vunpack.c.l.b16 %v4016
      %v4071 = vunpack.c.l.b16 %v4017
      %v4072 = vunpack.c.l.b16 %v4018
      %v4073 = vunpack.c.l.b16 %v4019
      %v4074 = vunpack.c.l.b16 %v4020
      %v4075 = vunpack.c.l.b16 %v4021
      %v4076 = vpack.c.b16 %v4058, %v4057
      %v4077 = vpack.c.b16 %v4060, %v4059
      %v4078 = vpack.c.b16 %v4062, %v4061
      %v4079 = vpack.c.b16 %v4064, %v4063
      %v4080 = vpack.c.b16 %v4066, %v4065
      %v4081 = vpack.c.b16 %v4068, %v4067
      %v4082 = vpack.c.b16 %v4070, %v4069
      %v4083 = vpack.c.b16 %v4072, %v4071
      %v4084 = vpack.c.b16 %v4074, %v4073
      %v4085 = vpack.c.b16 %v4075, %v4075
      %v4086 = vrot.slane %v4076, 1
      %v4087 = vrot.slane %v4077, 1
      %v4088 = vsel %vm1777, %v4086, %v4087
      %v4089 = vrot.slane %v4078, 1
      %v4090 = vsel %vm1777, %v4087, %v4089
      %v4091 = vrot.slane %v4079, 1
      %v4092 = vsel %vm1777, %v4089, %v4091
      %v4093 = vrot.slane %v4080, 1
      %v4094 = vsel %vm1777, %v4091, %v4093
      %v4095 = vrot.slane %v4081, 1
      %v4096 = vsel %vm1777, %v4093, %v4095
      %v4097 = vrot.slane %v4082, 1
      %v4098 = vsel %vm1777, %v4095, %v4097
      %v4099 = vrot.slane %v4083, 1
      %v4100 = vsel %vm1777, %v4097, %v4099
      %v4101 = vrot.slane %v4084, 1
      %v4102 = vsel %vm1777, %v4099, %v4101
      %v4103 = vrot.slane %v4085, 1
      %v4104 = vsel %vm1777, %v4101, %v4103
      %v4130 = vunpack.c.l.b16 %v4022
      %v4131 = vunpack.c.l.b16 %v4023
      %v4132 = vunpack.c.l.b16 %v4024
      %v4133 = vunpack.c.l.b16 %v4025
      %v4134 = vunpack.c.l.b16 %v4026
      %v4135 = vunpack.c.l.b16 %v4027
      %v4136 = vunpack.c.l.b16 %v4028
      %v4137 = vunpack.c.l.b16 %v4029
      %v4138 = vunpack.c.l.b16 %v4030
      %v4139 = vunpack.c.l.b16 %v4031
      %v4140 = vunpack.c.l.b16 %v4032
      %v4141 = vunpack.c.l.b16 %v4033
      %v4142 = vunpack.c.l.b16 %v4034
      %v4143 = vunpack.c.l.b16 %v4035
      %v4144 = vunpack.c.l.b16 %v4036
      %v4145 = vunpack.c.l.b16 %v4037
      %v4146 = vpack.c.b16 %v4131, %v4130
      %v4147 = vpack.c.b16 %v4133, %v4132
      %v4148 = vpack.c.b16 %v4135, %v4134
      %v4149 = vpack.c.b16 %v4137, %v4136
      %v4150 = vpack.c.b16 %v4139, %v4138
      %v4151 = vpack.c.b16 %v4141, %v4140
      %v4152 = vpack.c.b16 %v4143, %v4142
      %v4153 = vpack.c.b16 %v4145, %v4144
      %4162 = vmatpush.bf16.msra.mxu0 %v4153
      %4163 = vmatpush.bf16.msra.mxu0 %v4152
      %4164 = vmatpush.bf16.msra.mxu0 %v4151
      %4165 = vmatpush.bf16.msra.mxu0 %v4150
      %4166 = vmatpush.bf16.msra.mxu0 %v4149
      %4167 = vmatpush.bf16.msra.mxu0 %v4148
      %4168 = vmatpush.bf16.msra.mxu0 %v4147
      %4169 = vmatpush.bf16.msra.mxu0 %v4146
      %4170 = vmatmul.bf16.gmra.mxu0 %v4088
      %v4171 = vpop.f32.mrf.mxu0
      %v4172 = vadd.f32 0.0, %v4171
      %v4173 = vpop.f32.mrf.mxu0
      %v4174 = vadd.f32 0.0, %v4173
      %4175 = vmatmul.bf16.gmra.mxu0 %v4090
      %v4176 = vpop.f32.mrf.mxu0
      %v4177 = vadd.f32 0.0, %v4176
      %v4178 = vpop.f32.mrf.mxu0
      %v4179 = vadd.f32 0.0, %v4178
      %4180 = vmatmul.bf16.gmra.mxu0 %v4092
      %v4181 = vpop.f32.mrf.mxu0
      %v4182 = vadd.f32 0.0, %v4181
      %v4183 = vpop.f32.mrf.mxu0
      %v4184 = vadd.f32 0.0, %v4183
      %4185 = vmatmul.bf16.gmra.mxu0 %v4094
      %v4186 = vpop.f32.mrf.mxu0
      %v4187 = vadd.f32 0.0, %v4186
      %v4188 = vpop.f32.mrf.mxu0
      %v4189 = vadd.f32 0.0, %v4188
      %4190 = vmatmul.bf16.gmra.mxu0 %v4096
      %v4191 = vpop.f32.mrf.mxu0
      %v4192 = vadd.f32 0.0, %v4191
      %v4193 = vpop.f32.mrf.mxu0
      %v4194 = vadd.f32 0.0, %v4193
      %4195 = vmatmul.bf16.gmra.mxu0 %v4098
      %v4196 = vpop.f32.mrf.mxu0
      %v4197 = vadd.f32 0.0, %v4196
      %v4198 = vpop.f32.mrf.mxu0
      %v4199 = vadd.f32 0.0, %v4198
      %4200 = vmatmul.bf16.gmra.mxu0 %v4100
      %v4201 = vpop.f32.mrf.mxu0
      %v4202 = vadd.f32 0.0, %v4201
      %v4203 = vpop.f32.mrf.mxu0
      %v4204 = vadd.f32 0.0, %v4203
      %4205 = vmatmul.bf16.gmra.mxu0 %v4102
      %v4206 = vpop.f32.mrf.mxu0
      %v4207 = vadd.f32 0.0, %v4206
      %v4208 = vpop.f32.mrf.mxu0
      %v4209 = vadd.f32 0.0, %v4208
      %4210 = vmatmul.bf16.gmra.mxu0 %v4104
      %v4211 = vpop.f32.mrf.mxu0
      %v4212 = vadd.f32 0.0, %v4211
      %v4213 = vpop.f32.mrf.mxu0
      %v4214 = vadd.f32 0.0, %v4213
      %4215 = vdwg.mxu0
      %v4216 = vadd.f32 %v3985, %v4172
      %v4217 = vadd.f32 %v3986, %v4174
      %v4218 = vadd.f32 %v3987, %v4177
      %v4219 = vadd.f32 %v3988, %v4179
      %v4220 = vadd.f32 %v3989, %v4182
      %v4221 = vadd.f32 %v3990, %v4184
      %v4222 = vadd.f32 %v3991, %v4187
      %v4223 = vadd.f32 %v3992, %v4189
      %v4224 = vadd.f32 %v3993, %v4192
      %v4225 = vadd.f32 %v3994, %v4194
      %v4226 = vadd.f32 %v3995, %v4197
      %v4227 = vadd.f32 %v3996, %v4199
      %v4228 = vadd.f32 %v3997, %v4202
      %v4229 = vadd.f32 %v3998, %v4204
      %v4230 = vadd.f32 %v3999, %v4207
      %v4231 = vadd.f32 %v4000, %v4209
      %v4232 = vadd.f32 %v4001, %v4212
      %v4233 = vadd.f32 %v4002, %v4214
      %v4234 = vld [vmem:[#allocation2 + $0x98] sm:$0x3]
      %v4235 = vld [vmem:[%s2159] sm:$0xf]
      %v4236 = vld [vmem:[%s2159 + $0x4] sm:$0xf]
      %v4237 = vld [vmem:[%s2159 + $0x8] sm:$0xf]
      %v4238 = vld [vmem:[%s2159 + $0xc] sm:$0xf]
      %v4239 = vld [vmem:[%s2159 + $0x10] sm:$0xf]
      %v4240 = vld [vmem:[%s2159 + $0x14] sm:$0xf]
      %v4241 = vld [vmem:[%s2159 + $0x18] sm:$0xf]
      %v4242 = vld [vmem:[%s2159 + $0x1c] sm:$0xf]
      %v4243 = vld [vmem:[%s2159 + $0x20] sm:$0xf]
      %v4244 = vld [vmem:[%s2159 + $0x24] sm:$0xf]
      %v4245 = vld [vmem:[%s2159 + $0x28] sm:$0xf]
      %v4246 = vld [vmem:[%s2159 + $0x2c] sm:$0xf]
      %v4247 = vld [vmem:[%s2159 + $0x30] sm:$0xf]
      %v4248 = vld [vmem:[%s2159 + $0x34] sm:$0xf]
      %v4249 = vld [vmem:[%s2159 + $0x38] sm:$0xf]
      %v4250 = vld [vmem:[%s2159 + $0x3c] sm:$0xf]
      %v4252 = vunpack.c.l.b16 %v4234
      %v4253 = vpack.c.b16 %v4252, %v4252
      %v4255 = vshrl.u32 %v4076, 16
      %v4257 = vrot.slane %v4255, 1
      %v4258 = vshll.u32 %v4076, 16
      %v4260 = vrot.slane %v4258, 2
      %v4261 = vor.u32 %v4257, %v4260
      %v4263 = vshrl.u32 %v4077, 16
      %v4265 = vrot.slane %v4263, 1
      %v4266 = vshll.u32 %v4077, 16
      %v4268 = vrot.slane %v4266, 2
      %v4269 = vor.u32 %v4265, %v4268
      %v4270 = vsel %vm2179, %v4261, %v4269
      %v4272 = vshrl.u32 %v4078, 16
      %v4274 = vrot.slane %v4272, 1
      %v4275 = vshll.u32 %v4078, 16
      %v4277 = vrot.slane %v4275, 2
      %v4278 = vor.u32 %v4274, %v4277
      %v4279 = vsel %vm2179, %v4269, %v4278
      %v4281 = vshrl.u32 %v4079, 16
      %v4283 = vrot.slane %v4281, 1
      %v4284 = vshll.u32 %v4079, 16
      %v4286 = vrot.slane %v4284, 2
      %v4287 = vor.u32 %v4283, %v4286
      %v4288 = vsel %vm2179, %v4278, %v4287
      %v4290 = vshrl.u32 %v4080, 16
      %v4292 = vrot.slane %v4290, 1
      %v4293 = vshll.u32 %v4080, 16
      %v4295 = vrot.slane %v4293, 2
      %v4296 = vor.u32 %v4292, %v4295
      %v4297 = vsel %vm2179, %v4287, %v4296
      %v4299 = vshrl.u32 %v4081, 16
      %v4301 = vrot.slane %v4299, 1
      %v4302 = vshll.u32 %v4081, 16
      %v4304 = vrot.slane %v4302, 2
      %v4305 = vor.u32 %v4301, %v4304
      %v4306 = vsel %vm2179, %v4296, %v4305
      %v4308 = vshrl.u32 %v4082, 16
      %v4310 = vrot.slane %v4308, 1
      %v4311 = vshll.u32 %v4082, 16
      %v4313 = vrot.slane %v4311, 2
      %v4314 = vor.u32 %v4310, %v4313
      %v4315 = vsel %vm2179, %v4305, %v4314
      %v4317 = vshrl.u32 %v4083, 16
      %v4319 = vrot.slane %v4317, 1
      %v4320 = vshll.u32 %v4083, 16
      %v4322 = vrot.slane %v4320, 2
      %v4323 = vor.u32 %v4319, %v4322
      %v4324 = vsel %vm2179, %v4314, %v4323
      %v4326 = vshrl.u32 %v4084, 16
      %v4328 = vrot.slane %v4326, 1
      %v4329 = vshll.u32 %v4084, 16
      %v4331 = vrot.slane %v4329, 2
      %v4332 = vor.u32 %v4328, %v4331
      %v4333 = vsel %vm2179, %v4323, %v4332
      %v4335 = vshrl.u32 %v4253, 16
      %v4337 = vrot.slane %v4335, 1
      %v4338 = vshll.u32 %v4253, 16
      %v4340 = vrot.slane %v4338, 2
      %v4341 = vor.u32 %v4337, %v4340
      %v4342 = vsel %vm2179, %v4332, %v4341
      %v4368 = vunpack.c.l.b16 %v4235
      %v4369 = vunpack.c.l.b16 %v4236
      %v4370 = vunpack.c.l.b16 %v4237
      %v4371 = vunpack.c.l.b16 %v4238
      %v4372 = vunpack.c.l.b16 %v4239
      %v4373 = vunpack.c.l.b16 %v4240
      %v4374 = vunpack.c.l.b16 %v4241
      %v4375 = vunpack.c.l.b16 %v4242
      %v4376 = vunpack.c.l.b16 %v4243
      %v4377 = vunpack.c.l.b16 %v4244
      %v4378 = vunpack.c.l.b16 %v4245
      %v4379 = vunpack.c.l.b16 %v4246
      %v4380 = vunpack.c.l.b16 %v4247
      %v4381 = vunpack.c.l.b16 %v4248
      %v4382 = vunpack.c.l.b16 %v4249
      %v4383 = vunpack.c.l.b16 %v4250
      %v4384 = vpack.c.b16 %v4369, %v4368
      %v4385 = vpack.c.b16 %v4371, %v4370
      %v4386 = vpack.c.b16 %v4373, %v4372
      %v4387 = vpack.c.b16 %v4375, %v4374
      %v4388 = vpack.c.b16 %v4377, %v4376
      %v4389 = vpack.c.b16 %v4379, %v4378
      %v4390 = vpack.c.b16 %v4381, %v4380
      %v4391 = vpack.c.b16 %v4383, %v4382
      %4400 = vmatpush.bf16.msra.mxu0 %v4391
      %4401 = vmatpush.bf16.msra.mxu0 %v4390
      %4402 = vmatpush.bf16.msra.mxu0 %v4389
      %4403 = vmatpush.bf16.msra.mxu0 %v4388
      %4404 = vmatpush.bf16.msra.mxu0 %v4387
      %4405 = vmatpush.bf16.msra.mxu0 %v4386
      %4406 = vmatpush.bf16.msra.mxu0 %v4385
      %4407 = vmatpush.bf16.msra.mxu0 %v4384
      %4408 = vmatmul.bf16.gmra.mxu0 %v4270
      %v4409 = vpop.f32.mrf.mxu0
      %v4410 = vadd.f32 0.0, %v4409
      %v4411 = vpop.f32.mrf.mxu0
      %v4412 = vadd.f32 0.0, %v4411
      %4413 = vmatmul.bf16.gmra.mxu0 %v4279
      %v4414 = vpop.f32.mrf.mxu0
      %v4415 = vadd.f32 0.0, %v4414
      %v4416 = vpop.f32.mrf.mxu0
      %v4417 = vadd.f32 0.0, %v4416
      %4418 = vmatmul.bf16.gmra.mxu0 %v4288
      %v4419 = vpop.f32.mrf.mxu0
      %v4420 = vadd.f32 0.0, %v4419
      %v4421 = vpop.f32.mrf.mxu0
      %v4422 = vadd.f32 0.0, %v4421
      %4423 = vmatmul.bf16.gmra.mxu0 %v4297
      %v4424 = vpop.f32.mrf.mxu0
      %v4425 = vadd.f32 0.0, %v4424
      %v4426 = vpop.f32.mrf.mxu0
      %v4427 = vadd.f32 0.0, %v4426
      %4428 = vmatmul.bf16.gmra.mxu0 %v4306
      %v4429 = vpop.f32.mrf.mxu0
      %v4430 = vadd.f32 0.0, %v4429
      %v4431 = vpop.f32.mrf.mxu0
      %v4432 = vadd.f32 0.0, %v4431
      %4433 = vmatmul.bf16.gmra.mxu0 %v4315
      %v4434 = vpop.f32.mrf.mxu0
      %v4435 = vadd.f32 0.0, %v4434
      %v4436 = vpop.f32.mrf.mxu0
      %v4437 = vadd.f32 0.0, %v4436
      %4438 = vmatmul.bf16.gmra.mxu0 %v4324
      %v4439 = vpop.f32.mrf.mxu0
      %v4440 = vadd.f32 0.0, %v4439
      %v4441 = vpop.f32.mrf.mxu0
      %v4442 = vadd.f32 0.0, %v4441
      %4443 = vmatmul.bf16.gmra.mxu0 %v4333
      %v4444 = vpop.f32.mrf.mxu0
      %v4445 = vadd.f32 0.0, %v4444
      %v4446 = vpop.f32.mrf.mxu0
      %v4447 = vadd.f32 0.0, %v4446
      %4448 = vmatmul.bf16.gmra.mxu0 %v4342
      %v4449 = vpop.f32.mrf.mxu0
      %v4450 = vadd.f32 0.0, %v4449
      %v4451 = vpop.f32.mrf.mxu0
      %v4452 = vadd.f32 0.0, %v4451
      %4453 = vdwg.mxu0
      %v4454 = vadd.f32 %v4216, %v4410
      %v4455 = vadd.f32 %v4217, %v4412
      %v4456 = vadd.f32 %v4218, %v4415
      %v4457 = vadd.f32 %v4219, %v4417
      %v4458 = vadd.f32 %v4220, %v4420
      %v4459 = vadd.f32 %v4221, %v4422
      %v4460 = vadd.f32 %v4222, %v4425
      %v4461 = vadd.f32 %v4223, %v4427
      %v4462 = vadd.f32 %v4224, %v4430
      %v4463 = vadd.f32 %v4225, %v4432
      %v4464 = vadd.f32 %v4226, %v4435
      %v4465 = vadd.f32 %v4227, %v4437
      %v4466 = vadd.f32 %v4228, %v4440
      %v4467 = vadd.f32 %v4229, %v4442
      %v4468 = vadd.f32 %v4230, %v4445
      %v4469 = vadd.f32 %v4231, %v4447
      %v4470 = vadd.f32 %v4232, %v4450
      %v4471 = vadd.f32 %v4233, %v4452
      %v4472 = vld [vmem:[#allocation2 + $0x50] sm:$0xc]
      %v4473 = vld [vmem:[%s2399] sm:$0xf]
      %v4474 = vld [vmem:[%s2399 + $0x4] sm:$0xf]
      %v4475 = vld [vmem:[%s2399 + $0x8] sm:$0xf]
      %v4476 = vld [vmem:[%s2399 + $0xc] sm:$0xf]
      %v4477 = vld [vmem:[%s2399 + $0x10] sm:$0xf]
      %v4478 = vld [vmem:[%s2399 + $0x14] sm:$0xf]
      %v4479 = vld [vmem:[%s2399 + $0x18] sm:$0xf]
      %v4480 = vld [vmem:[%s2399 + $0x1c] sm:$0xf]
      %v4481 = vld [vmem:[%s2399 + $0x20] sm:$0xf]
      %v4482 = vld [vmem:[%s2399 + $0x24] sm:$0xf]
      %v4483 = vld [vmem:[%s2399 + $0x28] sm:$0xf]
      %v4484 = vld [vmem:[%s2399 + $0x2c] sm:$0xf]
      %v4485 = vld [vmem:[%s2399 + $0x30] sm:$0xf]
      %v4486 = vld [vmem:[%s2399 + $0x34] sm:$0xf]
      %v4487 = vld [vmem:[%s2399 + $0x38] sm:$0xf]
      %v4488 = vld [vmem:[%s2399 + $0x3c] sm:$0xf]
      %v4490 = vunpack.c.l.b16 %v4472
      %v4491 = vpack.c.b16 %v4058, %v4490
      %v4492 = vrot.slane %v4491, 2
      %v4493 = vrot.slane %v4077, 2
      %v4494 = vsel %vm2419, %v4492, %v4493
      %v4495 = vrot.slane %v4078, 2
      %v4496 = vsel %vm2419, %v4493, %v4495
      %v4497 = vrot.slane %v4079, 2
      %v4498 = vsel %vm2419, %v4495, %v4497
      %v4499 = vrot.slane %v4080, 2
      %v4500 = vsel %vm2419, %v4497, %v4499
      %v4501 = vrot.slane %v4081, 2
      %v4502 = vsel %vm2419, %v4499, %v4501
      %v4503 = vrot.slane %v4082, 2
      %v4504 = vsel %vm2419, %v4501, %v4503
      %v4505 = vrot.slane %v4083, 2
      %v4506 = vsel %vm2419, %v4503, %v4505
      %v4507 = vrot.slane %v4084, 2
      %v4508 = vsel %vm2419, %v4505, %v4507
      %v4509 = vrot.slane %v4253, 2
      %v4510 = vsel %vm2419, %v4507, %v4509
      %v4536 = vunpack.c.l.b16 %v4473
      %v4537 = vunpack.c.l.b16 %v4474
      %v4538 = vunpack.c.l.b16 %v4475
      %v4539 = vunpack.c.l.b16 %v4476
      %v4540 = vunpack.c.l.b16 %v4477
      %v4541 = vunpack.c.l.b16 %v4478
      %v4542 = vunpack.c.l.b16 %v4479
      %v4543 = vunpack.c.l.b16 %v4480
      %v4544 = vunpack.c.l.b16 %v4481
      %v4545 = vunpack.c.l.b16 %v4482
      %v4546 = vunpack.c.l.b16 %v4483
      %v4547 = vunpack.c.l.b16 %v4484
      %v4548 = vunpack.c.l.b16 %v4485
      %v4549 = vunpack.c.l.b16 %v4486
      %v4550 = vunpack.c.l.b16 %v4487
      %v4551 = vunpack.c.l.b16 %v4488
      %v4552 = vpack.c.b16 %v4537, %v4536
      %v4553 = vpack.c.b16 %v4539, %v4538
      %v4554 = vpack.c.b16 %v4541, %v4540
      %v4555 = vpack.c.b16 %v4543, %v4542
      %v4556 = vpack.c.b16 %v4545, %v4544
      %v4557 = vpack.c.b16 %v4547, %v4546
      %v4558 = vpack.c.b16 %v4549, %v4548
      %v4559 = vpack.c.b16 %v4551, %v4550
      %4568 = vmatpush.bf16.msra.mxu0 %v4559
      %4569 = vmatpush.bf16.msra.mxu0 %v4558
      %4570 = vmatpush.bf16.msra.mxu0 %v4557
      %4571 = vmatpush.bf16.msra.mxu0 %v4556
      %4572 = vmatpush.bf16.msra.mxu0 %v4555
      %4573 = vmatpush.bf16.msra.mxu0 %v4554
      %4574 = vmatpush.bf16.msra.mxu0 %v4553
      %4575 = vmatpush.bf16.msra.mxu0 %v4552
      %4576 = vmatmul.bf16.gmra.mxu0 %v4494
      %v4577 = vpop.f32.mrf.mxu0
      %v4578 = vadd.f32 0.0, %v4577
      %v4579 = vpop.f32.mrf.mxu0
      %v4580 = vadd.f32 0.0, %v4579
      %4581 = vmatmul.bf16.gmra.mxu0 %v4496
      %v4582 = vpop.f32.mrf.mxu0
      %v4583 = vadd.f32 0.0, %v4582
      %v4584 = vpop.f32.mrf.mxu0
      %v4585 = vadd.f32 0.0, %v4584
      %4586 = vmatmul.bf16.gmra.mxu0 %v4498
      %v4587 = vpop.f32.mrf.mxu0
      %v4588 = vadd.f32 0.0, %v4587
      %v4589 = vpop.f32.mrf.mxu0
      %v4590 = vadd.f32 0.0, %v4589
      %4591 = vmatmul.bf16.gmra.mxu0 %v4500
      %v4592 = vpop.f32.mrf.mxu0
      %v4593 = vadd.f32 0.0, %v4592
      %v4594 = vpop.f32.mrf.mxu0
      %v4595 = vadd.f32 0.0, %v4594
      %4596 = vmatmul.bf16.gmra.mxu0 %v4502
      %v4597 = vpop.f32.mrf.mxu0
      %v4598 = vadd.f32 0.0, %v4597
      %v4599 = vpop.f32.mrf.mxu0
      %v4600 = vadd.f32 0.0, %v4599
      %4601 = vmatmul.bf16.gmra.mxu0 %v4504
      %v4602 = vpop.f32.mrf.mxu0
      %v4603 = vadd.f32 0.0, %v4602
      %v4604 = vpop.f32.mrf.mxu0
      %v4605 = vadd.f32 0.0, %v4604
      %4606 = vmatmul.bf16.gmra.mxu0 %v4506
      %v4607 = vpop.f32.mrf.mxu0
      %v4608 = vadd.f32 0.0, %v4607
      %v4609 = vpop.f32.mrf.mxu0
      %v4610 = vadd.f32 0.0, %v4609
      %4611 = vmatmul.bf16.gmra.mxu0 %v4508
      %v4612 = vpop.f32.mrf.mxu0
      %v4613 = vadd.f32 0.0, %v4612
      %v4614 = vpop.f32.mrf.mxu0
      %v4615 = vadd.f32 0.0, %v4614
      %4616 = vmatmul.bf16.gmra.mxu0 %v4510
      %v4617 = vpop.f32.mrf.mxu0
      %v4618 = vadd.f32 0.0, %v4617
      %v4619 = vpop.f32.mrf.mxu0
      %v4620 = vadd.f32 0.0, %v4619
      %4621 = vdwg.mxu0
      %v4622 = vadd.f32 %v4454, %v4578
      %v4623 = vadd.f32 %v4455, %v4580
      %v4624 = vadd.f32 %v4456, %v4583
      %v4625 = vadd.f32 %v4457, %v4585
      %v4626 = vadd.f32 %v4458, %v4588
      %v4627 = vadd.f32 %v4459, %v4590
      %v4628 = vadd.f32 %v4460, %v4593
      %v4629 = vadd.f32 %v4461, %v4595
      %v4630 = vadd.f32 %v4462, %v4598
      %v4631 = vadd.f32 %v4463, %v4600
      %v4632 = vadd.f32 %v4464, %v4603
      %v4633 = vadd.f32 %v4465, %v4605
      %v4634 = vadd.f32 %v4466, %v4608
      %v4635 = vadd.f32 %v4467, %v4610
      %v4636 = vadd.f32 %v4468, %v4613
      %v4637 = vadd.f32 %v4469, %v4615
      %v4638 = vadd.f32 %v4470, %v4618
      %v4639 = vadd.f32 %v4471, %v4620
      %v4640 = vld [vmem:[#allocation2 + $0x58] sm:$0xc]
      %v4641 = vld [vmem:[#allocation2 + $0x5c] sm:$0xf]
      %v4642 = vld [vmem:[#allocation2 + $0x60] sm:$0xf]
      %v4643 = vld [vmem:[#allocation2 + $0x64] sm:$0xf]
      %v4644 = vld [vmem:[#allocation2 + $0x68] sm:$0xf]
      %v4645 = vld [vmem:[#allocation2 + $0x6c] sm:$0xf]
      %v4646 = vld [vmem:[#allocation2 + $0x70] sm:$0xf]
      %v4647 = vld [vmem:[#allocation2 + $0x74] sm:$0xf]
      %v4648 = vld [vmem:[#allocation2 + $0x78] sm:$0xf]
      %v4649 = vld [vmem:[#allocation2 + $0x7c] sm:$0xf]
      %v4650 = vld [vmem:[#allocation2 + $0x80] sm:$0xf]
      %v4651 = vld [vmem:[#allocation2 + $0x84] sm:$0xf]
      %v4652 = vld [vmem:[#allocation2 + $0x88] sm:$0xf]
      %v4653 = vld [vmem:[#allocation2 + $0x8c] sm:$0xf]
      %v4654 = vld [vmem:[#allocation2 + $0x90] sm:$0xf]
      %v4655 = vld [vmem:[#allocation2 + $0x94] sm:$0xf]
      %v4656 = vld [vmem:[#allocation2 + $0x98] sm:$0xf]
      %v4657 = vld [vmem:[#allocation2 + $0x9c] sm:$0xf]
      %v4658 = vld [vmem:[#allocation2 + $0xa0] sm:$0x3]
      %v4659 = vld [vmem:[%s2587] sm:$0xf]
      %v4660 = vld [vmem:[%s2587 + $0x4] sm:$0xf]
      %v4661 = vld [vmem:[%s2587 + $0x8] sm:$0xf]
      %v4662 = vld [vmem:[%s2587 + $0xc] sm:$0xf]
      %v4663 = vld [vmem:[%s2587 + $0x10] sm:$0xf]
      %v4664 = vld [vmem:[%s2587 + $0x14] sm:$0xf]
      %v4665 = vld [vmem:[%s2587 + $0x18] sm:$0xf]
      %v4666 = vld [vmem:[%s2587 + $0x1c] sm:$0xf]
      %v4667 = vld [vmem:[%s2587 + $0x20] sm:$0xf]
      %v4668 = vld [vmem:[%s2587 + $0x24] sm:$0xf]
      %v4669 = vld [vmem:[%s2587 + $0x28] sm:$0xf]
      %v4670 = vld [vmem:[%s2587 + $0x2c] sm:$0xf]
      %v4671 = vld [vmem:[%s2587 + $0x30] sm:$0xf]
      %v4672 = vld [vmem:[%s2587 + $0x34] sm:$0xf]
      %v4673 = vld [vmem:[%s2587 + $0x38] sm:$0xf]
      %v4674 = vld [vmem:[%s2587 + $0x3c] sm:$0xf]
      %v4694 = vunpack.c.l.b16 %v4640
      %v4695 = vunpack.c.l.b16 %v4641
      %v4696 = vunpack.c.l.b16 %v4642
      %v4697 = vunpack.c.l.b16 %v4643
      %v4698 = vunpack.c.l.b16 %v4644
      %v4699 = vunpack.c.l.b16 %v4645
      %v4700 = vunpack.c.l.b16 %v4646
      %v4701 = vunpack.c.l.b16 %v4647
      %v4702 = vunpack.c.l.b16 %v4648
      %v4703 = vunpack.c.l.b16 %v4649
      %v4704 = vunpack.c.l.b16 %v4650
      %v4705 = vunpack.c.l.b16 %v4651
      %v4706 = vunpack.c.l.b16 %v4652
      %v4707 = vunpack.c.l.b16 %v4653
      %v4708 = vunpack.c.l.b16 %v4654
      %v4709 = vunpack.c.l.b16 %v4655
      %v4710 = vunpack.c.l.b16 %v4656
      %v4711 = vunpack.c.l.b16 %v4657
      %v4712 = vunpack.c.l.b16 %v4658
      %v4713 = vpack.c.b16 %v4695, %v4694
      %v4714 = vpack.c.b16 %v4697, %v4696
      %v4715 = vpack.c.b16 %v4699, %v4698
      %v4716 = vpack.c.b16 %v4701, %v4700
      %v4717 = vpack.c.b16 %v4703, %v4702
      %v4718 = vpack.c.b16 %v4705, %v4704
      %v4719 = vpack.c.b16 %v4707, %v4706
      %v4720 = vpack.c.b16 %v4709, %v4708
      %v4721 = vpack.c.b16 %v4711, %v4710
      %v4722 = vpack.c.b16 %v4712, %v4712
      %v4723 = vrot.slane %v4713, 2
      %v4724 = vrot.slane %v4714, 2
      %v4725 = vsel %vm2419, %v4723, %v4724
      %v4726 = vrot.slane %v4715, 2
      %v4727 = vsel %vm2419, %v4724, %v4726
      %v4728 = vrot.slane %v4716, 2
      %v4729 = vsel %vm2419, %v4726, %v4728
      %v4730 = vrot.slane %v4717, 2
      %v4731 = vsel %vm2419, %v4728, %v4730
      %v4732 = vrot.slane %v4718, 2
      %v4733 = vsel %vm2419, %v4730, %v4732
      %v4734 = vrot.slane %v4719, 2
      %v4735 = vsel %vm2419, %v4732, %v4734
      %v4736 = vrot.slane %v4720, 2
      %v4737 = vsel %vm2419, %v4734, %v4736
      %v4738 = vrot.slane %v4721, 2
      %v4739 = vsel %vm2419, %v4736, %v4738
      %v4740 = vrot.slane %v4722, 2
      %v4741 = vsel %vm2419, %v4738, %v4740
      %v4767 = vunpack.c.l.b16 %v4659
      %v4768 = vunpack.c.l.b16 %v4660
      %v4769 = vunpack.c.l.b16 %v4661
      %v4770 = vunpack.c.l.b16 %v4662
      %v4771 = vunpack.c.l.b16 %v4663
      %v4772 = vunpack.c.l.b16 %v4664
      %v4773 = vunpack.c.l.b16 %v4665
      %v4774 = vunpack.c.l.b16 %v4666
      %v4775 = vunpack.c.l.b16 %v4667
      %v4776 = vunpack.c.l.b16 %v4668
      %v4777 = vunpack.c.l.b16 %v4669
      %v4778 = vunpack.c.l.b16 %v4670
      %v4779 = vunpack.c.l.b16 %v4671
      %v4780 = vunpack.c.l.b16 %v4672
      %v4781 = vunpack.c.l.b16 %v4673
      %v4782 = vunpack.c.l.b16 %v4674
      %v4783 = vpack.c.b16 %v4768, %v4767
      %v4784 = vpack.c.b16 %v4770, %v4769
      %v4785 = vpack.c.b16 %v4772, %v4771
      %v4786 = vpack.c.b16 %v4774, %v4773
      %v4787 = vpack.c.b16 %v4776, %v4775
      %v4788 = vpack.c.b16 %v4778, %v4777
      %v4789 = vpack.c.b16 %v4780, %v4779
      %v4790 = vpack.c.b16 %v4782, %v4781
      %4799 = vmatpush.bf16.msra.mxu0 %v4790
      %4800 = vmatpush.bf16.msra.mxu0 %v4789
      %4801 = vmatpush.bf16.msra.mxu0 %v4788
      %4802 = vmatpush.bf16.msra.mxu0 %v4787
      %4803 = vmatpush.bf16.msra.mxu0 %v4786
      %4804 = vmatpush.bf16.msra.mxu0 %v4785
      %4805 = vmatpush.bf16.msra.mxu0 %v4784
      %4806 = vmatpush.bf16.msra.mxu0 %v4783
      %4807 = vmatmul.bf16.gmra.mxu0 %v4725
      %v4808 = vpop.f32.mrf.mxu0
      %v4809 = vadd.f32 0.0, %v4808
      %v4810 = vpop.f32.mrf.mxu0
      %v4811 = vadd.f32 0.0, %v4810
      %4812 = vmatmul.bf16.gmra.mxu0 %v4727
      %v4813 = vpop.f32.mrf.mxu0
      %v4814 = vadd.f32 0.0, %v4813
      %v4815 = vpop.f32.mrf.mxu0
      %v4816 = vadd.f32 0.0, %v4815
      %4817 = vmatmul.bf16.gmra.mxu0 %v4729
      %v4818 = vpop.f32.mrf.mxu0
      %v4819 = vadd.f32 0.0, %v4818
      %v4820 = vpop.f32.mrf.mxu0
      %v4821 = vadd.f32 0.0, %v4820
      %4822 = vmatmul.bf16.gmra.mxu0 %v4731
      %v4823 = vpop.f32.mrf.mxu0
      %v4824 = vadd.f32 0.0, %v4823
      %v4825 = vpop.f32.mrf.mxu0
      %v4826 = vadd.f32 0.0, %v4825
      %4827 = vmatmul.bf16.gmra.mxu0 %v4733
      %v4828 = vpop.f32.mrf.mxu0
      %v4829 = vadd.f32 0.0, %v4828
      %v4830 = vpop.f32.mrf.mxu0
      %v4831 = vadd.f32 0.0, %v4830
      %4832 = vmatmul.bf16.gmra.mxu0 %v4735
      %v4833 = vpop.f32.mrf.mxu0
      %v4834 = vadd.f32 0.0, %v4833
      %v4835 = vpop.f32.mrf.mxu0
      %v4836 = vadd.f32 0.0, %v4835
      %4837 = vmatmul.bf16.gmra.mxu0 %v4737
      %v4838 = vpop.f32.mrf.mxu0
      %v4839 = vadd.f32 0.0, %v4838
      %v4840 = vpop.f32.mrf.mxu0
      %v4841 = vadd.f32 0.0, %v4840
      %4842 = vmatmul.bf16.gmra.mxu0 %v4739
      %v4843 = vpop.f32.mrf.mxu0
      %v4844 = vadd.f32 0.0, %v4843
      %v4845 = vpop.f32.mrf.mxu0
      %v4846 = vadd.f32 0.0, %v4845
      %4847 = vmatmul.bf16.gmra.mxu0 %v4741
      %v4848 = vpop.f32.mrf.mxu0
      %v4849 = vadd.f32 0.0, %v4848
      %v4850 = vpop.f32.mrf.mxu0
      %v4851 = vadd.f32 0.0, %v4850
      %4852 = vdwg.mxu0
      %v4853 = vadd.f32 %v4622, %v4809
      %v4854 = vadd.f32 %v4623, %v4811
      %v4855 = vadd.f32 %v4624, %v4814
      %v4856 = vadd.f32 %v4625, %v4816
      %v4857 = vadd.f32 %v4626, %v4819
      %v4858 = vadd.f32 %v4627, %v4821
      %v4859 = vadd.f32 %v4628, %v4824
      %v4860 = vadd.f32 %v4629, %v4826
      %v4861 = vadd.f32 %v4630, %v4829
      %v4862 = vadd.f32 %v4631, %v4831
      %v4863 = vadd.f32 %v4632, %v4834
      %v4864 = vadd.f32 %v4633, %v4836
      %v4865 = vadd.f32 %v4634, %v4839
      %v4866 = vadd.f32 %v4635, %v4841
      %v4867 = vadd.f32 %v4636, %v4844
      %v4868 = vadd.f32 %v4637, %v4846
      %v4869 = vadd.f32 %v4638, %v4849
      %v4870 = vadd.f32 %v4639, %v4851
      %v4871 = vld [vmem:[#allocation2 + $0xa0] sm:$0x7]
      %v4872 = vld [vmem:[%s2801] sm:$0xf]
      %v4873 = vld [vmem:[%s2801 + $0x4] sm:$0xf]
      %v4874 = vld [vmem:[%s2801 + $0x8] sm:$0xf]
      %v4875 = vld [vmem:[%s2801 + $0xc] sm:$0xf]
      %v4876 = vld [vmem:[%s2801 + $0x10] sm:$0xf]
      %v4877 = vld [vmem:[%s2801 + $0x14] sm:$0xf]
      %v4878 = vld [vmem:[%s2801 + $0x18] sm:$0xf]
      %v4879 = vld [vmem:[%s2801 + $0x1c] sm:$0xf]
      %v4880 = vld [vmem:[%s2801 + $0x20] sm:$0xf]
      %v4881 = vld [vmem:[%s2801 + $0x24] sm:$0xf]
      %v4882 = vld [vmem:[%s2801 + $0x28] sm:$0xf]
      %v4883 = vld [vmem:[%s2801 + $0x2c] sm:$0xf]
      %v4884 = vld [vmem:[%s2801 + $0x30] sm:$0xf]
      %v4885 = vld [vmem:[%s2801 + $0x34] sm:$0xf]
      %v4886 = vld [vmem:[%s2801 + $0x38] sm:$0xf]
      %v4887 = vld [vmem:[%s2801 + $0x3c] sm:$0xf]
      %v4889 = vunpack.c.l.b16 %v4871
      %v4890 = vpack.c.b16 %v4889, %v4889
      %v4892 = vshrl.u32 %v4713, 16
      %v4894 = vrot.slane %v4892, 2
      %v4895 = vshll.u32 %v4713, 16
      %v4897 = vrot.slane %v4895, 3
      %v4898 = vor.u32 %v4894, %v4897
      %v4900 = vshrl.u32 %v4714, 16
      %v4902 = vrot.slane %v4900, 2
      %v4903 = vshll.u32 %v4714, 16
      %v4905 = vrot.slane %v4903, 3
      %v4906 = vor.u32 %v4902, %v4905
      %v4907 = vsel %vm2821, %v4898, %v4906
      %v4909 = vshrl.u32 %v4715, 16
      %v4911 = vrot.slane %v4909, 2
      %v4912 = vshll.u32 %v4715, 16
      %v4914 = vrot.slane %v4912, 3
      %v4915 = vor.u32 %v4911, %v4914
      %v4916 = vsel %vm2821, %v4906, %v4915
      %v4918 = vshrl.u32 %v4716, 16
      %v4920 = vrot.slane %v4918, 2
      %v4921 = vshll.u32 %v4716, 16
      %v4923 = vrot.slane %v4921, 3
      %v4924 = vor.u32 %v4920, %v4923
      %v4925 = vsel %vm2821, %v4915, %v4924
      %v4927 = vshrl.u32 %v4717, 16
      %v4929 = vrot.slane %v4927, 2
      %v4930 = vshll.u32 %v4717, 16
      %v4932 = vrot.slane %v4930, 3
      %v4933 = vor.u32 %v4929, %v4932
      %v4934 = vsel %vm2821, %v4924, %v4933
      %v4936 = vshrl.u32 %v4718, 16
      %v4938 = vrot.slane %v4936, 2
      %v4939 = vshll.u32 %v4718, 16
      %v4941 = vrot.slane %v4939, 3
      %v4942 = vor.u32 %v4938, %v4941
      %v4943 = vsel %vm2821, %v4933, %v4942
      %v4945 = vshrl.u32 %v4719, 16
      %v4947 = vrot.slane %v4945, 2
      %v4948 = vshll.u32 %v4719, 16
      %v4950 = vrot.slane %v4948, 3
      %v4951 = vor.u32 %v4947, %v4950
      %v4952 = vsel %vm2821, %v4942, %v4951
      %v4954 = vshrl.u32 %v4720, 16
      %v4956 = vrot.slane %v4954, 2
      %v4957 = vshll.u32 %v4720, 16
      %v4959 = vrot.slane %v4957, 3
      %v4960 = vor.u32 %v4956, %v4959
      %v4961 = vsel %vm2821, %v4951, %v4960
      %v4963 = vshrl.u32 %v4721, 16
      %v4965 = vrot.slane %v4963, 2
      %v4966 = vshll.u32 %v4721, 16
      %v4968 = vrot.slane %v4966, 3
      %v4969 = vor.u32 %v4965, %v4968
      %v4970 = vsel %vm2821, %v4960, %v4969
      %v4972 = vshrl.u32 %v4890, 16
      %v4974 = vrot.slane %v4972, 2
      %v4975 = vshll.u32 %v4890, 16
      %v4977 = vrot.slane %v4975, 3
      %v4978 = vor.u32 %v4974, %v4977
      %v4979 = vsel %vm2821, %v4969, %v4978
      %v5005 = vunpack.c.l.b16 %v4872
      %v5006 = vunpack.c.l.b16 %v4873
      %v5007 = vunpack.c.l.b16 %v4874
      %v5008 = vunpack.c.l.b16 %v4875
      %v5009 = vunpack.c.l.b16 %v4876
      %v5010 = vunpack.c.l.b16 %v4877
      %v5011 = vunpack.c.l.b16 %v4878
      %v5012 = vunpack.c.l.b16 %v4879
      %v5013 = vunpack.c.l.b16 %v4880
      %v5014 = vunpack.c.l.b16 %v4881
      %v5015 = vunpack.c.l.b16 %v4882
      %v5016 = vunpack.c.l.b16 %v4883
      %v5017 = vunpack.c.l.b16 %v4884
      %v5018 = vunpack.c.l.b16 %v4885
      %v5019 = vunpack.c.l.b16 %v4886
      %v5020 = vunpack.c.l.b16 %v4887
      %v5021 = vpack.c.b16 %v5006, %v5005
      %v5022 = vpack.c.b16 %v5008, %v5007
      %v5023 = vpack.c.b16 %v5010, %v5009
      %v5024 = vpack.c.b16 %v5012, %v5011
      %v5025 = vpack.c.b16 %v5014, %v5013
      %v5026 = vpack.c.b16 %v5016, %v5015
      %v5027 = vpack.c.b16 %v5018, %v5017
      %v5028 = vpack.c.b16 %v5020, %v5019
      %5037 = vmatpush.bf16.msra.mxu0 %v5028
      %5038 = vmatpush.bf16.msra.mxu0 %v5027
      %5039 = vmatpush.bf16.msra.mxu0 %v5026
      %5040 = vmatpush.bf16.msra.mxu0 %v5025
      %5041 = vmatpush.bf16.msra.mxu0 %v5024
      %5042 = vmatpush.bf16.msra.mxu0 %v5023
      %5043 = vmatpush.bf16.msra.mxu0 %v5022
      %5044 = vmatpush.bf16.msra.mxu0 %v5021
      %5045 = vmatmul.bf16.gmra.mxu0 %v4907
      %v5046 = vpop.f32.mrf.mxu0
      %v5047 = vadd.f32 0.0, %v5046
      %v5048 = vpop.f32.mrf.mxu0
      %v5049 = vadd.f32 0.0, %v5048
      %5050 = vmatmul.bf16.gmra.mxu0 %v4916
      %v5051 = vpop.f32.mrf.mxu0
      %v5052 = vadd.f32 0.0, %v5051
      %v5053 = vpop.f32.mrf.mxu0
      %v5054 = vadd.f32 0.0, %v5053
      %5055 = vmatmul.bf16.gmra.mxu0 %v4925
      %v5056 = vpop.f32.mrf.mxu0
      %v5057 = vadd.f32 0.0, %v5056
      %v5058 = vpop.f32.mrf.mxu0
      %v5059 = vadd.f32 0.0, %v5058
      %5060 = vmatmul.bf16.gmra.mxu0 %v4934
      %v5061 = vpop.f32.mrf.mxu0
      %v5062 = vadd.f32 0.0, %v5061
      %v5063 = vpop.f32.mrf.mxu0
      %v5064 = vadd.f32 0.0, %v5063
      %5065 = vmatmul.bf16.gmra.mxu0 %v4943
      %v5066 = vpop.f32.mrf.mxu0
      %v5067 = vadd.f32 0.0, %v5066
      %v5068 = vpop.f32.mrf.mxu0
      %v5069 = vadd.f32 0.0, %v5068
      %5070 = vmatmul.bf16.gmra.mxu0 %v4952
      %v5071 = vpop.f32.mrf.mxu0
      %v5072 = vadd.f32 0.0, %v5071
      %v5073 = vpop.f32.mrf.mxu0
      %v5074 = vadd.f32 0.0, %v5073
      %5075 = vmatmul.bf16.gmra.mxu0 %v4961
      %v5076 = vpop.f32.mrf.mxu0
      %v5077 = vadd.f32 0.0, %v5076
      %v5078 = vpop.f32.mrf.mxu0
      %v5079 = vadd.f32 0.0, %v5078
      %5080 = vmatmul.bf16.gmra.mxu0 %v4970
      %v5081 = vpop.f32.mrf.mxu0
      %v5082 = vadd.f32 0.0, %v5081
      %v5083 = vpop.f32.mrf.mxu0
      %v5084 = vadd.f32 0.0, %v5083
      %5085 = vmatmul.bf16.gmra.mxu0 %v4979
      %v5086 = vpop.f32.mrf.mxu0
      %v5087 = vadd.f32 0.0, %v5086
      %v5088 = vpop.f32.mrf.mxu0
      %v5089 = vadd.f32 0.0, %v5088
      %5090 = vdwg.mxu0
      %v5091 = vadd.f32 %v4853, %v5047
      %v5092 = vadd.f32 %v4854, %v5049
      %v5093 = vadd.f32 %v4855, %v5052
      %v5094 = vadd.f32 %v4856, %v5054
      %v5095 = vadd.f32 %v4857, %v5057
      %v5096 = vadd.f32 %v4858, %v5059
      %v5097 = vadd.f32 %v4859, %v5062
      %v5098 = vadd.f32 %v4860, %v5064
      %v5099 = vadd.f32 %v4861, %v5067
      %v5100 = vadd.f32 %v4862, %v5069
      %v5101 = vadd.f32 %v4863, %v5072
      %v5102 = vadd.f32 %v4864, %v5074
      %v5103 = vadd.f32 %v4865, %v5077
      %v5104 = vadd.f32 %v4866, %v5079
      %v5105 = vadd.f32 %v4867, %v5082
      %v5106 = vadd.f32 %v4868, %v5084
      %v5107 = vadd.f32 %v4869, %v5087
      %v5108 = vadd.f32 %v4870, %v5089
      %v5109 = vld [vmem:[#allocation2 + $0x58] sm:$0x8]
      %v5110 = vld [vmem:[%s3041] sm:$0xf]
      %v5111 = vld [vmem:[%s3041 + $0x4] sm:$0xf]
      %v5112 = vld [vmem:[%s3041 + $0x8] sm:$0xf]
      %v5113 = vld [vmem:[%s3041 + $0xc] sm:$0xf]
      %v5114 = vld [vmem:[%s3041 + $0x10] sm:$0xf]
      %v5115 = vld [vmem:[%s3041 + $0x14] sm:$0xf]
      %v5116 = vld [vmem:[%s3041 + $0x18] sm:$0xf]
      %v5117 = vld [vmem:[%s3041 + $0x1c] sm:$0xf]
      %v5118 = vld [vmem:[%s3041 + $0x20] sm:$0xf]
      %v5119 = vld [vmem:[%s3041 + $0x24] sm:$0xf]
      %v5120 = vld [vmem:[%s3041 + $0x28] sm:$0xf]
      %v5121 = vld [vmem:[%s3041 + $0x2c] sm:$0xf]
      %v5122 = vld [vmem:[%s3041 + $0x30] sm:$0xf]
      %v5123 = vld [vmem:[%s3041 + $0x34] sm:$0xf]
      %v5124 = vld [vmem:[%s3041 + $0x38] sm:$0xf]
      %v5125 = vld [vmem:[%s3041 + $0x3c] sm:$0xf]
      %v5127 = vunpack.c.l.b16 %v5109
      %v5128 = vpack.c.b16 %v4695, %v5127
      %v5129 = vrot.slane %v5128, 3
      %v5130 = vrot.slane %v4714, 3
      %v5131 = vsel %vm3061, %v5129, %v5130
      %v5132 = vrot.slane %v4715, 3
      %v5133 = vsel %vm3061, %v5130, %v5132
      %v5134 = vrot.slane %v4716, 3
      %v5135 = vsel %vm3061, %v5132, %v5134
      %v5136 = vrot.slane %v4717, 3
      %v5137 = vsel %vm3061, %v5134, %v5136
      %v5138 = vrot.slane %v4718, 3
      %v5139 = vsel %vm3061, %v5136, %v5138
      %v5140 = vrot.slane %v4719, 3
      %v5141 = vsel %vm3061, %v5138, %v5140
      %v5142 = vrot.slane %v4720, 3
      %v5143 = vsel %vm3061, %v5140, %v5142
      %v5144 = vrot.slane %v4721, 3
      %v5145 = vsel %vm3061, %v5142, %v5144
      %v5146 = vrot.slane %v4890, 3
      %v5147 = vsel %vm3061, %v5144, %v5146
      %v5173 = vunpack.c.l.b16 %v5110
      %v5174 = vunpack.c.l.b16 %v5111
      %v5175 = vunpack.c.l.b16 %v5112
      %v5176 = vunpack.c.l.b16 %v5113
      %v5177 = vunpack.c.l.b16 %v5114
      %v5178 = vunpack.c.l.b16 %v5115
      %v5179 = vunpack.c.l.b16 %v5116
      %v5180 = vunpack.c.l.b16 %v5117
      %v5181 = vunpack.c.l.b16 %v5118
      %v5182 = vunpack.c.l.b16 %v5119
      %v5183 = vunpack.c.l.b16 %v5120
      %v5184 = vunpack.c.l.b16 %v5121
      %v5185 = vunpack.c.l.b16 %v5122
      %v5186 = vunpack.c.l.b16 %v5123
      %v5187 = vunpack.c.l.b16 %v5124
      %v5188 = vunpack.c.l.b16 %v5125
      %v5189 = vpack.c.b16 %v5174, %v5173
      %v5190 = vpack.c.b16 %v5176, %v5175
      %v5191 = vpack.c.b16 %v5178, %v5177
      %v5192 = vpack.c.b16 %v5180, %v5179
      %v5193 = vpack.c.b16 %v5182, %v5181
      %v5194 = vpack.c.b16 %v5184, %v5183
      %v5195 = vpack.c.b16 %v5186, %v5185
      %v5196 = vpack.c.b16 %v5188, %v5187
      %5205 = vmatpush.bf16.msra.mxu0 %v5196
      %5206 = vmatpush.bf16.msra.mxu0 %v5195
      %5207 = vmatpush.bf16.msra.mxu0 %v5194
      %5208 = vmatpush.bf16.msra.mxu0 %v5193
      %5209 = vmatpush.bf16.msra.mxu0 %v5192
      %5210 = vmatpush.bf16.msra.mxu0 %v5191
      %5211 = vmatpush.bf16.msra.mxu0 %v5190
      %5212 = vmatpush.bf16.msra.mxu0 %v5189
      %5213 = vmatmul.bf16.gmra.mxu0 %v5131
      %v5214 = vpop.f32.mrf.mxu0
      %v5215 = vadd.f32 0.0, %v5214
      %v5216 = vpop.f32.mrf.mxu0
      %v5217 = vadd.f32 0.0, %v5216
      %5218 = vmatmul.bf16.gmra.mxu0 %v5133
      %v5219 = vpop.f32.mrf.mxu0
      %v5220 = vadd.f32 0.0, %v5219
      %v5221 = vpop.f32.mrf.mxu0
      %v5222 = vadd.f32 0.0, %v5221
      %5223 = vmatmul.bf16.gmra.mxu0 %v5135
      %v5224 = vpop.f32.mrf.mxu0
      %v5225 = vadd.f32 0.0, %v5224
      %v5226 = vpop.f32.mrf.mxu0
      %v5227 = vadd.f32 0.0, %v5226
      %5228 = vmatmul.bf16.gmra.mxu0 %v5137
      %v5229 = vpop.f32.mrf.mxu0
      %v5230 = vadd.f32 0.0, %v5229
      %v5231 = vpop.f32.mrf.mxu0
      %v5232 = vadd.f32 0.0, %v5231
      %5233 = vmatmul.bf16.gmra.mxu0 %v5139
      %v5234 = vpop.f32.mrf.mxu0
      %v5235 = vadd.f32 0.0, %v5234
      %v5236 = vpop.f32.mrf.mxu0
      %v5237 = vadd.f32 0.0, %v5236
      %5238 = vmatmul.bf16.gmra.mxu0 %v5141
      %v5239 = vpop.f32.mrf.mxu0
      %v5240 = vadd.f32 0.0, %v5239
      %v5241 = vpop.f32.mrf.mxu0
      %v5242 = vadd.f32 0.0, %v5241
      %5243 = vmatmul.bf16.gmra.mxu0 %v5143
      %v5244 = vpop.f32.mrf.mxu0
      %v5245 = vadd.f32 0.0, %v5244
      %v5246 = vpop.f32.mrf.mxu0
      %v5247 = vadd.f32 0.0, %v5246
      %5248 = vmatmul.bf16.gmra.mxu0 %v5145
      %v5249 = vpop.f32.mrf.mxu0
      %v5250 = vadd.f32 0.0, %v5249
      %v5251 = vpop.f32.mrf.mxu0
      %v5252 = vadd.f32 0.0, %v5251
      %5253 = vmatmul.bf16.gmra.mxu0 %v5147
      %v5254 = vpop.f32.mrf.mxu0
      %v5255 = vadd.f32 0.0, %v5254
      %v5256 = vpop.f32.mrf.mxu0
      %v5257 = vadd.f32 0.0, %v5256
      %5258 = vdwg.mxu0
      %v5259 = vadd.f32 %v5091, %v5215
      %v5260 = vadd.f32 %v5092, %v5217
      %v5261 = vadd.f32 %v5093, %v5220
      %v5262 = vadd.f32 %v5094, %v5222
      %v5263 = vadd.f32 %v5095, %v5225
      %v5264 = vadd.f32 %v5096, %v5227
      %v5265 = vadd.f32 %v5097, %v5230
      %v5266 = vadd.f32 %v5098, %v5232
      %v5267 = vadd.f32 %v5099, %v5235
      %v5268 = vadd.f32 %v5100, %v5237
      %v5269 = vadd.f32 %v5101, %v5240
      %v5270 = vadd.f32 %v5102, %v5242
      %v5271 = vadd.f32 %v5103, %v5245
      %v5272 = vadd.f32 %v5104, %v5247
      %v5273 = vadd.f32 %v5105, %v5250
      %v5274 = vadd.f32 %v5106, %v5252
      %v5275 = vadd.f32 %v5107, %v5255
      %v5276 = vadd.f32 %v5108, %v5257
      %v5277 = vld [vmem:[%s5] sm:$0x1]
      %v5279 = vperm.slane %v5277, 0
      %v5281 = vmul.f32 %v5259, %v5279
      %v5282 = vmul.f32 %v5260, %v5279
      %v5283 = vmul.f32 %v5261, %v5279
      %v5284 = vmul.f32 %v5262, %v5279
      %v5285 = vmul.f32 %v5263, %v5279
      %v5286 = vmul.f32 %v5264, %v5279
      %v5287 = vmul.f32 %v5265, %v5279
      %v5288 = vmul.f32 %v5266, %v5279
      %v5289 = vmul.f32 %v5267, %v5279
      %v5290 = vmul.f32 %v5268, %v5279
      %v5291 = vmul.f32 %v5269, %v5279
      %v5292 = vmul.f32 %v5270, %v5279
      %v5293 = vmul.f32 %v5271, %v5279
      %v5294 = vmul.f32 %v5272, %v5279
      %v5295 = vmul.f32 %v5273, %v5279
      %v5296 = vmul.f32 %v5274, %v5279
      %v5297 = vmul.f32 %v5275, %v5279
      %v5298 = vmul.f32 %v5276, %v5279
      %v5299 = vld [vmem:[%s6] sm:$0x1]
      %v5301 = vperm.slane %v5299, 0
      %v5303 = vadd.f32 %v5281, %v5301
      %v5304 = vadd.f32 %v5282, %v5301
      %v5305 = vadd.f32 %v5283, %v5301
      %v5306 = vadd.f32 %v5284, %v5301
      %v5307 = vadd.f32 %v5285, %v5301
      %v5308 = vadd.f32 %v5286, %v5301
      %v5309 = vadd.f32 %v5287, %v5301
      %v5310 = vadd.f32 %v5288, %v5301
      %v5311 = vadd.f32 %v5289, %v5301
      %v5312 = vadd.f32 %v5290, %v5301
      %v5313 = vadd.f32 %v5291, %v5301
      %v5314 = vadd.f32 %v5292, %v5301
      %v5315 = vadd.f32 %v5293, %v5301
      %v5316 = vadd.f32 %v5294, %v5301
      %v5317 = vadd.f32 %v5295, %v5301
      %v5318 = vadd.f32 %v5296, %v5301
      %v5319 = vadd.f32 %v5297, %v5301
      %v5320 = vadd.f32 %v5298, %v5301
      %vm5321 = vcmp.ge.f32.partialorder %v5303, 0.0
      %vm5322 = vcmp.ge.f32.partialorder %v5304, 0.0
      %vm5323 = vcmp.ge.f32.partialorder %v5305, 0.0
      %vm5324 = vcmp.ge.f32.partialorder %v5306, 0.0
      %vm5325 = vcmp.ge.f32.partialorder %v5307, 0.0
      %vm5326 = vcmp.ge.f32.partialorder %v5308, 0.0
      %vm5327 = vcmp.ge.f32.partialorder %v5309, 0.0
      %vm5328 = vcmp.ge.f32.partialorder %v5310, 0.0
      %vm5329 = vcmp.ge.f32.partialorder %v5311, 0.0
      %vm5330 = vcmp.ge.f32.partialorder %v5312, 0.0
      %vm5331 = vcmp.ge.f32.partialorder %v5313, 0.0
      %vm5332 = vcmp.ge.f32.partialorder %v5314, 0.0
      %vm5333 = vcmp.ge.f32.partialorder %v5315, 0.0
      %vm5334 = vcmp.ge.f32.partialorder %v5316, 0.0
      %vm5335 = vcmp.ge.f32.partialorder %v5317, 0.0
      %vm5336 = vcmp.ge.f32.partialorder %v5318, 0.0
      %vm5337 = vcmp.ge.f32.partialorder %v5319, 0.0
      %vm5338 = vcmp.ge.f32.partialorder %v5320, 0.0
      %v5339 = vmul.f32 %v5303, 0.1
      %v5340 = vmul.f32 %v5304, 0.1
      %v5341 = vmul.f32 %v5305, 0.1
      %v5342 = vmul.f32 %v5306, 0.1
      %v5343 = vmul.f32 %v5307, 0.1
      %v5344 = vmul.f32 %v5308, 0.1
      %v5345 = vmul.f32 %v5309, 0.1
      %v5346 = vmul.f32 %v5310, 0.1
      %v5347 = vmul.f32 %v5311, 0.1
      %v5348 = vmul.f32 %v5312, 0.1
      %v5349 = vmul.f32 %v5313, 0.1
      %v5350 = vmul.f32 %v5314, 0.1
      %v5351 = vmul.f32 %v5315, 0.1
      %v5352 = vmul.f32 %v5316, 0.1
      %v5353 = vmul.f32 %v5317, 0.1
      %v5354 = vmul.f32 %v5318, 0.1
      %v5355 = vmul.f32 %v5319, 0.1
      %v5356 = vmul.f32 %v5320, 0.1
      %v5357 = vsel %vm5321, %v5303, %v5339
      %v5358 = vsel %vm5322, %v5304, %v5340
      %v5359 = vsel %vm5323, %v5305, %v5341
      %v5360 = vsel %vm5324, %v5306, %v5342
      %v5361 = vsel %vm5325, %v5307, %v5343
      %v5362 = vsel %vm5326, %v5308, %v5344
      %v5363 = vsel %vm5327, %v5309, %v5345
      %v5364 = vsel %vm5328, %v5310, %v5346
      %v5365 = vsel %vm5329, %v5311, %v5347
      %v5366 = vsel %vm5330, %v5312, %v5348
      %v5367 = vsel %vm5331, %v5313, %v5349
      %v5368 = vsel %vm5332, %v5314, %v5350
      %v5369 = vsel %vm5333, %v5315, %v5351
      %v5370 = vsel %vm5334, %v5316, %v5352
      %v5371 = vsel %vm5335, %v5317, %v5353
      %v5372 = vsel %vm5336, %v5318, %v5354
      %v5373 = vsel %vm5337, %v5319, %v5355
      %v5374 = vsel %vm5338, %v5320, %v5356
      %v5375 = vunpack.c.l.bf16 %v4003
      %v5376 = vunpack.c.l.bf16 %v4004
      %v5377 = vunpack.c.l.bf16 %v4005
      %v5378 = vunpack.c.l.bf16 %v4006
      %v5379 = vunpack.c.l.bf16 %v4007
      %v5380 = vunpack.c.l.bf16 %v4008
      %v5381 = vunpack.c.l.bf16 %v4009
      %v5382 = vunpack.c.l.bf16 %v4010
      %v5383 = vunpack.c.l.bf16 %v4011
      %v5384 = vunpack.c.l.bf16 %v4012
      %v5385 = vunpack.c.l.bf16 %v4013
      %v5386 = vunpack.c.l.bf16 %v4014
      %v5387 = vunpack.c.l.bf16 %v4015
      %v5388 = vunpack.c.l.bf16 %v4016
      %v5389 = vunpack.c.l.bf16 %v4017
      %v5390 = vunpack.c.l.bf16 %v4018
      %v5391 = vunpack.c.l.bf16 %v4019
      %v5392 = vunpack.c.l.bf16 %v4020
      %v5393 = vunpack.c.l.bf16 %v4234
      %v5413 = vrot.slane %v5375, 3
      %v5414 = vrot.slane %v5376, 3
      %v5415 = vsel %vm3346, %v5413, %v5414
      %v5416 = vrot.slane %v5377, 3
      %v5417 = vsel %vm3346, %v5414, %v5416
      %v5418 = vrot.slane %v5378, 3
      %v5419 = vsel %vm3346, %v5416, %v5418
      %v5420 = vrot.slane %v5379, 3
      %v5421 = vsel %vm3346, %v5418, %v5420
      %v5422 = vrot.slane %v5380, 3
      %v5423 = vsel %vm3346, %v5420, %v5422
      %v5424 = vrot.slane %v5381, 3
      %v5425 = vsel %vm3346, %v5422, %v5424
      %v5426 = vrot.slane %v5382, 3
      %v5427 = vsel %vm3346, %v5424, %v5426
      %v5428 = vrot.slane %v5383, 3
      %v5429 = vsel %vm3346, %v5426, %v5428
      %v5430 = vrot.slane %v5384, 3
      %v5431 = vsel %vm3346, %v5428, %v5430
      %v5432 = vrot.slane %v5385, 3
      %v5433 = vsel %vm3346, %v5430, %v5432
      %v5434 = vrot.slane %v5386, 3
      %v5435 = vsel %vm3346, %v5432, %v5434
      %v5436 = vrot.slane %v5387, 3
      %v5437 = vsel %vm3346, %v5434, %v5436
      %v5438 = vrot.slane %v5388, 3
      %v5439 = vsel %vm3346, %v5436, %v5438
      %v5440 = vrot.slane %v5389, 3
      %v5441 = vsel %vm3346, %v5438, %v5440
      %v5442 = vrot.slane %v5390, 3
      %v5443 = vsel %vm3346, %v5440, %v5442
      %v5444 = vrot.slane %v5391, 3
      %v5445 = vsel %vm3346, %v5442, %v5444
      %v5446 = vrot.slane %v5392, 3
      %v5447 = vsel %vm3346, %v5444, %v5446
      %v5448 = vrot.slane %v5393, 3
      %v5449 = vsel %vm3346, %v5446, %v5448
      %v5468 = vadd.f32 %v5357, %v5415
      %v5469 = vadd.f32 %v5358, %v5417
      %v5470 = vadd.f32 %v5359, %v5419
      %v5471 = vadd.f32 %v5360, %v5421
      %v5472 = vadd.f32 %v5361, %v5423
      %v5473 = vadd.f32 %v5362, %v5425
      %v5474 = vadd.f32 %v5363, %v5427
      %v5475 = vadd.f32 %v5364, %v5429
      %v5476 = vadd.f32 %v5365, %v5431
      %v5477 = vadd.f32 %v5366, %v5433
      %v5478 = vadd.f32 %v5367, %v5435
      %v5479 = vadd.f32 %v5368, %v5437
      %v5480 = vadd.f32 %v5369, %v5439
      %v5481 = vadd.f32 %v5370, %v5441
      %v5482 = vadd.f32 %v5371, %v5443
      %v5483 = vadd.f32 %v5372, %v5445
      %v5484 = vadd.f32 %v5373, %v5447
      %v5485 = vadd.f32 %v5374, %v5449
      %5486 = vst [vmem:[%s313 + $0x90] sm:$0xff] %v5468
      %5487 = vst [vmem:[%s313 + $0x98] sm:$0xff] %v5469
      %5488 = vst [vmem:[%s313 + $0xa0] sm:$0xff] %v5470
      %5489 = vst [vmem:[%s313 + $0xa8] sm:$0xff] %v5471
      %5490 = vst [vmem:[%s313 + $0xb0] sm:$0xff] %v5472
      %5491 = vst [vmem:[%s313 + $0xb8] sm:$0xff] %v5473
      %5492 = vst [vmem:[%s313 + $0xc0] sm:$0xff] %v5474
      %5493 = vst [vmem:[%s313 + $0xc8] sm:$0xff] %v5475
      %5494 = vst [vmem:[%s313 + $0xd0] sm:$0xff] %v5476
      %5495 = vst [vmem:[%s313 + $0xd8] sm:$0xff] %v5477
      %5496 = vst [vmem:[%s313 + $0xe0] sm:$0xff] %v5478
      %5497 = vst [vmem:[%s313 + $0xe8] sm:$0xff] %v5479
      %5498 = vst [vmem:[%s313 + $0xf0] sm:$0xff] %v5480
      %5499 = vst [vmem:[%s313 + $0xf8] sm:$0xff] %v5481
      %5500 = vst [vmem:[%s313 + $0x100] sm:$0xff] %v5482
      %5501 = vst [vmem:[%s313 + $0x108] sm:$0xff] %v5483
      %5502 = vst [vmem:[%s313 + $0x110] sm:$0xff] %v5484
      %5503 = vst [vmem:[%s313 + $0x118] sm:$0xff] %v5485
      %5504 = vst [vmem:[#allocation3] sm:$0xff] -inf
      %5505 = vst [vmem:[#allocation3 + $0x8] sm:$0xff] -inf
      %5506 = vst [vmem:[#allocation3 + $0x10] sm:$0x3] -inf
      %5507 = vst [vmem:[#allocation3 + $0x18] sm:$0xff] -inf
      %5508 = vst [vmem:[#allocation3 + $0x20] sm:$0xff] -inf
      %5509 = vst [vmem:[#allocation3 + $0x28] sm:$0x3] -inf
      %5510 = vst [vmem:[#allocation3 + $0x30] sm:$0xff] -inf
      %5511 = vst [vmem:[#allocation3 + $0x38] sm:$0xff] -inf
      %5512 = vst [vmem:[#allocation3 + $0x40] sm:$0x3] -inf
      %5513 = vst [vmem:[#allocation3 + $0x48] sm:$0xff] -inf
      %5514 = vst [vmem:[#allocation3 + $0x50] sm:$0xff] -inf
      %5515 = vst [vmem:[#allocation3 + $0x58] sm:$0x3] -inf
      %5516 = vst [vmem:[#allocation3 + $0x60] sm:$0xff] -inf
      %5517 = vst [vmem:[#allocation3 + $0x68] sm:$0xff] -inf
      %5518 = vst [vmem:[#allocation3 + $0x70] sm:$0x3] -inf
      %5519 = vst [vmem:[#allocation3 + $0x78] sm:$0xff] -inf
      %5520 = vst [vmem:[#allocation3 + $0x80] sm:$0xff] -inf
      %5521 = vst [vmem:[#allocation3 + $0x88] sm:$0x3] -inf
      %5522 = vst [vmem:[#allocation3 + $0x90] sm:$0xff] -inf
      %5523 = vst [vmem:[#allocation3 + $0x98] sm:$0xff] -inf
      %5524 = vst [vmem:[#allocation3 + $0xa0] sm:$0x3] -inf
      %5525 = vst [vmem:[#allocation3 + $0xa8] sm:$0xff] -inf
      %5526 = vst [vmem:[#allocation3 + $0xb0] sm:$0xff] -inf
      %5527 = vst [vmem:[#allocation3 + $0xb8] sm:$0x3] -inf
      %5528 = vst [vmem:[#allocation3 + $0xc0] sm:$0xff] -inf
      %5529 = vst [vmem:[#allocation3 + $0xc8] sm:$0xff] -inf
      %5530 = vst [vmem:[#allocation3 + $0xd0] sm:$0x3] -inf
      %5531 = vst [vmem:[#allocation3 + $0xd8] sm:$0xff] -inf
      %5532 = vst [vmem:[#allocation3 + $0xe0] sm:$0xff] -inf
      %5533 = vst [vmem:[#allocation3 + $0xe8] sm:$0x3] -inf
      %5534 = vst [vmem:[#allocation3 + $0xf0] sm:$0xff] -inf
      %5535 = vst [vmem:[#allocation3 + $0xf8] sm:$0xff] -inf
      %5536 = vst [vmem:[#allocation3 + $0x100] sm:$0x3] -inf
      %5537 = vst [vmem:[#allocation3 + $0x108] sm:$0xff] -inf
      %5538 = vst [vmem:[#allocation3 + $0x110] sm:$0xff] -inf
      %5539 = vst [vmem:[#allocation3 + $0x118] sm:$0x3] -inf
      %5540 = vst [vmem:[#allocation3 + $0x120] sm:$0xff] -inf
      %5541 = vst [vmem:[#allocation3 + $0x128] sm:$0xff] -inf
      %5542 = vst [vmem:[#allocation3 + $0x130] sm:$0x3] -inf
      %5543 = vst [vmem:[#allocation3 + $0x138] sm:$0xff] -inf
      %5544 = vst [vmem:[#allocation3 + $0x140] sm:$0xff] -inf
      %5545 = vst [vmem:[#allocation3 + $0x148] sm:$0x3] -inf
      %5546 = vst [vmem:[#allocation3 + $0x150] sm:$0xff] -inf
      %5547 = vst [vmem:[#allocation3 + $0x158] sm:$0xff] -inf
      %5548 = vst [vmem:[#allocation3 + $0x160] sm:$0x3] -inf
      %5549 = vst [vmem:[#allocation3 + $0x168] sm:$0xff] -inf
      %5550 = vst [vmem:[#allocation3 + $0x170] sm:$0xff] -inf
      %5551 = vst [vmem:[#allocation3 + $0x178] sm:$0x3] -inf
      %5552 = vst [vmem:[#allocation3 + $0x180] sm:$0xff] -inf
      %5553 = vst [vmem:[#allocation3 + $0x188] sm:$0xff] -inf
      %5554 = vst [vmem:[#allocation3 + $0x190] sm:$0x3] -inf
      %5555 = vst [vmem:[#allocation3 + $0x198] sm:$0xff] -inf
      %5556 = vst [vmem:[#allocation3 + $0x1a0] sm:$0xff] -inf
      %5557 = vst [vmem:[#allocation3 + $0x1a8] sm:$0x3] -inf
      %v5558 = vld [vmem:[%s313] sm:$0xff]
      %v5559 = vld [vmem:[%s313 + $0x8] sm:$0xff]
      %s5560 = scalar_lea.vmem [#allocation3], 24
      %5561 = vst [vmem:[%s5560 + $0x1] sm:$0xff] %v5558
      %5562 = vst [vmem:[%s5560 + $0x9] sm:$0xff] %v5559
      %v5563 = vld [vmem:[%s313 + $0x12] sm:$0xff]
      %v5564 = vld [vmem:[%s313 + $0x1a] sm:$0xff]
      %s5565 = scalar_lea.vmem [#allocation3], 48
      %5566 = vst [vmem:[%s5565 + $0x1] sm:$0xff] %v5563
      %5567 = vst [vmem:[%s5565 + $0x9] sm:$0xff] %v5564
      %v5568 = vld [vmem:[%s313 + $0x24] sm:$0xff]
      %v5569 = vld [vmem:[%s313 + $0x2c] sm:$0xff]
      %s5570 = scalar_lea.vmem [#allocation3], 72
      %5571 = vst [vmem:[%s5570 + $0x1] sm:$0xff] %v5568
      %5572 = vst [vmem:[%s5570 + $0x9] sm:$0xff] %v5569
      %v5573 = vld [vmem:[%s313 + $0x36] sm:$0xff]
      %v5574 = vld [vmem:[%s313 + $0x3e] sm:$0xff]
      %s5575 = scalar_lea.vmem [#allocation3], 96
      %5576 = vst [vmem:[%s5575 + $0x1] sm:$0xff] %v5573
      %5577 = vst [vmem:[%s5575 + $0x9] sm:$0xff] %v5574
      %v5578 = vld [vmem:[%s313 + $0x48] sm:$0xff]
      %v5579 = vld [vmem:[%s313 + $0x50] sm:$0xff]
      %s5580 = scalar_lea.vmem [#allocation3], 120
      %5581 = vst [vmem:[%s5580 + $0x1] sm:$0xff] %v5578
      %5582 = vst [vmem:[%s5580 + $0x9] sm:$0xff] %v5579
      %v5583 = vld [vmem:[%s313 + $0x5a] sm:$0xff]
      %v5584 = vld [vmem:[%s313 + $0x62] sm:$0xff]
      %s5585 = scalar_lea.vmem [#allocation3], 144
      %5586 = vst [vmem:[%s5585 + $0x1] sm:$0xff] %v5583
      %5587 = vst [vmem:[%s5585 + $0x9] sm:$0xff] %v5584
      %v5588 = vld [vmem:[%s313 + $0x6c] sm:$0xff]
      %v5589 = vld [vmem:[%s313 + $0x74] sm:$0xff]
      %s5590 = scalar_lea.vmem [#allocation3], 168
      %5591 = vst [vmem:[%s5590 + $0x1] sm:$0xff] %v5588
      %5592 = vst [vmem:[%s5590 + $0x9] sm:$0xff] %v5589
      %v5593 = vld [vmem:[%s313 + $0x7e] sm:$0xff]
      %v5594 = vld [vmem:[%s313 + $0x86] sm:$0xff]
      %s5595 = scalar_lea.vmem [#allocation3], 192
      %5596 = vst [vmem:[%s5595 + $0x1] sm:$0xff] %v5593
      %5597 = vst [vmem:[%s5595 + $0x9] sm:$0xff] %v5594
      %v5598 = vld [vmem:[%s313 + $0x90] sm:$0xff]
      %v5599 = vld [vmem:[%s313 + $0x98] sm:$0xff]
      %s5600 = scalar_lea.vmem [#allocation3], 216
      %5601 = vst [vmem:[%s5600 + $0x1] sm:$0xff] %v5598
      %5602 = vst [vmem:[%s5600 + $0x9] sm:$0xff] %v5599
      %v5603 = vld [vmem:[%s313 + $0xa2] sm:$0xff]
      %v5604 = vld [vmem:[%s313 + $0xaa] sm:$0xff]
      %s5605 = scalar_lea.vmem [#allocation3], 240
      %5606 = vst [vmem:[%s5605 + $0x1] sm:$0xff] %v5603
      %5607 = vst [vmem:[%s5605 + $0x9] sm:$0xff] %v5604
      %v5608 = vld [vmem:[%s313 + $0xb4] sm:$0xff]
      %v5609 = vld [vmem:[%s313 + $0xbc] sm:$0xff]
      %s5610 = scalar_lea.vmem [#allocation3], 264
      %5611 = vst [vmem:[%s5610 + $0x1] sm:$0xff] %v5608
      %5612 = vst [vmem:[%s5610 + $0x9] sm:$0xff] %v5609
      %v5613 = vld [vmem:[%s313 + $0xc6] sm:$0xff]
      %v5614 = vld [vmem:[%s313 + $0xce] sm:$0xff]
      %s5615 = scalar_lea.vmem [#allocation3], 288
      %5616 = vst [vmem:[%s5615 + $0x1] sm:$0xff] %v5613
      %5617 = vst [vmem:[%s5615 + $0x9] sm:$0xff] %v5614
      %v5618 = vld [vmem:[%s313 + $0xd8] sm:$0xff]
      %v5619 = vld [vmem:[%s313 + $0xe0] sm:$0xff]
      %s5620 = scalar_lea.vmem [#allocation3], 312
      %5621 = vst [vmem:[%s5620 + $0x1] sm:$0xff] %v5618
      %5622 = vst [vmem:[%s5620 + $0x9] sm:$0xff] %v5619
      %v5623 = vld [vmem:[%s313 + $0xea] sm:$0xff]
      %v5624 = vld [vmem:[%s313 + $0xf2] sm:$0xff]
      %s5625 = scalar_lea.vmem [#allocation3], 336
      %5626 = vst [vmem:[%s5625 + $0x1] sm:$0xff] %v5623
      %5627 = vst [vmem:[%s5625 + $0x9] sm:$0xff] %v5624
      %v5628 = vld [vmem:[%s313 + $0xfc] sm:$0xff]
      %v5629 = vld [vmem:[%s313 + $0x104] sm:$0xff]
      %s5630 = scalar_lea.vmem [#allocation3], 360
      %5631 = vst [vmem:[%s5630 + $0x1] sm:$0xff] %v5628
      %5632 = vst [vmem:[%s5630 + $0x9] sm:$0xff] %v5629
      %v5633 = vld [vmem:[%s313 + $0x10e] sm:$0xff]
      %v5634 = vld [vmem:[%s313 + $0x116] sm:$0xff]
      %s5635 = scalar_lea.vmem [#allocation3], 384
      %5636 = vst [vmem:[%s5635 + $0x1] sm:$0xff] %v5633
      %5637 = vst [vmem:[%s5635 + $0x9] sm:$0xff] %v5634
      %v5638 = vld [vmem:[#allocation3] sm:$0xff]
      %v5639 = vld [vmem:[#allocation3 + $0x8] sm:$0xff]
      %v5640 = vld [vmem:[#allocation3 + $0x10] sm:$0x3]
      %v5641 = vld [vmem:[#allocation3 + $0x30] sm:$0xff]
      %v5642 = vld [vmem:[#allocation3 + $0x38] sm:$0xff]
      %v5643 = vld [vmem:[#allocation3 + $0x40] sm:$0x3]
      %v5644 = vld [vmem:[#allocation3 + $0x60] sm:$0xff]
      %v5645 = vld [vmem:[#allocation3 + $0x68] sm:$0xff]
      %v5646 = vld [vmem:[#allocation3 + $0x70] sm:$0x3]
      %v5647 = vld [vmem:[#allocation3 + $0x90] sm:$0xff]
      %v5648 = vld [vmem:[#allocation3 + $0x98] sm:$0xff]
      %v5649 = vld [vmem:[#allocation3 + $0xa0] sm:$0x3]
      %v5650 = vld [vmem:[#allocation3 + $0xc0] sm:$0xff]
      %v5651 = vld [vmem:[#allocation3 + $0xc8] sm:$0xff]
      %v5652 = vld [vmem:[#allocation3 + $0xd0] sm:$0x3]
      %v5653 = vld [vmem:[#allocation3 + $0xf0] sm:$0xff]
      %v5654 = vld [vmem:[#allocation3 + $0xf8] sm:$0xff]
      %v5655 = vld [vmem:[#allocation3 + $0x100] sm:$0x3]
      %v5656 = vld [vmem:[#allocation3 + $0x120] sm:$0xff]
      %v5657 = vld [vmem:[#allocation3 + $0x128] sm:$0xff]
      %v5658 = vld [vmem:[#allocation3 + $0x130] sm:$0x3]
      %v5659 = vld [vmem:[#allocation3 + $0x150] sm:$0xff]
      %v5660 = vld [vmem:[#allocation3 + $0x158] sm:$0xff]
      %v5661 = vld [vmem:[#allocation3 + $0x160] sm:$0x3]
      %v5662 = vld [vmem:[%s5560] sm:$0xff]
      %v5663 = vld [vmem:[%s5560 + $0x8] sm:$0xff]
      %v5664 = vld [vmem:[%s5560 + $0x10] sm:$0x3]
      %v5665 = vld [vmem:[%s5560 + $0x30] sm:$0xff]
      %v5666 = vld [vmem:[%s5560 + $0x38] sm:$0xff]
      %v5667 = vld [vmem:[%s5560 + $0x40] sm:$0x3]
      %v5668 = vld [vmem:[%s5560 + $0x60] sm:$0xff]
      %v5669 = vld [vmem:[%s5560 + $0x68] sm:$0xff]
      %v5670 = vld [vmem:[%s5560 + $0x70] sm:$0x3]
      %v5671 = vld [vmem:[%s5560 + $0x90] sm:$0xff]
      %v5672 = vld [vmem:[%s5560 + $0x98] sm:$0xff]
      %v5673 = vld [vmem:[%s5560 + $0xa0] sm:$0x3]
      %v5674 = vld [vmem:[%s5560 + $0xc0] sm:$0xff]
      %v5675 = vld [vmem:[%s5560 + $0xc8] sm:$0xff]
      %v5676 = vld [vmem:[%s5560 + $0xd0] sm:$0x3]
      %v5677 = vld [vmem:[%s5560 + $0xf0] sm:$0xff]
      %v5678 = vld [vmem:[%s5560 + $0xf8] sm:$0xff]
      %v5679 = vld [vmem:[%s5560 + $0x100] sm:$0x3]
      %v5680 = vld [vmem:[%s5560 + $0x120] sm:$0xff]
      %v5681 = vld [vmem:[%s5560 + $0x128] sm:$0xff]
      %v5682 = vld [vmem:[%s5560 + $0x130] sm:$0x3]
      %v5683 = vld [vmem:[%s5560 + $0x150] sm:$0xff]
      %v5684 = vld [vmem:[%s5560 + $0x158] sm:$0xff]
      %v5685 = vld [vmem:[%s5560 + $0x160] sm:$0x3]
      %v5686 = vmax.f32 %v5638, %v5662
      %v5687 = vmax.f32 %v5639, %v5663
      %v5688 = vmax.f32 %v5640, %v5664
      %v5689 = vmax.f32 %v5641, %v5665
      %v5690 = vmax.f32 %v5642, %v5666
      %v5691 = vmax.f32 %v5643, %v5667
      %v5692 = vmax.f32 %v5644, %v5668
      %v5693 = vmax.f32 %v5645, %v5669
      %v5694 = vmax.f32 %v5646, %v5670
      %v5695 = vmax.f32 %v5647, %v5671
      %v5696 = vmax.f32 %v5648, %v5672
      %v5697 = vmax.f32 %v5649, %v5673
      %v5698 = vmax.f32 %v5650, %v5674
      %v5699 = vmax.f32 %v5651, %v5675
      %v5700 = vmax.f32 %v5652, %v5676
      %v5701 = vmax.f32 %v5653, %v5677
      %v5702 = vmax.f32 %v5654, %v5678
      %v5703 = vmax.f32 %v5655, %v5679
      %v5704 = vmax.f32 %v5656, %v5680
      %v5705 = vmax.f32 %v5657, %v5681
      %v5706 = vmax.f32 %v5658, %v5682
      %v5707 = vmax.f32 %v5659, %v5683
      %v5708 = vmax.f32 %v5660, %v5684
      %v5709 = vmax.f32 %v5661, %v5685
      %v5710 = vld [vmem:[%s5565] sm:$0xff]
      %v5711 = vld [vmem:[%s5565 + $0x8] sm:$0xff]
      %v5712 = vld [vmem:[%s5565 + $0x10] sm:$0x3]
      %v5713 = vld [vmem:[%s5565 + $0x30] sm:$0xff]
      %v5714 = vld [vmem:[%s5565 + $0x38] sm:$0xff]
      %v5715 = vld [vmem:[%s5565 + $0x40] sm:$0x3]
      %v5716 = vld [vmem:[%s5565 + $0x60] sm:$0xff]
      %v5717 = vld [vmem:[%s5565 + $0x68] sm:$0xff]
      %v5718 = vld [vmem:[%s5565 + $0x70] sm:$0x3]
      %v5719 = vld [vmem:[%s5565 + $0x90] sm:$0xff]
      %v5720 = vld [vmem:[%s5565 + $0x98] sm:$0xff]
      %v5721 = vld [vmem:[%s5565 + $0xa0] sm:$0x3]
      %v5722 = vld [vmem:[%s5565 + $0xc0] sm:$0xff]
      %v5723 = vld [vmem:[%s5565 + $0xc8] sm:$0xff]
      %v5724 = vld [vmem:[%s5565 + $0xd0] sm:$0x3]
      %v5725 = vld [vmem:[%s5565 + $0xf0] sm:$0xff]
      %v5726 = vld [vmem:[%s5565 + $0xf8] sm:$0xff]
      %v5727 = vld [vmem:[%s5565 + $0x100] sm:$0x3]
      %v5728 = vld [vmem:[%s5565 + $0x120] sm:$0xff]
      %v5729 = vld [vmem:[%s5565 + $0x128] sm:$0xff]
      %v5730 = vld [vmem:[%s5565 + $0x130] sm:$0x3]
      %v5731 = vld [vmem:[%s5565 + $0x150] sm:$0xff]
      %v5732 = vld [vmem:[%s5565 + $0x158] sm:$0xff]
      %v5733 = vld [vmem:[%s5565 + $0x160] sm:$0x3]
      %v5734 = vmax.f32 %v5686, %v5710
      %v5735 = vmax.f32 %v5687, %v5711
      %v5736 = vmax.f32 %v5688, %v5712
      %v5737 = vmax.f32 %v5689, %v5713
      %v5738 = vmax.f32 %v5690, %v5714
      %v5739 = vmax.f32 %v5691, %v5715
      %v5740 = vmax.f32 %v5692, %v5716
      %v5741 = vmax.f32 %v5693, %v5717
      %v5742 = vmax.f32 %v5694, %v5718
      %v5743 = vmax.f32 %v5695, %v5719
      %v5744 = vmax.f32 %v5696, %v5720
      %v5745 = vmax.f32 %v5697, %v5721
      %v5746 = vmax.f32 %v5698, %v5722
      %v5747 = vmax.f32 %v5699, %v5723
      %v5748 = vmax.f32 %v5700, %v5724
      %v5749 = vmax.f32 %v5701, %v5725
      %v5750 = vmax.f32 %v5702, %v5726
      %v5751 = vmax.f32 %v5703, %v5727
      %v5752 = vmax.f32 %v5704, %v5728
      %v5753 = vmax.f32 %v5705, %v5729
      %v5754 = vmax.f32 %v5706, %v5730
      %v5755 = vmax.f32 %v5707, %v5731
      %v5756 = vmax.f32 %v5708, %v5732
      %v5757 = vmax.f32 %v5709, %v5733
      %5758 = vst [vmem:[#allocation4] sm:$0xff] %v5734
      %5759 = vst [vmem:[#allocation4 + $0x8] sm:$0xff] %v5735
      %5760 = vst [vmem:[#allocation4 + $0x10] sm:$0x3] %v5736
      %5761 = vst [vmem:[#allocation4 + $0x18] sm:$0xff] %v5737
      %5762 = vst [vmem:[#allocation4 + $0x20] sm:$0xff] %v5738
      %5763 = vst [vmem:[#allocation4 + $0x28] sm:$0x3] %v5739
      %5764 = vst [vmem:[#allocation4 + $0x30] sm:$0xff] %v5740
      %5765 = vst [vmem:[#allocation4 + $0x38] sm:$0xff] %v5741
      %5766 = vst [vmem:[#allocation4 + $0x40] sm:$0x3] %v5742
      %5767 = vst [vmem:[#allocation4 + $0x48] sm:$0xff] %v5743
      %5768 = vst [vmem:[#allocation4 + $0x50] sm:$0xff] %v5744
      %5769 = vst [vmem:[#allocation4 + $0x58] sm:$0x3] %v5745
      %5770 = vst [vmem:[#allocation4 + $0x60] sm:$0xff] %v5746
      %5771 = vst [vmem:[#allocation4 + $0x68] sm:$0xff] %v5747
      %5772 = vst [vmem:[#allocation4 + $0x70] sm:$0x3] %v5748
      %5773 = vst [vmem:[#allocation4 + $0x78] sm:$0xff] %v5749
      %5774 = vst [vmem:[#allocation4 + $0x80] sm:$0xff] %v5750
      %5775 = vst [vmem:[#allocation4 + $0x88] sm:$0x3] %v5751
      %5776 = vst [vmem:[#allocation4 + $0x90] sm:$0xff] %v5752
      %5777 = vst [vmem:[#allocation4 + $0x98] sm:$0xff] %v5753
      %5778 = vst [vmem:[#allocation4 + $0xa0] sm:$0x3] %v5754
      %5779 = vst [vmem:[#allocation4 + $0xa8] sm:$0xff] %v5755
      %5780 = vst [vmem:[#allocation4 + $0xb0] sm:$0xff] %v5756
      %5781 = vst [vmem:[#allocation4 + $0xb8] sm:$0x3] %v5757
      %v5782 = vld [vmem:[#allocation4] ss:$2 sm:$0xff]
      %s5783 = scalar_lea.vmem [#allocation4], 24
      %v5784 = vld [vmem:[%s5783] ss:$2 sm:$0xff]
      %s5785 = scalar_lea.vmem [#allocation4], 48
      %v5786 = vld [vmem:[%s5785] ss:$2 sm:$0xff]
      %s5787 = scalar_lea.vmem [#allocation4], 72
      %v5788 = vld [vmem:[%s5787] ss:$2 sm:$0xff]
      %s5789 = scalar_lea.vmem [#allocation4], 96
      %v5790 = vld [vmem:[%s5789] ss:$2 sm:$0xff]
      %s5791 = scalar_lea.vmem [#allocation4], 120
      %v5792 = vld [vmem:[%s5791] ss:$2 sm:$0xff]
      %s5793 = scalar_lea.vmem [#allocation4], 144
      %v5794 = vld [vmem:[%s5793] ss:$2 sm:$0xff]
      %s5795 = scalar_lea.vmem [#allocation4], 168
      %v5796 = vld [vmem:[%s5795] ss:$2 sm:$0xff]
      %s5797 = scalar_lea.vmem [#allocation4], 1
      %v5798 = vld [vmem:[%s5797] ss:$2 sm:$0xff]
      %s5799 = scalar_lea.vmem [#allocation4], 25
      %v5800 = vld [vmem:[%s5799] ss:$2 sm:$0xff]
      %s5801 = scalar_lea.vmem [#allocation4], 49
      %v5802 = vld [vmem:[%s5801] ss:$2 sm:$0xff]
      %s5803 = scalar_lea.vmem [#allocation4], 73
      %v5804 = vld [vmem:[%s5803] ss:$2 sm:$0xff]
      %s5805 = scalar_lea.vmem [#allocation4], 97
      %v5806 = vld [vmem:[%s5805] ss:$2 sm:$0xff]
      %s5807 = scalar_lea.vmem [#allocation4], 121
      %v5808 = vld [vmem:[%s5807] ss:$2 sm:$0xff]
      %s5809 = scalar_lea.vmem [#allocation4], 145
      %v5810 = vld [vmem:[%s5809] ss:$2 sm:$0xff]
      %s5811 = scalar_lea.vmem [#allocation4], 169
      %v5812 = vld [vmem:[%s5811] ss:$2 sm:$0xff]
      %v5813 = vmax.f32 %v5782, %v5798
      %v5814 = vmax.f32 %v5784, %v5800
      %v5815 = vmax.f32 %v5786, %v5802
      %v5816 = vmax.f32 %v5788, %v5804
      %v5817 = vmax.f32 %v5790, %v5806
      %v5818 = vmax.f32 %v5792, %v5808
      %v5819 = vmax.f32 %v5794, %v5810
      %v5820 = vmax.f32 %v5796, %v5812
      %s5821 = scalar_lea.vmem [#allocation4], 2
      %v5822 = vld [vmem:[%s5821] ss:$2 sm:$0xff]
      %s5823 = scalar_lea.vmem [#allocation4], 26
      %v5824 = vld [vmem:[%s5823] ss:$2 sm:$0xff]
      %s5825 = scalar_lea.vmem [#allocation4], 50
      %v5826 = vld [vmem:[%s5825] ss:$2 sm:$0xff]
      %s5827 = scalar_lea.vmem [#allocation4], 74
      %v5828 = vld [vmem:[%s5827] ss:$2 sm:$0xff]
      %s5829 = scalar_lea.vmem [#allocation4], 98
      %v5830 = vld [vmem:[%s5829] ss:$2 sm:$0xff]
      %s5831 = scalar_lea.vmem [#allocation4], 122
      %v5832 = vld [vmem:[%s5831] ss:$2 sm:$0xff]
      %s5833 = scalar_lea.vmem [#allocation4], 146
      %v5834 = vld [vmem:[%s5833] ss:$2 sm:$0xff]
      %s5835 = scalar_lea.vmem [#allocation4], 170
      %v5836 = vld [vmem:[%s5835] ss:$2 sm:$0xff]
      %v5837 = vmax.f32 %v5813, %v5822
      %v5838 = vmax.f32 %v5814, %v5824
      %v5839 = vmax.f32 %v5815, %v5826
      %v5840 = vmax.f32 %v5816, %v5828
      %v5841 = vmax.f32 %v5817, %v5830
      %v5842 = vmax.f32 %v5818, %v5832
      %v5843 = vmax.f32 %v5819, %v5834
      %v5844 = vmax.f32 %v5820, %v5836
      %5845 = vst [vmem:[%s318] sm:$0xff] %v5837
      %5846 = vst [vmem:[%s318 + $0x8] sm:$0xff] %v5838
      %5847 = vst [vmem:[%s318 + $0x10] sm:$0xff] %v5839
      %5848 = vst [vmem:[%s318 + $0x18] sm:$0xff] %v5840
      %5849 = vst [vmem:[%s318 + $0x20] sm:$0xff] %v5841
      %5850 = vst [vmem:[%s318 + $0x28] sm:$0xff] %v5842
      %5851 = vst [vmem:[%s318 + $0x30] sm:$0xff] %v5843
      %5852 = vst [vmem:[%s318 + $0x38] sm:$0xff] %v5844
      %p5853 = scmp.lt.s32.totalorder %s20, 1
      %s5854 = scalar_select %p5853, %s20, 1
      %s5855 = smul.addr %s5854, 36
      %s5856 = smul.addr %s5855, 8
      %s5857 = scalar_lea.vmem %s7, %s5856
      %p5858 = scmp.lt.s32.totalorder %s20, 1
      %s5859 = scalar_select %p5858, %s20, 1
      %s5860 = smul.addr %s5859, 8
      %s5861 = smul.addr %s5860, 8
      %s5862 = scalar_lea.vmem %s8, %s5861
      // Predicated region
      $region49: #{down_block_x2.1} parent=47 // pred_check
        %p5863 = pneg %p190
      $region50: #{down_block_x2.1} parent=47 // pred_check_branch
        %5865 = sbr.rel (%p5863) target = $region52
      $region51: #{down_block_x2.1} parent=47 // pred_region
        _
      $region52: #{down_block_x2.1} parent=47 // pred_fallthru
        _
      // Predicated region
      $region53: #{down_block_x2.1} parent=47 // pred_check
        %p5866 = pneg %p216
      $region54: #{down_block_x2.1} parent=47 // pred_check_branch
        %5868 = sbr.rel (%p5866) target = $region56
      $region55: #{down_block_x2.1} parent=47 // pred_region
        _
      $region56: #{down_block_x2.1} parent=47 // pred_fallthru
        _
    $region48: #{down_block_x2.1} parent=5 // pred_fallthru
      _
    %p5869 = scmp.le.s32.totalorder 2, %s15
    // Predicated region
    $region57: #{down_block_x2.1} parent=5 // pred_check
      %p5870 = pneg %p5869
    $region58: #{down_block_x2.1} parent=5 // pred_check_branch
      %5872 = sbr.rel (%p5870) target = $region60
    $region59: #{down_block_x2.1} parent=5 // pred_region
      %s5873 = ssub.s32 %s15, 2
      // Predicated region
      $region61: #{down_block_x2.1} parent=59 // pred_check
        %p5874 = pneg %p196
      $region62: #{down_block_x2.1} parent=59 // pred_check_branch
        %5876 = sbr.rel (%p5874) target = $region64
      $region63: #{down_block_x2.1} parent=59 // pred_region
        %p5877 = scmp.lt.s32.totalorder %s21, 1
        %s5878 = scalar_select %p5877, %s21, 1
        %s5879 = smul.addr %s5878, 36
        %s5880 = smul.addr %s5879, 8
        %s5881 = scalar_lea.vmem %s7, %s5880
      $region64: #{down_block_x2.1} parent=59 // pred_fallthru
        _
      // Predicated region
      $region65: #{down_block_x2.1} parent=59 // pred_check
        %p5882 = pneg %p222
      $region66: #{down_block_x2.1} parent=59 // pred_check_branch
        %5884 = sbr.rel (%p5882) target = $region68
      $region67: #{down_block_x2.1} parent=59 // pred_region
        %p5885 = scmp.lt.s32.totalorder %s21, 1
        %s5886 = scalar_select %p5885, %s21, 1
        %s5887 = smul.addr %s5886, 8
        %s5888 = smul.addr %s5887, 8
        %s5889 = scalar_lea.vmem %s8, %s5888
      $region68: #{down_block_x2.1} parent=59 // pred_fallthru
        _
    $region60: #{down_block_x2.1} parent=5 // pred_fallthru
      _
  $region6: #{down_block_x2.1} parent=0 // loop_footer
    %s19 = sadd.s32 1, %s15
  $region7: #{down_block_x2.1} parent=0 // loop_footer_branch
    %14 = sbr.rel target = $region3
  $region8: #{down_block_x2.1} parent=0 // loop_exit
    _

</llo_original>
